<compile_context>
chip_gen: v6e
topology: v6e:2x2x1
jax: 0.10.0
libtpu: 0.0.40
codegen_flags: <defaults>
</compile_context>

<pallas_src>
import functools

import jax
import jax.numpy as jnp
from jax.experimental import pallas as pl
from jax.experimental.pallas import tpu as pltpu

CAPACITY = 64          # c
LATENT_DIMS = 2
H1OUT = 14             # conv1 output spatial size (28 -> 14)
H2OUT = 7              # conv2 output spatial size (14 -> 7)
NPOS = H2OUT * H2OUT   # 49 conv2 output positions
NPOS_PAD = 56          # padded to a multiple of 8 sublanes (7 zero dummy rows)
NTAPS = 16             # 4x4 conv2 taps
KAUG = 24              # conv1 patch (16) + bias/"valid" column (1) + zero pad to 24


# ---------------------------------------------------------------------------
# Fused encoder kernel: conv1 -> conv2 -> fc_mu/fc_logvar, all in VMEM.
# ---------------------------------------------------------------------------
def _encoder_kernel(p1g_ref, w1a_ref, w2_ref, b2_ref, wfc_ref, bfc_ref,
                    mu_ref, logvar_ref, *, batch):
    blk = batch * NPOS_PAD  # rows per conv2 tap block == rows of h2

    # conv1 (+bias via the augmented "valid" column) + ReLU, all 16 conv2 taps
    # at once.  Rows that fall in conv2's zero padding (and the alignment
    # dummies) are all-zero inputs -> stay exactly 0.
    h1 = jnp.dot(p1g_ref[...], w1a_ref[...],
                 preferred_element_type=jnp.float32)              # (16*blk, 64)
    h1 = jnp.maximum(h1, 0.0).astype(jnp.bfloat16)

    # conv2 as a sum of 16 per-tap MXU matmuls on the VMEM-resident h1.
    acc = jnp.zeros((blk, 2 * CAPACITY), jnp.float32)
    for t in range(NTAPS):
        acc = acc + jnp.dot(h1[t * blk:(t + 1) * blk, :], w2_ref[t],
                            preferred_element_type=jnp.float32)
    h2 = jnp.maximum(acc + b2_ref[...], 0.0)                      # (blk, 128)

    # Fused fc_mu / fc_logvar head (4 tiny outputs): VPU multiply + full
    # reduce; the 7 dummy spatial rows per batch are killed by zero fc rows.
    for n in range(2 * LATENT_DIMS):
        wn = wfc_ref[n]                                           # (56, 128) f32
        bn = bfc_ref[n]
        for b in range(batch):
            val = jnp.sum(h2[b * NPOS_PAD:(b + 1) * NPOS_PAD, :] * wn) + bn
            if n < LATENT_DIMS:
                mu_ref[b, n] = val
            else:
                logvar_ref[b, n - LATENT_DIMS] = val


def _encoder_call(params, p1g, batch):
    n_rows = NTAPS * batch * NPOS_PAD
    kernel = functools.partial(_encoder_kernel, batch=batch)
    return pl.pallas_call(
        kernel,
        out_shape=(jax.ShapeDtypeStruct((batch, LATENT_DIMS), jnp.float32),
                   jax.ShapeDtypeStruct((batch, LATENT_DIMS), jnp.float32)),
        in_specs=[
            pl.BlockSpec((n_rows, KAUG), lambda: (0, 0)),                 # conv1 patches (bf16)
            pl.BlockSpec((KAUG, CAPACITY), lambda: (0, 0)),               # w1 (+bias row)
            pl.BlockSpec((NTAPS, CAPACITY, 2 * CAPACITY), lambda: (0, 0, 0)),   # w2 per tap
            pl.BlockSpec((1, 2 * CAPACITY), lambda: (0, 0)),              # b2
            pl.BlockSpec((2 * LATENT_DIMS, NPOS_PAD, 2 * CAPACITY), lambda: (0, 0, 0)),  # wfc
            pl.BlockSpec(memory_space=pltpu.MemorySpace.SMEM),            # bfc scalars
        ],
        out_specs=(
            pl.BlockSpec(memory_space=pltpu.MemorySpace.SMEM),            # mu (B, 2)
            pl.BlockSpec(memory_space=pltpu.MemorySpace.SMEM),            # logvar (B, 2)
        ),
    )(p1g, params["w1_aug"], params["w2"], params["b2"],
      params["wfc"], params["bfc"])


# ---------------------------------------------------------------------------
# XLA glue: tap-major conv1 patch gather on the raw input (pure data movement).
# ---------------------------------------------------------------------------
def _build_conv_patches(x):
    """x: (B, 1, 28, 28) NCHW -> (16 * B * 56, 24) bf16.

    Row (t, b, pos) holds the 4x4 conv1 input patch (columns flattened
    (kh, kw), c_in == 1) that feeds conv2 tap t = (kh2, kw2) at conv2 output
    position pos = oh2*7 + ow2, followed by a 1.0 "valid" column and zero pad.
    Rows whose source lies in conv2's zero padding (and the 7 alignment dummy
    rows per (t, b)) are all-zero.
    """
    B = x.shape[0]
    xs = x.reshape(B, 28, 28)
    xp = jnp.pad(xs, ((0, 0), (1, 1), (1, 1)))                       # conv1 pad=1
    cols = [xp[:, kh:kh + 28:2, kw:kw + 28:2]
            for kh in range(4) for kw in range(4)]                   # each (B,14,14)
    pat = jnp.stack(cols, axis=-1)                                   # (B,14,14,16)
    ones = jnp.ones((B, H1OUT, H1OUT, 1), pat.dtype)
    aug = jnp.concatenate([pat, ones], axis=-1)                      # (B,14,14,17)
    aug = jnp.pad(aug, ((0, 0), (0, 0), (0, 0), (0, KAUG - 17)))     # -> 24 cols
    augp = jnp.pad(aug, ((0, 0), (1, 1), (1, 1), (0, 0)))            # conv2 pad=1
    taps = []
    for kh in range(4):
        for kw in range(4):
            blk = augp[:, kh:kh + 13:2, kw:kw + 13:2, :]             # (B,7,7,24)
            blk = blk.reshape(B, NPOS, KAUG)
            blk = jnp.pad(blk, ((0, 0), (0, NPOS_PAD - NPOS), (0, 0)))
            taps.append(blk.reshape(B * NPOS_PAD, KAUG))
    return jnp.concatenate(taps, axis=0).astype(jnp.bfloat16)


# ---------------------------------------------------------------------------
# Parameter init (PyTorch-style uniform +-1/sqrt(fan_in)), stored directly in
# the kernel-friendly layouts.  Mapping from PyTorch tensors:
#   w1_aug[kh*4+kw, co] == conv1.weight[co, 0, kh, kw];  w1_aug[16, co] == conv1.bias[co]
#   w2[kh*4+kw, ci, co] == conv2.weight[co, ci, kh, kw]; b2[0, co] == conv2.bias[co]
#   wfc[n, oh*7+ow, ch] == fc.weight[n, ch*49 + oh*7 + ow]   (n: 0,1 mu; 2,3 logvar)
# ---------------------------------------------------------------------------
def init_params(key):
    c = CAPACITY

    def uniform(k, shape, fan_in):
        bound = 1.0 / jnp.sqrt(jnp.float32(fan_in))
        return jax.random.uniform(k, shape, jnp.float32, -bound, bound)

    ks = jax.random.split(key, 8)
    w1 = uniform(ks[0], (16, c), 16)
    b1 = uniform(ks[1], (1, c), 16)
    w1_aug = jnp.concatenate(
        [w1, b1, jnp.zeros((KAUG - 17, c), jnp.float32)], axis=0).astype(jnp.bfloat16)

    w2 = uniform(ks[2], (NTAPS, c, 2 * c), c * 16).astype(jnp.bfloat16)
    b2 = uniform(ks[3], (1, 2 * c), c * 16)

    fan_fc = 2 * c * NPOS
    wmu = uniform(ks[4], (LATENT_DIMS, NPOS, 2 * c), fan_fc)
    wlv = uniform(ks[5], (LATENT_DIMS, NPOS, 2 * c), fan_fc)
    wfc = jnp.concatenate([wmu, wlv], axis=0)
    wfc = jnp.concatenate(
        [wfc, jnp.zeros((2 * LATENT_DIMS, NPOS_PAD - NPOS, 2 * c), jnp.float32)], axis=1)
    bfc = jnp.concatenate([uniform(ks[6], (LATENT_DIMS,), fan_fc),
                           uniform(ks[7], (LATENT_DIMS,), fan_fc)], axis=0)

    return {"w1_aug": w1_aug, "w2": w2, "b2": b2, "wfc": wfc, "bfc": bfc}


@jax.jit
def encoder_forward(params, x):
    return _encoder_call(params, _build_conv_patches(x), x.shape[0])


# ---------------------------------------------------------------------------
# Pure-JAX f32 reference with the same parameters (PyTorch Encoder semantics).
# ---------------------------------------------------------------------------
def _reference_forward(params, x):
    B = x.shape[0]
    c = CAPACITY

    def im2col_nchw(a, k, s, p):
        Bz, C, H, W = a.shape
        ap = jnp.pad(a, ((0, 0), (0, 0), (p, p), (p, p)))
        Ho = (H + 2 * p - k) // s + 1
        Wo = (W + 2 * p - k) // s + 1
        cs = [ap[:, :, kh:kh + s * Ho:s, kw:kw + s * Wo:s]
              for kh in range(k) for kw in range(k)]
        pt = jnp.stack(cs, axis=2).reshape(Bz, C * k * k, Ho, Wo)    # cols (C, kh, kw)
        return pt.transpose(0, 2, 3, 1).reshape(Bz * Ho * Wo, C * k * k)

    w1 = params["w1_aug"][:16].astype(jnp.float32)                   # rows (kh, kw)
    b1 = params["w1_aug"][16].astype(jnp.float32)
    p1 = im2col_nchw(x, 4, 2, 1)                                     # (B*196, 16)
    h1 = jnp.maximum(p1 @ w1 + b1, 0.0).reshape(B, H1OUT, H1OUT, c)
    h1 = h1.transpose(0, 3, 1, 2)                                    # NCHW

    w2 = params["w2"].astype(jnp.float32)                            # (tap, ci, co)
    w2_cin_tap = jnp.transpose(w2, (1, 0, 2)).reshape(c * 16, 2 * c)
    p2 = im2col_nchw(h1, 4, 2, 1)                                    # cols (ci, kh, kw)
    h2 = jnp.maximum(p2 @ w2_cin_tap + params["b2"][0], 0.0)         # (B*49, 128)
    flat = h2.reshape(B, NPOS * 2 * c)                               # (oh, ow, ch) order

    wfc = params["wfc"][:, :NPOS, :].reshape(2 * LATENT_DIMS, NPOS * 2 * c)
    out = flat @ wfc.T + params["bfc"]
    return out[:, :LATENT_DIMS], out[:, LATENT_DIMS:]


if __name__ == "__main__":
    key = jax.random.PRNGKey(0)
    k_param, k_x = jax.random.split(key)

    params = init_params(k_param)
    # The fc stage requires the 28x28 input implied by the module (6272 = 128*7*7).
    x = jax.random.normal(k_x, (2, 1, 28, 28), dtype=jnp.float32)

    mu, logvar = encoder_forward(params, x)
    jax.block_until_ready((mu, logvar))
    assert mu.shape == (2, LATENT_DIMS) and logvar.shape == (2, LATENT_DIMS)

    # Sanity check against a pure-JAX reference (bf16 MXU inputs => loose tol).
    mu_ref, lv_ref = _reference_forward(params, x)
    assert jnp.allclose(mu, mu_ref, rtol=1e-1, atol=2e-2)
    assert jnp.allclose(logvar, lv_ref, rtol=1e-1, atol=2e-2)

    print("KERNEL_OK")
</pallas_src>

<mosaic_0001>
module attributes {stable_mosaic.version = 11 : i64} {
  func.func @_encoder_kernel(%arg0: memref<1792x24xbf16, #tpu.memory_space<vmem>>, %arg1: memref<24x64xbf16, #tpu.memory_space<vmem>>, %arg2: memref<16x64x128xbf16, #tpu.memory_space<vmem>>, %arg3: memref<1x128xf32, #tpu.memory_space<vmem>>, %arg4: memref<4x56x128xf32, #tpu.memory_space<vmem>>, %arg5: memref<4xf32, #tpu.memory_space<smem>>, %arg6: memref<2x2xf32, #tpu.memory_space<smem>>, %arg7: memref<2x2xf32, #tpu.memory_space<smem>>) attributes {dimension_semantics = [], scalar_prefetch = 0 : i64, scratch_operands = 0 : i64, tpu.core_type = #tpu.core_type<tc>} {
    %c0 = arith.constant 0 : index
    %c0_0 = arith.constant 0 : index
    %0 = vector.load %arg0[%c0, %c0_0] : memref<1792x24xbf16, #tpu.memory_space<vmem>>, vector<1792x24xbf16>
    %c0_1 = arith.constant 0 : index
    %c0_2 = arith.constant 0 : index
    %1 = vector.load %arg1[%c0_1, %c0_2] : memref<24x64xbf16, #tpu.memory_space<vmem>>, vector<24x64xbf16>
    %cst = arith.constant dense<0.000000e+00> : vector<1792x64xf32>
    %2 = tpu.matmul %0, %1, %cst {dimension_numbers = #tpu.dot_dimension_numbers<[1], [0], [0], [1], [0, 0, 1, 1], [], []>} : vector<1792x24xbf16>, vector<24x64xbf16>, vector<1792x64xf32> -> vector<1792x64xf32>
    %cst_3 = arith.constant 0.000000e+00 : f32
    %3 = vector.broadcast %cst_3 : f32 to vector<1792x64xf32>
    %4 = arith.maximumf %2, %3 : vector<1792x64xf32>
    %5 = arith.truncf %4 : vector<1792x64xf32> to vector<1792x64xbf16>
    %cst_4 = arith.constant 0.000000e+00 : f32
    %6 = vector.broadcast %cst_4 : f32 to vector<112x128xf32>
    %7 = vector.extract_strided_slice %5 {offsets = [0, 0], sizes = [112, 64], strides = [1, 1]} : vector<1792x64xbf16> to vector<112x64xbf16>
    %c0_5 = arith.constant 0 : index
    %c0_6 = arith.constant 0 : index
    %c0_7 = arith.constant 0 : index
    %8 = vector.load %arg2[%c0_5, %c0_6, %c0_7] : memref<16x64x128xbf16, #tpu.memory_space<vmem>>, vector<1x64x128xbf16>
    %9 = vector.shape_cast %8 : vector<1x64x128xbf16> to vector<64x128xbf16>
    %cst_8 = arith.constant dense<0.000000e+00> : vector<112x128xf32>
    %10 = tpu.matmul %7, %9, %cst_8 {dimension_numbers = #tpu.dot_dimension_numbers<[1], [0], [0], [1], [0, 0, 1, 1], [], []>} : vector<112x64xbf16>, vector<64x128xbf16>, vector<112x128xf32> -> vector<112x128xf32>
    %11 = arith.addf %6, %10 : vector<112x128xf32>
    %12 = vector.extract_strided_slice %5 {offsets = [112, 0], sizes = [112, 64], strides = [1, 1]} : vector<1792x64xbf16> to vector<112x64xbf16>
    %c1 = arith.constant 1 : index
    %c0_9 = arith.constant 0 : index
    %c0_10 = arith.constant 0 : index
    %13 = vector.load %arg2[%c1, %c0_9, %c0_10] : memref<16x64x128xbf16, #tpu.memory_space<vmem>>, vector<1x64x128xbf16>
    %14 = vector.shape_cast %13 : vector<1x64x128xbf16> to vector<64x128xbf16>
    %cst_11 = arith.constant dense<0.000000e+00> : vector<112x128xf32>
    %15 = tpu.matmul %12, %14, %cst_11 {dimension_numbers = #tpu.dot_dimension_numbers<[1], [0], [0], [1], [0, 0, 1, 1], [], []>} : vector<112x64xbf16>, vector<64x128xbf16>, vector<112x128xf32> -> vector<112x128xf32>
    %16 = arith.addf %11, %15 : vector<112x128xf32>
    %17 = vector.extract_strided_slice %5 {offsets = [224, 0], sizes = [112, 64], strides = [1, 1]} : vector<1792x64xbf16> to vector<112x64xbf16>
    %c2 = arith.constant 2 : index
    %c0_12 = arith.constant 0 : index
    %c0_13 = arith.constant 0 : index
    %18 = vector.load %arg2[%c2, %c0_12, %c0_13] : memref<16x64x128xbf16, #tpu.memory_space<vmem>>, vector<1x64x128xbf16>
    %19 = vector.shape_cast %18 : vector<1x64x128xbf16> to vector<64x128xbf16>
    %cst_14 = arith.constant dense<0.000000e+00> : vector<112x128xf32>
    %20 = tpu.matmul %17, %19, %cst_14 {dimension_numbers = #tpu.dot_dimension_numbers<[1], [0], [0], [1], [0, 0, 1, 1], [], []>} : vector<112x64xbf16>, vector<64x128xbf16>, vector<112x128xf32> -> vector<112x128xf32>
    %21 = arith.addf %16, %20 : vector<112x128xf32>
    %22 = vector.extract_strided_slice %5 {offsets = [336, 0], sizes = [112, 64], strides = [1, 1]} : vector<1792x64xbf16> to vector<112x64xbf16>
    %c3 = arith.constant 3 : index
    %c0_15 = arith.constant 0 : index
    %c0_16 = arith.constant 0 : index
    %23 = vector.load %arg2[%c3, %c0_15, %c0_16] : memref<16x64x128xbf16, #tpu.memory_space<vmem>>, vector<1x64x128xbf16>
    %24 = vector.shape_cast %23 : vector<1x64x128xbf16> to vector<64x128xbf16>
    %cst_17 = arith.constant dense<0.000000e+00> : vector<112x128xf32>
    %25 = tpu.matmul %22, %24, %cst_17 {dimension_numbers = #tpu.dot_dimension_numbers<[1], [0], [0], [1], [0, 0, 1, 1], [], []>} : vector<112x64xbf16>, vector<64x128xbf16>, vector<112x128xf32> -> vector<112x128xf32>
    %26 = arith.addf %21, %25 : vector<112x128xf32>
    %27 = vector.extract_strided_slice %5 {offsets = [448, 0], sizes = [112, 64], strides = [1, 1]} : vector<1792x64xbf16> to vector<112x64xbf16>
    %c4 = arith.constant 4 : index
    %c0_18 = arith.constant 0 : index
    %c0_19 = arith.constant 0 : index
    %28 = vector.load %arg2[%c4, %c0_18, %c0_19] : memref<16x64x128xbf16, #tpu.memory_space<vmem>>, vector<1x64x128xbf16>
    %29 = vector.shape_cast %28 : vector<1x64x128xbf16> to vector<64x128xbf16>
    %cst_20 = arith.constant dense<0.000000e+00> : vector<112x128xf32>
    %30 = tpu.matmul %27, %29, %cst_20 {dimension_numbers = #tpu.dot_dimension_numbers<[1], [0], [0], [1], [0, 0, 1, 1], [], []>} : vector<112x64xbf16>, vector<64x128xbf16>, vector<112x128xf32> -> vector<112x128xf32>
    %31 = arith.addf %26, %30 : vector<112x128xf32>
    %32 = vector.extract_strided_slice %5 {offsets = [560, 0], sizes = [112, 64], strides = [1, 1]} : vector<1792x64xbf16> to vector<112x64xbf16>
    %c5 = arith.constant 5 : index
    %c0_21 = arith.constant 0 : index
    %c0_22 = arith.constant 0 : index
    %33 = vector.load %arg2[%c5, %c0_21, %c0_22] : memref<16x64x128xbf16, #tpu.memory_space<vmem>>, vector<1x64x128xbf16>
    %34 = vector.shape_cast %33 : vector<1x64x128xbf16> to vector<64x128xbf16>
    %cst_23 = arith.constant dense<0.000000e+00> : vector<112x128xf32>
    %35 = tpu.matmul %32, %34, %cst_23 {dimension_numbers = #tpu.dot_dimension_numbers<[1], [0], [0], [1], [0, 0, 1, 1], [], []>} : vector<112x64xbf16>, vector<64x128xbf16>, vector<112x128xf32> -> vector<112x128xf32>
    %36 = arith.addf %31, %35 : vector<112x128xf32>
    %37 = vector.extract_strided_slice %5 {offsets = [672, 0], sizes = [112, 64], strides = [1, 1]} : vector<1792x64xbf16> to vector<112x64xbf16>
    %c6 = arith.constant 6 : index
    %c0_24 = arith.constant 0 : index
    %c0_25 = arith.constant 0 : index
    %38 = vector.load %arg2[%c6, %c0_24, %c0_25] : memref<16x64x128xbf16, #tpu.memory_space<vmem>>, vector<1x64x128xbf16>
    %39 = vector.shape_cast %38 : vector<1x64x128xbf16> to vector<64x128xbf16>
    %cst_26 = arith.constant dense<0.000000e+00> : vector<112x128xf32>
    %40 = tpu.matmul %37, %39, %cst_26 {dimension_numbers = #tpu.dot_dimension_numbers<[1], [0], [0], [1], [0, 0, 1, 1], [], []>} : vector<112x64xbf16>, vector<64x128xbf16>, vector<112x128xf32> -> vector<112x128xf32>
    %41 = arith.addf %36, %40 : vector<112x128xf32>
    %42 = vector.extract_strided_slice %5 {offsets = [784, 0], sizes = [112, 64], strides = [1, 1]} : vector<1792x64xbf16> to vector<112x64xbf16>
    %c7 = arith.constant 7 : index
    %c0_27 = arith.constant 0 : index
    %c0_28 = arith.constant 0 : index
    %43 = vector.load %arg2[%c7, %c0_27, %c0_28] : memref<16x64x128xbf16, #tpu.memory_space<vmem>>, vector<1x64x128xbf16>
    %44 = vector.shape_cast %43 : vector<1x64x128xbf16> to vector<64x128xbf16>
    %cst_29 = arith.constant dense<0.000000e+00> : vector<112x128xf32>
    %45 = tpu.matmul %42, %44, %cst_29 {dimension_numbers = #tpu.dot_dimension_numbers<[1], [0], [0], [1], [0, 0, 1, 1], [], []>} : vector<112x64xbf16>, vector<64x128xbf16>, vector<112x128xf32> -> vector<112x128xf32>
    %46 = arith.addf %41, %45 : vector<112x128xf32>
    %47 = vector.extract_strided_slice %5 {offsets = [896, 0], sizes = [112, 64], strides = [1, 1]} : vector<1792x64xbf16> to vector<112x64xbf16>
    %c8 = arith.constant 8 : index
    %c0_30 = arith.constant 0 : index
    %c0_31 = arith.constant 0 : index
    %48 = vector.load %arg2[%c8, %c0_30, %c0_31] : memref<16x64x128xbf16, #tpu.memory_space<vmem>>, vector<1x64x128xbf16>
    %49 = vector.shape_cast %48 : vector<1x64x128xbf16> to vector<64x128xbf16>
    %cst_32 = arith.constant dense<0.000000e+00> : vector<112x128xf32>
    %50 = tpu.matmul %47, %49, %cst_32 {dimension_numbers = #tpu.dot_dimension_numbers<[1], [0], [0], [1], [0, 0, 1, 1], [], []>} : vector<112x64xbf16>, vector<64x128xbf16>, vector<112x128xf32> -> vector<112x128xf32>
    %51 = arith.addf %46, %50 : vector<112x128xf32>
    %52 = vector.extract_strided_slice %5 {offsets = [1008, 0], sizes = [112, 64], strides = [1, 1]} : vector<1792x64xbf16> to vector<112x64xbf16>
    %c9 = arith.constant 9 : index
    %c0_33 = arith.constant 0 : index
    %c0_34 = arith.constant 0 : index
    %53 = vector.load %arg2[%c9, %c0_33, %c0_34] : memref<16x64x128xbf16, #tpu.memory_space<vmem>>, vector<1x64x128xbf16>
    %54 = vector.shape_cast %53 : vector<1x64x128xbf16> to vector<64x128xbf16>
    %cst_35 = arith.constant dense<0.000000e+00> : vector<112x128xf32>
    %55 = tpu.matmul %52, %54, %cst_35 {dimension_numbers = #tpu.dot_dimension_numbers<[1], [0], [0], [1], [0, 0, 1, 1], [], []>} : vector<112x64xbf16>, vector<64x128xbf16>, vector<112x128xf32> -> vector<112x128xf32>
    %56 = arith.addf %51, %55 : vector<112x128xf32>
    %57 = vector.extract_strided_slice %5 {offsets = [1120, 0], sizes = [112, 64], strides = [1, 1]} : vector<1792x64xbf16> to vector<112x64xbf16>
    %c10 = arith.constant 10 : index
    %c0_36 = arith.constant 0 : index
    %c0_37 = arith.constant 0 : index
    %58 = vector.load %arg2[%c10, %c0_36, %c0_37] : memref<16x64x128xbf16, #tpu.memory_space<vmem>>, vector<1x64x128xbf16>
    %59 = vector.shape_cast %58 : vector<1x64x128xbf16> to vector<64x128xbf16>
    %cst_38 = arith.constant dense<0.000000e+00> : vector<112x128xf32>
    %60 = tpu.matmul %57, %59, %cst_38 {dimension_numbers = #tpu.dot_dimension_numbers<[1], [0], [0], [1], [0, 0, 1, 1], [], []>} : vector<112x64xbf16>, vector<64x128xbf16>, vector<112x128xf32> -> vector<112x128xf32>
    %61 = arith.addf %56, %60 : vector<112x128xf32>
    %62 = vector.extract_strided_slice %5 {offsets = [1232, 0], sizes = [112, 64], strides = [1, 1]} : vector<1792x64xbf16> to vector<112x64xbf16>
    %c11 = arith.constant 11 : index
    %c0_39 = arith.constant 0 : index
    %c0_40 = arith.constant 0 : index
    %63 = vector.load %arg2[%c11, %c0_39, %c0_40] : memref<16x64x128xbf16, #tpu.memory_space<vmem>>, vector<1x64x128xbf16>
    %64 = vector.shape_cast %63 : vector<1x64x128xbf16> to vector<64x128xbf16>
    %cst_41 = arith.constant dense<0.000000e+00> : vector<112x128xf32>
    %65 = tpu.matmul %62, %64, %cst_41 {dimension_numbers = #tpu.dot_dimension_numbers<[1], [0], [0], [1], [0, 0, 1, 1], [], []>} : vector<112x64xbf16>, vector<64x128xbf16>, vector<112x128xf32> -> vector<112x128xf32>
    %66 = arith.addf %61, %65 : vector<112x128xf32>
    %67 = vector.extract_strided_slice %5 {offsets = [1344, 0], sizes = [112, 64], strides = [1, 1]} : vector<1792x64xbf16> to vector<112x64xbf16>
    %c12 = arith.constant 12 : index
    %c0_42 = arith.constant 0 : index
    %c0_43 = arith.constant 0 : index
    %68 = vector.load %arg2[%c12, %c0_42, %c0_43] : memref<16x64x128xbf16, #tpu.memory_space<vmem>>, vector<1x64x128xbf16>
    %69 = vector.shape_cast %68 : vector<1x64x128xbf16> to vector<64x128xbf16>
    %cst_44 = arith.constant dense<0.000000e+00> : vector<112x128xf32>
    %70 = tpu.matmul %67, %69, %cst_44 {dimension_numbers = #tpu.dot_dimension_numbers<[1], [0], [0], [1], [0, 0, 1, 1], [], []>} : vector<112x64xbf16>, vector<64x128xbf16>, vector<112x128xf32> -> vector<112x128xf32>
    %71 = arith.addf %66, %70 : vector<112x128xf32>
    %72 = vector.extract_strided_slice %5 {offsets = [1456, 0], sizes = [112, 64], strides = [1, 1]} : vector<1792x64xbf16> to vector<112x64xbf16>
    %c13 = arith.constant 13 : index
    %c0_45 = arith.constant 0 : index
    %c0_46 = arith.constant 0 : index
    %73 = vector.load %arg2[%c13, %c0_45, %c0_46] : memref<16x64x128xbf16, #tpu.memory_space<vmem>>, vector<1x64x128xbf16>
    %74 = vector.shape_cast %73 : vector<1x64x128xbf16> to vector<64x128xbf16>
    %cst_47 = arith.constant dense<0.000000e+00> : vector<112x128xf32>
    %75 = tpu.matmul %72, %74, %cst_47 {dimension_numbers = #tpu.dot_dimension_numbers<[1], [0], [0], [1], [0, 0, 1, 1], [], []>} : vector<112x64xbf16>, vector<64x128xbf16>, vector<112x128xf32> -> vector<112x128xf32>
    %76 = arith.addf %71, %75 : vector<112x128xf32>
    %77 = vector.extract_strided_slice %5 {offsets = [1568, 0], sizes = [112, 64], strides = [1, 1]} : vector<1792x64xbf16> to vector<112x64xbf16>
    %c14 = arith.constant 14 : index
    %c0_48 = arith.constant 0 : index
    %c0_49 = arith.constant 0 : index
    %78 = vector.load %arg2[%c14, %c0_48, %c0_49] : memref<16x64x128xbf16, #tpu.memory_space<vmem>>, vector<1x64x128xbf16>
    %79 = vector.shape_cast %78 : vector<1x64x128xbf16> to vector<64x128xbf16>
    %cst_50 = arith.constant dense<0.000000e+00> : vector<112x128xf32>
    %80 = tpu.matmul %77, %79, %cst_50 {dimension_numbers = #tpu.dot_dimension_numbers<[1], [0], [0], [1], [0, 0, 1, 1], [], []>} : vector<112x64xbf16>, vector<64x128xbf16>, vector<112x128xf32> -> vector<112x128xf32>
    %81 = arith.addf %76, %80 : vector<112x128xf32>
    %82 = vector.extract_strided_slice %5 {offsets = [1680, 0], sizes = [112, 64], strides = [1, 1]} : vector<1792x64xbf16> to vector<112x64xbf16>
    %c15 = arith.constant 15 : index
    %c0_51 = arith.constant 0 : index
    %c0_52 = arith.constant 0 : index
    %83 = vector.load %arg2[%c15, %c0_51, %c0_52] : memref<16x64x128xbf16, #tpu.memory_space<vmem>>, vector<1x64x128xbf16>
    %84 = vector.shape_cast %83 : vector<1x64x128xbf16> to vector<64x128xbf16>
    %cst_53 = arith.constant dense<0.000000e+00> : vector<112x128xf32>
    %85 = tpu.matmul %82, %84, %cst_53 {dimension_numbers = #tpu.dot_dimension_numbers<[1], [0], [0], [1], [0, 0, 1, 1], [], []>} : vector<112x64xbf16>, vector<64x128xbf16>, vector<112x128xf32> -> vector<112x128xf32>
    %86 = arith.addf %81, %85 : vector<112x128xf32>
    %c0_54 = arith.constant 0 : index
    %c0_55 = arith.constant 0 : index
    %87 = vector.load %arg3[%c0_54, %c0_55] : memref<1x128xf32, #tpu.memory_space<vmem>>, vector<1x128xf32>
    %88 = vector.broadcast %87 : vector<1x128xf32> to vector<112x128xf32>
    %89 = arith.addf %86, %88 : vector<112x128xf32>
    %cst_56 = arith.constant 0.000000e+00 : f32
    %90 = vector.broadcast %cst_56 : f32 to vector<112x128xf32>
    %91 = arith.maximumf %89, %90 : vector<112x128xf32>
    %c0_57 = arith.constant 0 : index
    %c0_58 = arith.constant 0 : index
    %c0_59 = arith.constant 0 : index
    %92 = vector.load %arg4[%c0_57, %c0_58, %c0_59] : memref<4x56x128xf32, #tpu.memory_space<vmem>>, vector<1x56x128xf32>
    %93 = vector.shape_cast %92 : vector<1x56x128xf32> to vector<56x128xf32>
    %c0_60 = arith.constant 0 : index
    %94 = memref.load %arg5[%c0_60] : memref<4xf32, #tpu.memory_space<smem>>
    %95 = vector.extract_strided_slice %91 {offsets = [0, 0], sizes = [56, 128], strides = [1, 1]} : vector<112x128xf32> to vector<56x128xf32>
    %96 = arith.mulf %95, %93 : vector<56x128xf32>
    %97 = vector.shape_cast %96 : vector<56x128xf32> to vector<1x56x128xf32>
    %cst_61 = arith.constant dense<0.000000e+00> : vector<1xf32>
    %98 = vector.multi_reduction <add>, %97, %cst_61 [1, 2] : vector<1x56x128xf32> to vector<1xf32>
    %99 = vector.shape_cast %98 : vector<1xf32> to vector<1x1x1xf32>
    %100 = vector.extract %99[0, 0, 0] : f32 from vector<1x1x1xf32>
    %101 = arith.addf %100, %94 : f32
    %c0_62 = arith.constant 0 : index
    %c0_63 = arith.constant 0 : index
    %102 = memref.load %arg6[%c0_62, %c0_63] : memref<2x2xf32, #tpu.memory_space<smem>>
    memref.store %101, %arg6[%c0_62, %c0_63] : memref<2x2xf32, #tpu.memory_space<smem>>
    %103 = vector.extract_strided_slice %91 {offsets = [56, 0], sizes = [56, 128], strides = [1, 1]} : vector<112x128xf32> to vector<56x128xf32>
    %104 = arith.mulf %103, %93 : vector<56x128xf32>
    %105 = vector.shape_cast %104 : vector<56x128xf32> to vector<1x56x128xf32>
    %cst_64 = arith.constant dense<0.000000e+00> : vector<1xf32>
    %106 = vector.multi_reduction <add>, %105, %cst_64 [1, 2] : vector<1x56x128xf32> to vector<1xf32>
    %107 = vector.shape_cast %106 : vector<1xf32> to vector<1x1x1xf32>
    %108 = vector.extract %107[0, 0, 0] : f32 from vector<1x1x1xf32>
    %109 = arith.addf %108, %94 : f32
    %c1_65 = arith.constant 1 : index
    %c0_66 = arith.constant 0 : index
    %110 = memref.load %arg6[%c1_65, %c0_66] : memref<2x2xf32, #tpu.memory_space<smem>>
    memref.store %109, %arg6[%c1_65, %c0_66] : memref<2x2xf32, #tpu.memory_space<smem>>
    %c1_67 = arith.constant 1 : index
    %c0_68 = arith.constant 0 : index
    %c0_69 = arith.constant 0 : index
    %111 = vector.load %arg4[%c1_67, %c0_68, %c0_69] : memref<4x56x128xf32, #tpu.memory_space<vmem>>, vector<1x56x128xf32>
    %112 = vector.shape_cast %111 : vector<1x56x128xf32> to vector<56x128xf32>
    %c1_70 = arith.constant 1 : index
    %113 = memref.load %arg5[%c1_70] : memref<4xf32, #tpu.memory_space<smem>>
    %114 = vector.extract_strided_slice %91 {offsets = [0, 0], sizes = [56, 128], strides = [1, 1]} : vector<112x128xf32> to vector<56x128xf32>
    %115 = arith.mulf %114, %112 : vector<56x128xf32>
    %116 = vector.shape_cast %115 : vector<56x128xf32> to vector<1x56x128xf32>
    %cst_71 = arith.constant dense<0.000000e+00> : vector<1xf32>
    %117 = vector.multi_reduction <add>, %116, %cst_71 [1, 2] : vector<1x56x128xf32> to vector<1xf32>
    %118 = vector.shape_cast %117 : vector<1xf32> to vector<1x1x1xf32>
    %119 = vector.extract %118[0, 0, 0] : f32 from vector<1x1x1xf32>
    %120 = arith.addf %119, %113 : f32
    %c0_72 = arith.constant 0 : index
    %c1_73 = arith.constant 1 : index
    %121 = memref.load %arg6[%c0_72, %c1_73] : memref<2x2xf32, #tpu.memory_space<smem>>
    memref.store %120, %arg6[%c0_72, %c1_73] : memref<2x2xf32, #tpu.memory_space<smem>>
    %122 = vector.extract_strided_slice %91 {offsets = [56, 0], sizes = [56, 128], strides = [1, 1]} : vector<112x128xf32> to vector<56x128xf32>
    %123 = arith.mulf %122, %112 : vector<56x128xf32>
    %124 = vector.shape_cast %123 : vector<56x128xf32> to vector<1x56x128xf32>
    %cst_74 = arith.constant dense<0.000000e+00> : vector<1xf32>
    %125 = vector.multi_reduction <add>, %124, %cst_74 [1, 2] : vector<1x56x128xf32> to vector<1xf32>
    %126 = vector.shape_cast %125 : vector<1xf32> to vector<1x1x1xf32>
    %127 = vector.extract %126[0, 0, 0] : f32 from vector<1x1x1xf32>
    %128 = arith.addf %127, %113 : f32
    %c1_75 = arith.constant 1 : index
    %c1_76 = arith.constant 1 : index
    %129 = memref.load %arg6[%c1_75, %c1_76] : memref<2x2xf32, #tpu.memory_space<smem>>
    memref.store %128, %arg6[%c1_75, %c1_76] : memref<2x2xf32, #tpu.memory_space<smem>>
    %c2_77 = arith.constant 2 : index
    %c0_78 = arith.constant 0 : index
    %c0_79 = arith.constant 0 : index
    %130 = vector.load %arg4[%c2_77, %c0_78, %c0_79] : memref<4x56x128xf32, #tpu.memory_space<vmem>>, vector<1x56x128xf32>
    %131 = vector.shape_cast %130 : vector<1x56x128xf32> to vector<56x128xf32>
    %c2_80 = arith.constant 2 : index
    %132 = memref.load %arg5[%c2_80] : memref<4xf32, #tpu.memory_space<smem>>
    %133 = vector.extract_strided_slice %91 {offsets = [0, 0], sizes = [56, 128], strides = [1, 1]} : vector<112x128xf32> to vector<56x128xf32>
    %134 = arith.mulf %133, %131 : vector<56x128xf32>
    %135 = vector.shape_cast %134 : vector<56x128xf32> to vector<1x56x128xf32>
    %cst_81 = arith.constant dense<0.000000e+00> : vector<1xf32>
    %136 = vector.multi_reduction <add>, %135, %cst_81 [1, 2] : vector<1x56x128xf32> to vector<1xf32>
    %137 = vector.shape_cast %136 : vector<1xf32> to vector<1x1x1xf32>
    %138 = vector.extract %137[0, 0, 0] : f32 from vector<1x1x1xf32>
    %139 = arith.addf %138, %132 : f32
    %c0_82 = arith.constant 0 : index
    %c0_83 = arith.constant 0 : index
    %140 = memref.load %arg7[%c0_82, %c0_83] : memref<2x2xf32, #tpu.memory_space<smem>>
    memref.store %139, %arg7[%c0_82, %c0_83] : memref<2x2xf32, #tpu.memory_space<smem>>
    %141 = vector.extract_strided_slice %91 {offsets = [56, 0], sizes = [56, 128], strides = [1, 1]} : vector<112x128xf32> to vector<56x128xf32>
    %142 = arith.mulf %141, %131 : vector<56x128xf32>
    %143 = vector.shape_cast %142 : vector<56x128xf32> to vector<1x56x128xf32>
    %cst_84 = arith.constant dense<0.000000e+00> : vector<1xf32>
    %144 = vector.multi_reduction <add>, %143, %cst_84 [1, 2] : vector<1x56x128xf32> to vector<1xf32>
    %145 = vector.shape_cast %144 : vector<1xf32> to vector<1x1x1xf32>
    %146 = vector.extract %145[0, 0, 0] : f32 from vector<1x1x1xf32>
    %147 = arith.addf %146, %132 : f32
    %c1_85 = arith.constant 1 : index
    %c0_86 = arith.constant 0 : index
    %148 = memref.load %arg7[%c1_85, %c0_86] : memref<2x2xf32, #tpu.memory_space<smem>>
    memref.store %147, %arg7[%c1_85, %c0_86] : memref<2x2xf32, #tpu.memory_space<smem>>
    %c3_87 = arith.constant 3 : index
    %c0_88 = arith.constant 0 : index
    %c0_89 = arith.constant 0 : index
    %149 = vector.load %arg4[%c3_87, %c0_88, %c0_89] : memref<4x56x128xf32, #tpu.memory_space<vmem>>, vector<1x56x128xf32>
    %150 = vector.shape_cast %149 : vector<1x56x128xf32> to vector<56x128xf32>
    %c3_90 = arith.constant 3 : index
    %151 = memref.load %arg5[%c3_90] : memref<4xf32, #tpu.memory_space<smem>>
    %152 = vector.extract_strided_slice %91 {offsets = [0, 0], sizes = [56, 128], strides = [1, 1]} : vector<112x128xf32> to vector<56x128xf32>
    %153 = arith.mulf %152, %150 : vector<56x128xf32>
    %154 = vector.shape_cast %153 : vector<56x128xf32> to vector<1x56x128xf32>
    %cst_91 = arith.constant dense<0.000000e+00> : vector<1xf32>
    %155 = vector.multi_reduction <add>, %154, %cst_91 [1, 2] : vector<1x56x128xf32> to vector<1xf32>
    %156 = vector.shape_cast %155 : vector<1xf32> to vector<1x1x1xf32>
    %157 = vector.extract %156[0, 0, 0] : f32 from vector<1x1x1xf32>
    %158 = arith.addf %157, %151 : f32
    %c0_92 = arith.constant 0 : index
    %c1_93 = arith.constant 1 : index
    %159 = memref.load %arg7[%c0_92, %c1_93] : memref<2x2xf32, #tpu.memory_space<smem>>
    memref.store %158, %arg7[%c0_92, %c1_93] : memref<2x2xf32, #tpu.memory_space<smem>>
    %160 = vector.extract_strided_slice %91 {offsets = [56, 0], sizes = [56, 128], strides = [1, 1]} : vector<112x128xf32> to vector<56x128xf32>
    %161 = arith.mulf %160, %150 : vector<56x128xf32>
    %162 = vector.shape_cast %161 : vector<56x128xf32> to vector<1x56x128xf32>
    %cst_94 = arith.constant dense<0.000000e+00> : vector<1xf32>
    %163 = vector.multi_reduction <add>, %162, %cst_94 [1, 2] : vector<1x56x128xf32> to vector<1xf32>
    %164 = vector.shape_cast %163 : vector<1xf32> to vector<1x1x1xf32>
    %165 = vector.extract %164[0, 0, 0] : f32 from vector<1x1x1xf32>
    %166 = arith.addf %165, %151 : f32
    %c1_95 = arith.constant 1 : index
    %c1_96 = arith.constant 1 : index
    %167 = memref.load %arg7[%c1_95, %c1_96] : memref<2x2xf32, #tpu.memory_space<smem>>
    memref.store %166, %arg7[%c1_95, %c1_96] : memref<2x2xf32, #tpu.memory_space<smem>>
    return
  }
}

</mosaic_0001>

<llo_original>
// kernel: encoder_forward.1
$region0: #{encoder_forward.1}
  #allocation0 [shape = 'u32[]', space=smem, size = 0x4, offset = 0x4, fixed_abs, tag = 'smem constant byte address 0x4 - core index']
  #allocation1 [shape = 'u32[144,128]{1,0:T(1,128)}', space=vmem, size = 0x12000, scoped, tag = 'internal scratch']
  %s0 = inlined_call_operand.vmem [shape: bf16[1792,24], index: 0, kind: input, shape index: {}]
  %s1 = inlined_call_operand.vmem [shape: bf16[24,64], index: 1, kind: input, shape index: {}]
  %s2 = inlined_call_operand.vmem [shape: bf16[16,64,128], index: 2, kind: input, shape index: {}]
  %s3 = inlined_call_operand.vmem [shape: f32[1,128], index: 3, kind: input, shape index: {}]
  %s4 = inlined_call_operand.vmem [shape: f32[4,56,128], index: 4, kind: input, shape index: {}]
  %s5 = inlined_call_operand.vmem [shape: f32[4], index: 5, kind: input, shape index: {}]
  %s6 = inlined_call_operand.hbm [shape: f32[2,2], index: 6, kind: output, shape index: {0}]
  %s7 = inlined_call_operand.hbm [shape: f32[2,2], index: 7, kind: output, shape index: {1}]
  %8 = xla_tuple %s6, %s7
  %s9 = sld [smem:[#allocation0]]
  $region46: #{encoder_forward.1} parent=0
    _
  %s11 = ssub.s32 1, %s9
  %s12 = scalar_select 0, %s11, %s9
  $region1: #{encoder_forward.1} parent=0
    #allocation2 [shape = 'u8[512]{0}', space=smem, size = 0x200, scoped, tag = 'input window, operand 5, single buffered']
    #allocation3 [shape = 's32[1]{0}', space=sflag, size = 0x4, scoped, tag = 'scoped memory for encoder_forward.1']
    #allocation4 [shape = 's32[1]{0}', space=sflag, size = 0x4, scoped, tag = 'scoped memory for encoder_forward.1']
    #allocation5 [shape = 'u8[1024]{0}', space=smem, size = 0x400, scoped, tag = 'output window, operand 0, single buffered']
    #allocation6 [shape = 'u8[1024]{0}', space=smem, size = 0x400, scoped, tag = 'output window, operand 1, single buffered']
    #allocation7 [shape = 's32[1]{0}', space=sflag, size = 0x4, scoped, tag = 'scoped memory for encoder_forward.1']
    %13 = vsyncpa [#allocation4], 0
    %14 = vsyncpa [#allocation3], 0
    %15 = vsyncpa [#allocation7], 0
    // Predicated region
    $region2: #{encoder_forward.1} parent=1 // pred_check
      _
    $region3: #{encoder_forward.1} parent=1 // pred_check_branch
      %17 = sbr.rel (0) target = $region5
    $region4: #{encoder_forward.1} parent=1 // pred_region
      _
    $region5: #{encoder_forward.1} parent=1 // pred_fallthru
      _
    // Predicated region
    $region6: #{encoder_forward.1} parent=1 // pred_check
      _
    $region7: #{encoder_forward.1} parent=1 // pred_check_branch
      %19 = sbr.rel (0) target = $region9
    $region8: #{encoder_forward.1} parent=1 // pred_region
      _
    $region9: #{encoder_forward.1} parent=1 // pred_fallthru
      _
    // Predicated region
    $region10: #{encoder_forward.1} parent=1 // pred_check
      _
    $region11: #{encoder_forward.1} parent=1 // pred_check_branch
      %21 = sbr.rel (0) target = $region13
    $region12: #{encoder_forward.1} parent=1 // pred_region
      _
    $region13: #{encoder_forward.1} parent=1 // pred_fallthru
      _
    // Predicated region
    $region14: #{encoder_forward.1} parent=1 // pred_check
      _
    $region15: #{encoder_forward.1} parent=1 // pred_check_branch
      %23 = sbr.rel (0) target = $region17
    $region16: #{encoder_forward.1} parent=1 // pred_region
      _
    $region17: #{encoder_forward.1} parent=1 // pred_fallthru
      _
    // Predicated region
    $region18: #{encoder_forward.1} parent=1 // pred_check
      _
    $region19: #{encoder_forward.1} parent=1 // pred_check_branch
      %25 = sbr.rel (0) target = $region21
    $region20: #{encoder_forward.1} parent=1 // pred_region
      _
    $region21: #{encoder_forward.1} parent=1 // pred_fallthru
      _
    // Predicated region
    $region22: #{encoder_forward.1} parent=1 // pred_check
      _
    $region23: #{encoder_forward.1} parent=1 // pred_check_branch
      %27 = sbr.rel (0) target = $region25
    $region24: #{encoder_forward.1} parent=1 // pred_region
      %s29 = ssub.s32 16, 16
      %30 = vsyncadd [#allocation4], %s29
      %s32 = sshll.u32 %s5, 4
      %s33 = int_to_ptr.vmem [resolvable:$true] %s32
      %35 = dma.vmem_to_smem %s33, 16, [#allocation2], [#allocation4]
    $region25: #{encoder_forward.1} parent=1 // pred_fallthru
      _
    // Predicated region
    $region26: #{encoder_forward.1} parent=1 // pred_check
      _
    $region27: #{encoder_forward.1} parent=1 // pred_check_branch
      %37 = sbr.rel (0) target = $region29
    $region28: #{encoder_forward.1} parent=1 // pred_region
      %38 = dma.done [#allocation4], 16
    $region29: #{encoder_forward.1} parent=1 // pred_fallthru
      _
    %39 = sfence
    %v41 = vld [vmem:[%s0] sm:$0xf]
    %v42 = vld [vmem:[%s0 + $0x4] sm:$0xf]
    %v43 = vld [vmem:[%s0 + $0x8] sm:$0xf]
    %v44 = vld [vmem:[%s0 + $0xc] sm:$0xf]
    %v45 = vld [vmem:[%s0 + $0x10] sm:$0xf]
    %v46 = vld [vmem:[%s0 + $0x14] sm:$0xf]
    %v47 = vld [vmem:[%s0 + $0x18] sm:$0xf]
    %v48 = vld [vmem:[%s0 + $0x1c] sm:$0xf]
    %v49 = vld [vmem:[%s0 + $0x20] sm:$0xf]
    %v50 = vld [vmem:[%s0 + $0x24] sm:$0xf]
    %v51 = vld [vmem:[%s0 + $0x28] sm:$0xf]
    %v52 = vld [vmem:[%s0 + $0x2c] sm:$0xf]
    %v53 = vld [vmem:[%s0 + $0x30] sm:$0xf]
    %v54 = vld [vmem:[%s0 + $0x34] sm:$0xf]
    %v55 = vld [vmem:[%s0 + $0x38] sm:$0xf]
    %v56 = vld [vmem:[%s0 + $0x3c] sm:$0xf]
    %v57 = vld [vmem:[%s0 + $0x40] sm:$0xf]
    %v58 = vld [vmem:[%s0 + $0x44] sm:$0xf]
    %v59 = vld [vmem:[%s0 + $0x48] sm:$0xf]
    %v60 = vld [vmem:[%s0 + $0x4c] sm:$0xf]
    %v61 = vld [vmem:[%s0 + $0x50] sm:$0xf]
    %v62 = vld [vmem:[%s0 + $0x54] sm:$0xf]
    %v63 = vld [vmem:[%s0 + $0x58] sm:$0xf]
    %v64 = vld [vmem:[%s0 + $0x5c] sm:$0xf]
    %v65 = vld [vmem:[%s0 + $0x60] sm:$0xf]
    %v66 = vld [vmem:[%s0 + $0x64] sm:$0xf]
    %v67 = vld [vmem:[%s0 + $0x68] sm:$0xf]
    %v68 = vld [vmem:[%s0 + $0x6c] sm:$0xf]
    %v69 = vld [vmem:[%s0 + $0x70] sm:$0xf]
    %v70 = vld [vmem:[%s0 + $0x74] sm:$0xf]
    %v71 = vld [vmem:[%s0 + $0x78] sm:$0xf]
    %v72 = vld [vmem:[%s0 + $0x7c] sm:$0xf]
    %v73 = vld [vmem:[%s0 + $0x80] sm:$0xf]
    %v74 = vld [vmem:[%s0 + $0x84] sm:$0xf]
    %v75 = vld [vmem:[%s0 + $0x88] sm:$0xf]
    %v76 = vld [vmem:[%s0 + $0x8c] sm:$0xf]
    %v77 = vld [vmem:[%s0 + $0x90] sm:$0xf]
    %v78 = vld [vmem:[%s0 + $0x94] sm:$0xf]
    %v79 = vld [vmem:[%s0 + $0x98] sm:$0xf]
    %v80 = vld [vmem:[%s0 + $0x9c] sm:$0xf]
    %v81 = vld [vmem:[%s0 + $0xa0] sm:$0xf]
    %v82 = vld [vmem:[%s0 + $0xa4] sm:$0xf]
    %v83 = vld [vmem:[%s0 + $0xa8] sm:$0xf]
    %v84 = vld [vmem:[%s0 + $0xac] sm:$0xf]
    %v85 = vld [vmem:[%s0 + $0xb0] sm:$0xf]
    %v86 = vld [vmem:[%s0 + $0xb4] sm:$0xf]
    %v87 = vld [vmem:[%s0 + $0xb8] sm:$0xf]
    %v88 = vld [vmem:[%s0 + $0xbc] sm:$0xf]
    %v89 = vld [vmem:[%s0 + $0xc0] sm:$0xf]
    %v90 = vld [vmem:[%s0 + $0xc4] sm:$0xf]
    %v91 = vld [vmem:[%s0 + $0xc8] sm:$0xf]
    %v92 = vld [vmem:[%s0 + $0xcc] sm:$0xf]
    %v93 = vld [vmem:[%s0 + $0xd0] sm:$0xf]
    %v94 = vld [vmem:[%s0 + $0xd4] sm:$0xf]
    %v95 = vld [vmem:[%s0 + $0xd8] sm:$0xf]
    %v96 = vld [vmem:[%s0 + $0xdc] sm:$0xf]
    %v97 = vld [vmem:[%s0 + $0xe0] sm:$0xf]
    %v98 = vld [vmem:[%s0 + $0xe4] sm:$0xf]
    %v99 = vld [vmem:[%s0 + $0xe8] sm:$0xf]
    %v100 = vld [vmem:[%s0 + $0xec] sm:$0xf]
    %v101 = vld [vmem:[%s0 + $0xf0] sm:$0xf]
    %v102 = vld [vmem:[%s0 + $0xf4] sm:$0xf]
    %v103 = vld [vmem:[%s0 + $0xf8] sm:$0xf]
    %v104 = vld [vmem:[%s0 + $0xfc] sm:$0xf]
    %v105 = vld [vmem:[%s0 + $0x100] sm:$0xf]
    %v106 = vld [vmem:[%s0 + $0x104] sm:$0xf]
    %v107 = vld [vmem:[%s0 + $0x108] sm:$0xf]
    %v108 = vld [vmem:[%s0 + $0x10c] sm:$0xf]
    %v109 = vld [vmem:[%s0 + $0x110] sm:$0xf]
    %v110 = vld [vmem:[%s0 + $0x114] sm:$0xf]
    %v111 = vld [vmem:[%s0 + $0x118] sm:$0xf]
    %v112 = vld [vmem:[%s0 + $0x11c] sm:$0xf]
    %v113 = vld [vmem:[%s0 + $0x120] sm:$0xf]
    %v114 = vld [vmem:[%s0 + $0x124] sm:$0xf]
    %v115 = vld [vmem:[%s0 + $0x128] sm:$0xf]
    %v116 = vld [vmem:[%s0 + $0x12c] sm:$0xf]
    %v117 = vld [vmem:[%s0 + $0x130] sm:$0xf]
    %v118 = vld [vmem:[%s0 + $0x134] sm:$0xf]
    %v119 = vld [vmem:[%s0 + $0x138] sm:$0xf]
    %v120 = vld [vmem:[%s0 + $0x13c] sm:$0xf]
    %v121 = vld [vmem:[%s0 + $0x140] sm:$0xf]
    %v122 = vld [vmem:[%s0 + $0x144] sm:$0xf]
    %v123 = vld [vmem:[%s0 + $0x148] sm:$0xf]
    %v124 = vld [vmem:[%s0 + $0x14c] sm:$0xf]
    %v125 = vld [vmem:[%s0 + $0x150] sm:$0xf]
    %v126 = vld [vmem:[%s0 + $0x154] sm:$0xf]
    %v127 = vld [vmem:[%s0 + $0x158] sm:$0xf]
    %v128 = vld [vmem:[%s0 + $0x15c] sm:$0xf]
    %v129 = vld [vmem:[%s0 + $0x160] sm:$0xf]
    %v130 = vld [vmem:[%s0 + $0x164] sm:$0xf]
    %v131 = vld [vmem:[%s0 + $0x168] sm:$0xf]
    %v132 = vld [vmem:[%s0 + $0x16c] sm:$0xf]
    %v133 = vld [vmem:[%s0 + $0x170] sm:$0xf]
    %v134 = vld [vmem:[%s0 + $0x174] sm:$0xf]
    %v135 = vld [vmem:[%s0 + $0x178] sm:$0xf]
    %v136 = vld [vmem:[%s0 + $0x17c] sm:$0xf]
    %v137 = vld [vmem:[%s0 + $0x180] sm:$0xf]
    %v138 = vld [vmem:[%s0 + $0x184] sm:$0xf]
    %v139 = vld [vmem:[%s0 + $0x188] sm:$0xf]
    %v140 = vld [vmem:[%s0 + $0x18c] sm:$0xf]
    %v141 = vld [vmem:[%s0 + $0x190] sm:$0xf]
    %v142 = vld [vmem:[%s0 + $0x194] sm:$0xf]
    %v143 = vld [vmem:[%s0 + $0x198] sm:$0xf]
    %v144 = vld [vmem:[%s0 + $0x19c] sm:$0xf]
    %v145 = vld [vmem:[%s0 + $0x1a0] sm:$0xf]
    %v146 = vld [vmem:[%s0 + $0x1a4] sm:$0xf]
    %v147 = vld [vmem:[%s0 + $0x1a8] sm:$0xf]
    %v148 = vld [vmem:[%s0 + $0x1ac] sm:$0xf]
    %v149 = vld [vmem:[%s0 + $0x1b0] sm:$0xf]
    %v150 = vld [vmem:[%s0 + $0x1b4] sm:$0xf]
    %v151 = vld [vmem:[%s0 + $0x1b8] sm:$0xf]
    %v152 = vld [vmem:[%s0 + $0x1bc] sm:$0xf]
    %v153 = vld [vmem:[%s0 + $0x1c0] sm:$0xf]
    %v154 = vld [vmem:[%s0 + $0x1c4] sm:$0xf]
    %v155 = vld [vmem:[%s0 + $0x1c8] sm:$0xf]
    %v156 = vld [vmem:[%s0 + $0x1cc] sm:$0xf]
    %v157 = vld [vmem:[%s0 + $0x1d0] sm:$0xf]
    %v158 = vld [vmem:[%s0 + $0x1d4] sm:$0xf]
    %v159 = vld [vmem:[%s0 + $0x1d8] sm:$0xf]
    %v160 = vld [vmem:[%s0 + $0x1dc] sm:$0xf]
    %v161 = vld [vmem:[%s0 + $0x1e0] sm:$0xf]
    %v162 = vld [vmem:[%s0 + $0x1e4] sm:$0xf]
    %v163 = vld [vmem:[%s0 + $0x1e8] sm:$0xf]
    %v164 = vld [vmem:[%s0 + $0x1ec] sm:$0xf]
    %v165 = vld [vmem:[%s0 + $0x1f0] sm:$0xf]
    %v166 = vld [vmem:[%s0 + $0x1f4] sm:$0xf]
    %v167 = vld [vmem:[%s0 + $0x1f8] sm:$0xf]
    %v168 = vld [vmem:[%s0 + $0x1fc] sm:$0xf]
    %v169 = vld [vmem:[%s0 + $0x200] sm:$0xf]
    %v170 = vld [vmem:[%s0 + $0x204] sm:$0xf]
    %v171 = vld [vmem:[%s0 + $0x208] sm:$0xf]
    %v172 = vld [vmem:[%s0 + $0x20c] sm:$0xf]
    %v173 = vld [vmem:[%s0 + $0x210] sm:$0xf]
    %v174 = vld [vmem:[%s0 + $0x214] sm:$0xf]
    %v175 = vld [vmem:[%s0 + $0x218] sm:$0xf]
    %v176 = vld [vmem:[%s0 + $0x21c] sm:$0xf]
    %v177 = vld [vmem:[%s0 + $0x220] sm:$0xf]
    %v178 = vld [vmem:[%s0 + $0x224] sm:$0xf]
    %v179 = vld [vmem:[%s0 + $0x228] sm:$0xf]
    %v180 = vld [vmem:[%s0 + $0x22c] sm:$0xf]
    %v181 = vld [vmem:[%s0 + $0x230] sm:$0xf]
    %v182 = vld [vmem:[%s0 + $0x234] sm:$0xf]
    %v183 = vld [vmem:[%s0 + $0x238] sm:$0xf]
    %v184 = vld [vmem:[%s0 + $0x23c] sm:$0xf]
    %v185 = vld [vmem:[%s0 + $0x240] sm:$0xf]
    %v186 = vld [vmem:[%s0 + $0x244] sm:$0xf]
    %v187 = vld [vmem:[%s0 + $0x248] sm:$0xf]
    %v188 = vld [vmem:[%s0 + $0x24c] sm:$0xf]
    %v189 = vld [vmem:[%s0 + $0x250] sm:$0xf]
    %v190 = vld [vmem:[%s0 + $0x254] sm:$0xf]
    %v191 = vld [vmem:[%s0 + $0x258] sm:$0xf]
    %v192 = vld [vmem:[%s0 + $0x25c] sm:$0xf]
    %v193 = vld [vmem:[%s0 + $0x260] sm:$0xf]
    %v194 = vld [vmem:[%s0 + $0x264] sm:$0xf]
    %v195 = vld [vmem:[%s0 + $0x268] sm:$0xf]
    %v196 = vld [vmem:[%s0 + $0x26c] sm:$0xf]
    %v197 = vld [vmem:[%s0 + $0x270] sm:$0xf]
    %v198 = vld [vmem:[%s0 + $0x274] sm:$0xf]
    %v199 = vld [vmem:[%s0 + $0x278] sm:$0xf]
    %v200 = vld [vmem:[%s0 + $0x27c] sm:$0xf]
    %v201 = vld [vmem:[%s0 + $0x280] sm:$0xf]
    %v202 = vld [vmem:[%s0 + $0x284] sm:$0xf]
    %v203 = vld [vmem:[%s0 + $0x288] sm:$0xf]
    %v204 = vld [vmem:[%s0 + $0x28c] sm:$0xf]
    %v205 = vld [vmem:[%s0 + $0x290] sm:$0xf]
    %v206 = vld [vmem:[%s0 + $0x294] sm:$0xf]
    %v207 = vld [vmem:[%s0 + $0x298] sm:$0xf]
    %v208 = vld [vmem:[%s0 + $0x29c] sm:$0xf]
    %v209 = vld [vmem:[%s0 + $0x2a0] sm:$0xf]
    %v210 = vld [vmem:[%s0 + $0x2a4] sm:$0xf]
    %v211 = vld [vmem:[%s0 + $0x2a8] sm:$0xf]
    %v212 = vld [vmem:[%s0 + $0x2ac] sm:$0xf]
    %v213 = vld [vmem:[%s0 + $0x2b0] sm:$0xf]
    %v214 = vld [vmem:[%s0 + $0x2b4] sm:$0xf]
    %v215 = vld [vmem:[%s0 + $0x2b8] sm:$0xf]
    %v216 = vld [vmem:[%s0 + $0x2bc] sm:$0xf]
    %v217 = vld [vmem:[%s0 + $0x2c0] sm:$0xf]
    %v218 = vld [vmem:[%s0 + $0x2c4] sm:$0xf]
    %v219 = vld [vmem:[%s0 + $0x2c8] sm:$0xf]
    %v220 = vld [vmem:[%s0 + $0x2cc] sm:$0xf]
    %v221 = vld [vmem:[%s0 + $0x2d0] sm:$0xf]
    %v222 = vld [vmem:[%s0 + $0x2d4] sm:$0xf]
    %v223 = vld [vmem:[%s0 + $0x2d8] sm:$0xf]
    %v224 = vld [vmem:[%s0 + $0x2dc] sm:$0xf]
    %v225 = vld [vmem:[%s0 + $0x2e0] sm:$0xf]
    %v226 = vld [vmem:[%s0 + $0x2e4] sm:$0xf]
    %v227 = vld [vmem:[%s0 + $0x2e8] sm:$0xf]
    %v228 = vld [vmem:[%s0 + $0x2ec] sm:$0xf]
    %v229 = vld [vmem:[%s0 + $0x2f0] sm:$0xf]
    %v230 = vld [vmem:[%s0 + $0x2f4] sm:$0xf]
    %v231 = vld [vmem:[%s0 + $0x2f8] sm:$0xf]
    %v232 = vld [vmem:[%s0 + $0x2fc] sm:$0xf]
    %v233 = vld [vmem:[%s0 + $0x300] sm:$0xf]
    %v234 = vld [vmem:[%s0 + $0x304] sm:$0xf]
    %v235 = vld [vmem:[%s0 + $0x308] sm:$0xf]
    %v236 = vld [vmem:[%s0 + $0x30c] sm:$0xf]
    %v237 = vld [vmem:[%s0 + $0x310] sm:$0xf]
    %v238 = vld [vmem:[%s0 + $0x314] sm:$0xf]
    %v239 = vld [vmem:[%s0 + $0x318] sm:$0xf]
    %v240 = vld [vmem:[%s0 + $0x31c] sm:$0xf]
    %v241 = vld [vmem:[%s0 + $0x320] sm:$0xf]
    %v242 = vld [vmem:[%s0 + $0x324] sm:$0xf]
    %v243 = vld [vmem:[%s0 + $0x328] sm:$0xf]
    %v244 = vld [vmem:[%s0 + $0x32c] sm:$0xf]
    %v245 = vld [vmem:[%s0 + $0x330] sm:$0xf]
    %v246 = vld [vmem:[%s0 + $0x334] sm:$0xf]
    %v247 = vld [vmem:[%s0 + $0x338] sm:$0xf]
    %v248 = vld [vmem:[%s0 + $0x33c] sm:$0xf]
    %v249 = vld [vmem:[%s0 + $0x340] sm:$0xf]
    %v250 = vld [vmem:[%s0 + $0x344] sm:$0xf]
    %v251 = vld [vmem:[%s0 + $0x348] sm:$0xf]
    %v252 = vld [vmem:[%s0 + $0x34c] sm:$0xf]
    %v253 = vld [vmem:[%s0 + $0x350] sm:$0xf]
    %v254 = vld [vmem:[%s0 + $0x354] sm:$0xf]
    %v255 = vld [vmem:[%s0 + $0x358] sm:$0xf]
    %v256 = vld [vmem:[%s0 + $0x35c] sm:$0xf]
    %v257 = vld [vmem:[%s0 + $0x360] sm:$0xf]
    %v258 = vld [vmem:[%s0 + $0x364] sm:$0xf]
    %v259 = vld [vmem:[%s0 + $0x368] sm:$0xf]
    %v260 = vld [vmem:[%s0 + $0x36c] sm:$0xf]
    %v261 = vld [vmem:[%s0 + $0x370] sm:$0xf]
    %v262 = vld [vmem:[%s0 + $0x374] sm:$0xf]
    %v263 = vld [vmem:[%s0 + $0x378] sm:$0xf]
    %v264 = vld [vmem:[%s0 + $0x37c] sm:$0xf]
    %v265 = vld [vmem:[%s1] sm:$0xf]
    %v266 = vld [vmem:[%s1 + $0x4] sm:$0xf]
    %v267 = vld [vmem:[%s1 + $0x8] sm:$0xf]
    %v492 = vunpack.c.l.b16 %v41
    %v493 = vunpack.c.l.b16 %v42
    %v494 = vunpack.c.l.b16 %v43
    %v495 = vunpack.c.l.b16 %v44
    %v496 = vunpack.c.l.b16 %v45
    %v497 = vunpack.c.l.b16 %v46
    %v498 = vunpack.c.l.b16 %v47
    %v499 = vunpack.c.l.b16 %v48
    %v500 = vunpack.c.l.b16 %v49
    %v501 = vunpack.c.l.b16 %v50
    %v502 = vunpack.c.l.b16 %v51
    %v503 = vunpack.c.l.b16 %v52
    %v504 = vunpack.c.l.b16 %v53
    %v505 = vunpack.c.l.b16 %v54
    %v506 = vunpack.c.l.b16 %v55
    %v507 = vunpack.c.l.b16 %v56
    %v508 = vunpack.c.l.b16 %v57
    %v509 = vunpack.c.l.b16 %v58
    %v510 = vunpack.c.l.b16 %v59
    %v511 = vunpack.c.l.b16 %v60
    %v512 = vunpack.c.l.b16 %v61
    %v513 = vunpack.c.l.b16 %v62
    %v514 = vunpack.c.l.b16 %v63
    %v515 = vunpack.c.l.b16 %v64
    %v516 = vunpack.c.l.b16 %v65
    %v517 = vunpack.c.l.b16 %v66
    %v518 = vunpack.c.l.b16 %v67
    %v519 = vunpack.c.l.b16 %v68
    %v520 = vunpack.c.l.b16 %v69
    %v521 = vunpack.c.l.b16 %v70
    %v522 = vunpack.c.l.b16 %v71
    %v523 = vunpack.c.l.b16 %v72
    %v524 = vunpack.c.l.b16 %v73
    %v525 = vunpack.c.l.b16 %v74
    %v526 = vunpack.c.l.b16 %v75
    %v527 = vunpack.c.l.b16 %v76
    %v528 = vunpack.c.l.b16 %v77
    %v529 = vunpack.c.l.b16 %v78
    %v530 = vunpack.c.l.b16 %v79
    %v531 = vunpack.c.l.b16 %v80
    %v532 = vunpack.c.l.b16 %v81
    %v533 = vunpack.c.l.b16 %v82
    %v534 = vunpack.c.l.b16 %v83
    %v535 = vunpack.c.l.b16 %v84
    %v536 = vunpack.c.l.b16 %v85
    %v537 = vunpack.c.l.b16 %v86
    %v538 = vunpack.c.l.b16 %v87
    %v539 = vunpack.c.l.b16 %v88
    %v540 = vunpack.c.l.b16 %v89
    %v541 = vunpack.c.l.b16 %v90
    %v542 = vunpack.c.l.b16 %v91
    %v543 = vunpack.c.l.b16 %v92
    %v544 = vunpack.c.l.b16 %v93
    %v545 = vunpack.c.l.b16 %v94
    %v546 = vunpack.c.l.b16 %v95
    %v547 = vunpack.c.l.b16 %v96
    %v548 = vunpack.c.l.b16 %v97
    %v549 = vunpack.c.l.b16 %v98
    %v550 = vunpack.c.l.b16 %v99
    %v551 = vunpack.c.l.b16 %v100
    %v552 = vunpack.c.l.b16 %v101
    %v553 = vunpack.c.l.b16 %v102
    %v554 = vunpack.c.l.b16 %v103
    %v555 = vunpack.c.l.b16 %v104
    %v556 = vunpack.c.l.b16 %v105
    %v557 = vunpack.c.l.b16 %v106
    %v558 = vunpack.c.l.b16 %v107
    %v559 = vunpack.c.l.b16 %v108
    %v560 = vunpack.c.l.b16 %v109
    %v561 = vunpack.c.l.b16 %v110
    %v562 = vunpack.c.l.b16 %v111
    %v563 = vunpack.c.l.b16 %v112
    %v564 = vunpack.c.l.b16 %v113
    %v565 = vunpack.c.l.b16 %v114
    %v566 = vunpack.c.l.b16 %v115
    %v567 = vunpack.c.l.b16 %v116
    %v568 = vunpack.c.l.b16 %v117
    %v569 = vunpack.c.l.b16 %v118
    %v570 = vunpack.c.l.b16 %v119
    %v571 = vunpack.c.l.b16 %v120
    %v572 = vunpack.c.l.b16 %v121
    %v573 = vunpack.c.l.b16 %v122
    %v574 = vunpack.c.l.b16 %v123
    %v575 = vunpack.c.l.b16 %v124
    %v576 = vunpack.c.l.b16 %v125
    %v577 = vunpack.c.l.b16 %v126
    %v578 = vunpack.c.l.b16 %v127
    %v579 = vunpack.c.l.b16 %v128
    %v580 = vunpack.c.l.b16 %v129
    %v581 = vunpack.c.l.b16 %v130
    %v582 = vunpack.c.l.b16 %v131
    %v583 = vunpack.c.l.b16 %v132
    %v584 = vunpack.c.l.b16 %v133
    %v585 = vunpack.c.l.b16 %v134
    %v586 = vunpack.c.l.b16 %v135
    %v587 = vunpack.c.l.b16 %v136
    %v588 = vunpack.c.l.b16 %v137
    %v589 = vunpack.c.l.b16 %v138
    %v590 = vunpack.c.l.b16 %v139
    %v591 = vunpack.c.l.b16 %v140
    %v592 = vunpack.c.l.b16 %v141
    %v593 = vunpack.c.l.b16 %v142
    %v594 = vunpack.c.l.b16 %v143
    %v595 = vunpack.c.l.b16 %v144
    %v596 = vunpack.c.l.b16 %v145
    %v597 = vunpack.c.l.b16 %v146
    %v598 = vunpack.c.l.b16 %v147
    %v599 = vunpack.c.l.b16 %v148
    %v600 = vunpack.c.l.b16 %v149
    %v601 = vunpack.c.l.b16 %v150
    %v602 = vunpack.c.l.b16 %v151
    %v603 = vunpack.c.l.b16 %v152
    %v604 = vunpack.c.l.b16 %v153
    %v605 = vunpack.c.l.b16 %v154
    %v606 = vunpack.c.l.b16 %v155
    %v607 = vunpack.c.l.b16 %v156
    %v608 = vunpack.c.l.b16 %v157
    %v609 = vunpack.c.l.b16 %v158
    %v610 = vunpack.c.l.b16 %v159
    %v611 = vunpack.c.l.b16 %v160
    %v612 = vunpack.c.l.b16 %v161
    %v613 = vunpack.c.l.b16 %v162
    %v614 = vunpack.c.l.b16 %v163
    %v615 = vunpack.c.l.b16 %v164
    %v616 = vunpack.c.l.b16 %v165
    %v617 = vunpack.c.l.b16 %v166
    %v618 = vunpack.c.l.b16 %v167
    %v619 = vunpack.c.l.b16 %v168
    %v620 = vunpack.c.l.b16 %v169
    %v621 = vunpack.c.l.b16 %v170
    %v622 = vunpack.c.l.b16 %v171
    %v623 = vunpack.c.l.b16 %v172
    %v624 = vunpack.c.l.b16 %v173
    %v625 = vunpack.c.l.b16 %v174
    %v626 = vunpack.c.l.b16 %v175
    %v627 = vunpack.c.l.b16 %v176
    %v628 = vunpack.c.l.b16 %v177
    %v629 = vunpack.c.l.b16 %v178
    %v630 = vunpack.c.l.b16 %v179
    %v631 = vunpack.c.l.b16 %v180
    %v632 = vunpack.c.l.b16 %v181
    %v633 = vunpack.c.l.b16 %v182
    %v634 = vunpack.c.l.b16 %v183
    %v635 = vunpack.c.l.b16 %v184
    %v636 = vunpack.c.l.b16 %v185
    %v637 = vunpack.c.l.b16 %v186
    %v638 = vunpack.c.l.b16 %v187
    %v639 = vunpack.c.l.b16 %v188
    %v640 = vunpack.c.l.b16 %v189
    %v641 = vunpack.c.l.b16 %v190
    %v642 = vunpack.c.l.b16 %v191
    %v643 = vunpack.c.l.b16 %v192
    %v644 = vunpack.c.l.b16 %v193
    %v645 = vunpack.c.l.b16 %v194
    %v646 = vunpack.c.l.b16 %v195
    %v647 = vunpack.c.l.b16 %v196
    %v648 = vunpack.c.l.b16 %v197
    %v649 = vunpack.c.l.b16 %v198
    %v650 = vunpack.c.l.b16 %v199
    %v651 = vunpack.c.l.b16 %v200
    %v652 = vunpack.c.l.b16 %v201
    %v653 = vunpack.c.l.b16 %v202
    %v654 = vunpack.c.l.b16 %v203
    %v655 = vunpack.c.l.b16 %v204
    %v656 = vunpack.c.l.b16 %v205
    %v657 = vunpack.c.l.b16 %v206
    %v658 = vunpack.c.l.b16 %v207
    %v659 = vunpack.c.l.b16 %v208
    %v660 = vunpack.c.l.b16 %v209
    %v661 = vunpack.c.l.b16 %v210
    %v662 = vunpack.c.l.b16 %v211
    %v663 = vunpack.c.l.b16 %v212
    %v664 = vunpack.c.l.b16 %v213
    %v665 = vunpack.c.l.b16 %v214
    %v666 = vunpack.c.l.b16 %v215
    %v667 = vunpack.c.l.b16 %v216
    %v668 = vunpack.c.l.b16 %v217
    %v669 = vunpack.c.l.b16 %v218
    %v670 = vunpack.c.l.b16 %v219
    %v671 = vunpack.c.l.b16 %v220
    %v672 = vunpack.c.l.b16 %v221
    %v673 = vunpack.c.l.b16 %v222
    %v674 = vunpack.c.l.b16 %v223
    %v675 = vunpack.c.l.b16 %v224
    %v676 = vunpack.c.l.b16 %v225
    %v677 = vunpack.c.l.b16 %v226
    %v678 = vunpack.c.l.b16 %v227
    %v679 = vunpack.c.l.b16 %v228
    %v680 = vunpack.c.l.b16 %v229
    %v681 = vunpack.c.l.b16 %v230
    %v682 = vunpack.c.l.b16 %v231
    %v683 = vunpack.c.l.b16 %v232
    %v684 = vunpack.c.l.b16 %v233
    %v685 = vunpack.c.l.b16 %v234
    %v686 = vunpack.c.l.b16 %v235
    %v687 = vunpack.c.l.b16 %v236
    %v688 = vunpack.c.l.b16 %v237
    %v689 = vunpack.c.l.b16 %v238
    %v690 = vunpack.c.l.b16 %v239
    %v691 = vunpack.c.l.b16 %v240
    %v692 = vunpack.c.l.b16 %v241
    %v693 = vunpack.c.l.b16 %v242
    %v694 = vunpack.c.l.b16 %v243
    %v695 = vunpack.c.l.b16 %v244
    %v696 = vunpack.c.l.b16 %v245
    %v697 = vunpack.c.l.b16 %v246
    %v698 = vunpack.c.l.b16 %v247
    %v699 = vunpack.c.l.b16 %v248
    %v700 = vunpack.c.l.b16 %v249
    %v701 = vunpack.c.l.b16 %v250
    %v702 = vunpack.c.l.b16 %v251
    %v703 = vunpack.c.l.b16 %v252
    %v704 = vunpack.c.l.b16 %v253
    %v705 = vunpack.c.l.b16 %v254
    %v706 = vunpack.c.l.b16 %v255
    %v707 = vunpack.c.l.b16 %v256
    %v708 = vunpack.c.l.b16 %v257
    %v709 = vunpack.c.l.b16 %v258
    %v710 = vunpack.c.l.b16 %v259
    %v711 = vunpack.c.l.b16 %v260
    %v712 = vunpack.c.l.b16 %v261
    %v713 = vunpack.c.l.b16 %v262
    %v714 = vunpack.c.l.b16 %v263
    %v715 = vunpack.c.l.b16 %v264
    %v716 = vpack.c.b16 %v493, %v492
    %v717 = vpack.c.b16 %v495, %v494
    %v718 = vpack.c.b16 %v497, %v496
    %v719 = vpack.c.b16 %v499, %v498
    %v720 = vpack.c.b16 %v501, %v500
    %v721 = vpack.c.b16 %v503, %v502
    %v722 = vpack.c.b16 %v505, %v504
    %v723 = vpack.c.b16 %v507, %v506
    %v724 = vpack.c.b16 %v509, %v508
    %v725 = vpack.c.b16 %v511, %v510
    %v726 = vpack.c.b16 %v513, %v512
    %v727 = vpack.c.b16 %v515, %v514
    %v728 = vpack.c.b16 %v517, %v516
    %v729 = vpack.c.b16 %v519, %v518
    %v730 = vpack.c.b16 %v521, %v520
    %v731 = vpack.c.b16 %v523, %v522
    %v732 = vpack.c.b16 %v525, %v524
    %v733 = vpack.c.b16 %v527, %v526
    %v734 = vpack.c.b16 %v529, %v528
    %v735 = vpack.c.b16 %v531, %v530
    %v736 = vpack.c.b16 %v533, %v532
    %v737 = vpack.c.b16 %v535, %v534
    %v738 = vpack.c.b16 %v537, %v536
    %v739 = vpack.c.b16 %v539, %v538
    %v740 = vpack.c.b16 %v541, %v540
    %v741 = vpack.c.b16 %v543, %v542
    %v742 = vpack.c.b16 %v545, %v544
    %v743 = vpack.c.b16 %v547, %v546
    %v744 = vpack.c.b16 %v549, %v548
    %v745 = vpack.c.b16 %v551, %v550
    %v746 = vpack.c.b16 %v553, %v552
    %v747 = vpack.c.b16 %v555, %v554
    %v748 = vpack.c.b16 %v557, %v556
    %v749 = vpack.c.b16 %v559, %v558
    %v750 = vpack.c.b16 %v561, %v560
    %v751 = vpack.c.b16 %v563, %v562
    %v752 = vpack.c.b16 %v565, %v564
    %v753 = vpack.c.b16 %v567, %v566
    %v754 = vpack.c.b16 %v569, %v568
    %v755 = vpack.c.b16 %v571, %v570
    %v756 = vpack.c.b16 %v573, %v572
    %v757 = vpack.c.b16 %v575, %v574
    %v758 = vpack.c.b16 %v577, %v576
    %v759 = vpack.c.b16 %v579, %v578
    %v760 = vpack.c.b16 %v581, %v580
    %v761 = vpack.c.b16 %v583, %v582
    %v762 = vpack.c.b16 %v585, %v584
    %v763 = vpack.c.b16 %v587, %v586
    %v764 = vpack.c.b16 %v589, %v588
    %v765 = vpack.c.b16 %v591, %v590
    %v766 = vpack.c.b16 %v593, %v592
    %v767 = vpack.c.b16 %v595, %v594
    %v768 = vpack.c.b16 %v597, %v596
    %v769 = vpack.c.b16 %v599, %v598
    %v770 = vpack.c.b16 %v601, %v600
    %v771 = vpack.c.b16 %v603, %v602
    %v772 = vpack.c.b16 %v605, %v604
    %v773 = vpack.c.b16 %v607, %v606
    %v774 = vpack.c.b16 %v609, %v608
    %v775 = vpack.c.b16 %v611, %v610
    %v776 = vpack.c.b16 %v613, %v612
    %v777 = vpack.c.b16 %v615, %v614
    %v778 = vpack.c.b16 %v617, %v616
    %v779 = vpack.c.b16 %v619, %v618
    %v780 = vpack.c.b16 %v621, %v620
    %v781 = vpack.c.b16 %v623, %v622
    %v782 = vpack.c.b16 %v625, %v624
    %v783 = vpack.c.b16 %v627, %v626
    %v784 = vpack.c.b16 %v629, %v628
    %v785 = vpack.c.b16 %v631, %v630
    %v786 = vpack.c.b16 %v633, %v632
    %v787 = vpack.c.b16 %v635, %v634
    %v788 = vpack.c.b16 %v637, %v636
    %v789 = vpack.c.b16 %v639, %v638
    %v790 = vpack.c.b16 %v641, %v640
    %v791 = vpack.c.b16 %v643, %v642
    %v792 = vpack.c.b16 %v645, %v644
    %v793 = vpack.c.b16 %v647, %v646
    %v794 = vpack.c.b16 %v649, %v648
    %v795 = vpack.c.b16 %v651, %v650
    %v796 = vpack.c.b16 %v653, %v652
    %v797 = vpack.c.b16 %v655, %v654
    %v798 = vpack.c.b16 %v657, %v656
    %v799 = vpack.c.b16 %v659, %v658
    %v800 = vpack.c.b16 %v661, %v660
    %v801 = vpack.c.b16 %v663, %v662
    %v802 = vpack.c.b16 %v665, %v664
    %v803 = vpack.c.b16 %v667, %v666
    %v804 = vpack.c.b16 %v669, %v668
    %v805 = vpack.c.b16 %v671, %v670
    %v806 = vpack.c.b16 %v673, %v672
    %v807 = vpack.c.b16 %v675, %v674
    %v808 = vpack.c.b16 %v677, %v676
    %v809 = vpack.c.b16 %v679, %v678
    %v810 = vpack.c.b16 %v681, %v680
    %v811 = vpack.c.b16 %v683, %v682
    %v812 = vpack.c.b16 %v685, %v684
    %v813 = vpack.c.b16 %v687, %v686
    %v814 = vpack.c.b16 %v689, %v688
    %v815 = vpack.c.b16 %v691, %v690
    %v816 = vpack.c.b16 %v693, %v692
    %v817 = vpack.c.b16 %v695, %v694
    %v818 = vpack.c.b16 %v697, %v696
    %v819 = vpack.c.b16 %v699, %v698
    %v820 = vpack.c.b16 %v701, %v700
    %v821 = vpack.c.b16 %v703, %v702
    %v822 = vpack.c.b16 %v705, %v704
    %v823 = vpack.c.b16 %v707, %v706
    %v824 = vpack.c.b16 %v709, %v708
    %v825 = vpack.c.b16 %v711, %v710
    %v826 = vpack.c.b16 %v713, %v712
    %v827 = vpack.c.b16 %v715, %v714
    %v831 = vunpack.c.l.b16 %v265
    %v832 = vunpack.c.l.b16 %v266
    %v833 = vunpack.c.l.b16 %v267
    %v834 = vpack.c.b16 %v832, %v831
    %v835 = vpack.c.b16 %v833, %v833
    %vm837 = vcmask 195584
    %v839 = vsel %vm837, %v716, 0
    %v842 = vsel %vm837, %v717, 0
    %v845 = vsel %vm837, %v718, 0
    %v848 = vsel %vm837, %v719, 0
    %v851 = vsel %vm837, %v720, 0
    %v854 = vsel %vm837, %v721, 0
    %v857 = vsel %vm837, %v722, 0
    %v860 = vsel %vm837, %v723, 0
    %v863 = vsel %vm837, %v724, 0
    %v866 = vsel %vm837, %v725, 0
    %v869 = vsel %vm837, %v726, 0
    %v872 = vsel %vm837, %v727, 0
    %v875 = vsel %vm837, %v728, 0
    %v878 = vsel %vm837, %v729, 0
    %v881 = vsel %vm837, %v730, 0
    %v884 = vsel %vm837, %v731, 0
    %v887 = vsel %vm837, %v732, 0
    %v890 = vsel %vm837, %v733, 0
    %v893 = vsel %vm837, %v734, 0
    %v896 = vsel %vm837, %v735, 0
    %v899 = vsel %vm837, %v736, 0
    %v902 = vsel %vm837, %v737, 0
    %v905 = vsel %vm837, %v738, 0
    %v908 = vsel %vm837, %v739, 0
    %v911 = vsel %vm837, %v740, 0
    %v914 = vsel %vm837, %v741, 0
    %v917 = vsel %vm837, %v742, 0
    %v920 = vsel %vm837, %v743, 0
    %v923 = vsel %vm837, %v744, 0
    %v926 = vsel %vm837, %v745, 0
    %v929 = vsel %vm837, %v746, 0
    %v932 = vsel %vm837, %v747, 0
    %v935 = vsel %vm837, %v748, 0
    %v938 = vsel %vm837, %v749, 0
    %v941 = vsel %vm837, %v750, 0
    %v944 = vsel %vm837, %v751, 0
    %v947 = vsel %vm837, %v752, 0
    %v950 = vsel %vm837, %v753, 0
    %v953 = vsel %vm837, %v754, 0
    %v956 = vsel %vm837, %v755, 0
    %v959 = vsel %vm837, %v756, 0
    %v962 = vsel %vm837, %v757, 0
    %v965 = vsel %vm837, %v758, 0
    %v968 = vsel %vm837, %v759, 0
    %v971 = vsel %vm837, %v760, 0
    %v974 = vsel %vm837, %v761, 0
    %v977 = vsel %vm837, %v762, 0
    %v980 = vsel %vm837, %v763, 0
    %v983 = vsel %vm837, %v764, 0
    %v986 = vsel %vm837, %v765, 0
    %v989 = vsel %vm837, %v766, 0
    %v992 = vsel %vm837, %v767, 0
    %v995 = vsel %vm837, %v768, 0
    %v998 = vsel %vm837, %v769, 0
    %v1001 = vsel %vm837, %v770, 0
    %v1004 = vsel %vm837, %v771, 0
    %v1007 = vsel %vm837, %v772, 0
    %v1010 = vsel %vm837, %v773, 0
    %v1013 = vsel %vm837, %v774, 0
    %v1016 = vsel %vm837, %v775, 0
    %v1019 = vsel %vm837, %v776, 0
    %v1022 = vsel %vm837, %v777, 0
    %v1025 = vsel %vm837, %v778, 0
    %v1028 = vsel %vm837, %v779, 0
    %v1031 = vsel %vm837, %v780, 0
    %v1034 = vsel %vm837, %v781, 0
    %v1037 = vsel %vm837, %v782, 0
    %v1040 = vsel %vm837, %v783, 0
    %v1043 = vsel %vm837, %v784, 0
    %v1046 = vsel %vm837, %v785, 0
    %v1049 = vsel %vm837, %v786, 0
    %v1052 = vsel %vm837, %v787, 0
    %v1055 = vsel %vm837, %v788, 0
    %v1058 = vsel %vm837, %v789, 0
    %v1061 = vsel %vm837, %v790, 0
    %v1064 = vsel %vm837, %v791, 0
    %v1067 = vsel %vm837, %v792, 0
    %v1070 = vsel %vm837, %v793, 0
    %v1073 = vsel %vm837, %v794, 0
    %v1076 = vsel %vm837, %v795, 0
    %v1079 = vsel %vm837, %v796, 0
    %v1082 = vsel %vm837, %v797, 0
    %v1085 = vsel %vm837, %v798, 0
    %v1088 = vsel %vm837, %v799, 0
    %v1091 = vsel %vm837, %v800, 0
    %v1094 = vsel %vm837, %v801, 0
    %v1097 = vsel %vm837, %v802, 0
    %v1100 = vsel %vm837, %v803, 0
    %v1103 = vsel %vm837, %v804, 0
    %v1106 = vsel %vm837, %v805, 0
    %v1109 = vsel %vm837, %v806, 0
    %v1112 = vsel %vm837, %v807, 0
    %v1115 = vsel %vm837, %v808, 0
    %v1118 = vsel %vm837, %v809, 0
    %v1121 = vsel %vm837, %v810, 0
    %v1124 = vsel %vm837, %v811, 0
    %v1127 = vsel %vm837, %v812, 0
    %v1130 = vsel %vm837, %v813, 0
    %v1133 = vsel %vm837, %v814, 0
    %v1136 = vsel %vm837, %v815, 0
    %v1139 = vsel %vm837, %v816, 0
    %v1142 = vsel %vm837, %v817, 0
    %v1145 = vsel %vm837, %v818, 0
    %v1148 = vsel %vm837, %v819, 0
    %v1151 = vsel %vm837, %v820, 0
    %v1154 = vsel %vm837, %v821, 0
    %v1157 = vsel %vm837, %v822, 0
    %v1160 = vsel %vm837, %v823, 0
    %v1163 = vsel %vm837, %v824, 0
    %v1166 = vsel %vm837, %v825, 0
    %v1169 = vsel %vm837, %v826, 0
    %v1172 = vsel %vm837, %v827, 0
    %vm1174 = vcmask 1043456
    %v1176 = vsel %vm1174, %v835, 0
    %1178 = vmatprep.subr.bf16.mxu0 0
    %1179 = vmatpush1.bf16.msra.mxu0 0
    %1180 = vmatprep.subr.bf16.mxu0 0
    %1181 = vmatpush1.bf16.msra.mxu0 0
    %1182 = vmatprep.subr.bf16.mxu0 0
    %1183 = vmatpush1.bf16.msra.mxu0 0
    %1184 = vmatprep.subr.bf16.mxu0 0
    %1185 = vmatpush1.bf16.msra.mxu0 0
    %1186 = vmatprep.subr.bf16.mxu0 0
    %1187 = vmatpush1.bf16.msra.mxu0 0
    %1188 = vmatprep.subr.bf16.mxu0 0
    %1189 = vmatpush1.bf16.msra.mxu0 0
    %1190 = vmatprep.subr.bf16.mxu0 0
    %1191 = vmatpush1.bf16.msra.mxu0 %v1176
    %1192 = vmatprep.subr.bf16.mxu0 0
    %1193 = vmatpush1.bf16.msra.mxu0 %v834
    %1194 = vmatprep.subr.bf16.mxu0 0
    %1195 = vmatpush2.bf16.msra.mxu0 0
    %1196 = vmatprep.subr.bf16.mxu0 0
    %1197 = vmatpush2.bf16.msra.mxu0 0
    %1198 = vmatprep.subr.bf16.mxu0 0
    %1199 = vmatpush2.bf16.msra.mxu0 0
    %1200 = vmatprep.subr.bf16.mxu0 0
    %1201 = vmatpush2.bf16.msra.mxu0 0
    %1202 = vmatprep.subr.bf16.mxu0 0
    %1203 = vmatpush2.bf16.msra.mxu0 0
    %1204 = vmatprep.subr.bf16.mxu0 0
    %1205 = vmatpush2.bf16.msra.mxu0 0
    %1206 = vmatprep.subr.bf16.mxu0 0
    %1207 = vmatpush2.bf16.msra.mxu0 0
    %1208 = vmatprep.subr.bf16.mxu0 0
    %1209 = vmatpush2.bf16.msra.mxu0 0
    %1210 = vmatprep.mubr.bf16.mxu0 0
    %1211 = vmatmul.mubr.bf16.gmra.mxu0 %v839
    %v1212 = vpop.f32.mrf.mxu0
    %v1213 = vadd.f32 0.0, %v1212
    %v1214 = vpop.f32.mrf.mxu0
    %v1215 = vpop.f32.mrf.mxu0
    %v1216 = vadd.f32 0.0, %v1215
    %v1217 = vpop.f32.mrf.mxu0
    %1218 = vmatprep.mubr.bf16.mxu0 0
    %1219 = vmatmul.mubr.bf16.gmra.mxu0 %v842
    %v1220 = vpop.f32.mrf.mxu0
    %v1221 = vadd.f32 0.0, %v1220
    %v1222 = vpop.f32.mrf.mxu0
    %v1223 = vpop.f32.mrf.mxu0
    %v1224 = vadd.f32 0.0, %v1223
    %v1225 = vpop.f32.mrf.mxu0
    %1226 = vmatprep.mubr.bf16.mxu0 0
    %1227 = vmatmul.mubr.bf16.gmra.mxu0 %v845
    %v1228 = vpop.f32.mrf.mxu0
    %v1229 = vadd.f32 0.0, %v1228
    %v1230 = vpop.f32.mrf.mxu0
    %v1231 = vpop.f32.mrf.mxu0
    %v1232 = vadd.f32 0.0, %v1231
    %v1233 = vpop.f32.mrf.mxu0
    %1234 = vmatprep.mubr.bf16.mxu0 0
    %1235 = vmatmul.mubr.bf16.gmra.mxu0 %v848
    %v1236 = vpop.f32.mrf.mxu0
    %v1237 = vadd.f32 0.0, %v1236
    %v1238 = vpop.f32.mrf.mxu0
    %v1239 = vpop.f32.mrf.mxu0
    %v1240 = vadd.f32 0.0, %v1239
    %v1241 = vpop.f32.mrf.mxu0
    %1242 = vmatprep.mubr.bf16.mxu0 0
    %1243 = vmatmul.mubr.bf16.gmra.mxu0 %v851
    %v1244 = vpop.f32.mrf.mxu0
    %v1245 = vadd.f32 0.0, %v1244
    %v1246 = vpop.f32.mrf.mxu0
    %v1247 = vpop.f32.mrf.mxu0
    %v1248 = vadd.f32 0.0, %v1247
    %v1249 = vpop.f32.mrf.mxu0
    %1250 = vmatprep.mubr.bf16.mxu0 0
    %1251 = vmatmul.mubr.bf16.gmra.mxu0 %v854
    %v1252 = vpop.f32.mrf.mxu0
    %v1253 = vadd.f32 0.0, %v1252
    %v1254 = vpop.f32.mrf.mxu0
    %v1255 = vpop.f32.mrf.mxu0
    %v1256 = vadd.f32 0.0, %v1255
    %v1257 = vpop.f32.mrf.mxu0
    %1258 = vmatprep.mubr.bf16.mxu0 0
    %1259 = vmatmul.mubr.bf16.gmra.mxu0 %v857
    %v1260 = vpop.f32.mrf.mxu0
    %v1261 = vadd.f32 0.0, %v1260
    %v1262 = vpop.f32.mrf.mxu0
    %v1263 = vpop.f32.mrf.mxu0
    %v1264 = vadd.f32 0.0, %v1263
    %v1265 = vpop.f32.mrf.mxu0
    %1266 = vmatprep.mubr.bf16.mxu0 0
    %1267 = vmatmul.mubr.bf16.gmra.mxu0 %v860
    %v1268 = vpop.f32.mrf.mxu0
    %v1269 = vadd.f32 0.0, %v1268
    %v1270 = vpop.f32.mrf.mxu0
    %v1271 = vpop.f32.mrf.mxu0
    %v1272 = vadd.f32 0.0, %v1271
    %v1273 = vpop.f32.mrf.mxu0
    %1274 = vmatprep.mubr.bf16.mxu0 0
    %1275 = vmatmul.mubr.bf16.gmra.mxu0 %v863
    %v1276 = vpop.f32.mrf.mxu0
    %v1277 = vadd.f32 0.0, %v1276
    %v1278 = vpop.f32.mrf.mxu0
    %v1279 = vpop.f32.mrf.mxu0
    %v1280 = vadd.f32 0.0, %v1279
    %v1281 = vpop.f32.mrf.mxu0
    %1282 = vmatprep.mubr.bf16.mxu0 0
    %1283 = vmatmul.mubr.bf16.gmra.mxu0 %v866
    %v1284 = vpop.f32.mrf.mxu0
    %v1285 = vadd.f32 0.0, %v1284
    %v1286 = vpop.f32.mrf.mxu0
    %v1287 = vpop.f32.mrf.mxu0
    %v1288 = vadd.f32 0.0, %v1287
    %v1289 = vpop.f32.mrf.mxu0
    %1290 = vmatprep.mubr.bf16.mxu0 0
    %1291 = vmatmul.mubr.bf16.gmra.mxu0 %v869
    %v1292 = vpop.f32.mrf.mxu0
    %v1293 = vadd.f32 0.0, %v1292
    %v1294 = vpop.f32.mrf.mxu0
    %v1295 = vpop.f32.mrf.mxu0
    %v1296 = vadd.f32 0.0, %v1295
    %v1297 = vpop.f32.mrf.mxu0
    %1298 = vmatprep.mubr.bf16.mxu0 0
    %1299 = vmatmul.mubr.bf16.gmra.mxu0 %v872
    %v1300 = vpop.f32.mrf.mxu0
    %v1301 = vadd.f32 0.0, %v1300
    %v1302 = vpop.f32.mrf.mxu0
    %v1303 = vpop.f32.mrf.mxu0
    %v1304 = vadd.f32 0.0, %v1303
    %v1305 = vpop.f32.mrf.mxu0
    %1306 = vmatprep.mubr.bf16.mxu0 0
    %1307 = vmatmul.mubr.bf16.gmra.mxu0 %v875
    %v1308 = vpop.f32.mrf.mxu0
    %v1309 = vadd.f32 0.0, %v1308
    %v1310 = vpop.f32.mrf.mxu0
    %v1311 = vpop.f32.mrf.mxu0
    %v1312 = vadd.f32 0.0, %v1311
    %v1313 = vpop.f32.mrf.mxu0
    %1314 = vmatprep.mubr.bf16.mxu0 0
    %1315 = vmatmul.mubr.bf16.gmra.mxu0 %v878
    %v1316 = vpop.f32.mrf.mxu0
    %v1317 = vadd.f32 0.0, %v1316
    %v1318 = vpop.f32.mrf.mxu0
    %v1319 = vpop.f32.mrf.mxu0
    %v1320 = vadd.f32 0.0, %v1319
    %v1321 = vpop.f32.mrf.mxu0
    %1322 = vmatprep.mubr.bf16.mxu0 0
    %1323 = vmatmul.mubr.bf16.gmra.mxu0 %v881
    %v1324 = vpop.f32.mrf.mxu0
    %v1325 = vadd.f32 0.0, %v1324
    %v1326 = vpop.f32.mrf.mxu0
    %v1327 = vpop.f32.mrf.mxu0
    %v1328 = vadd.f32 0.0, %v1327
    %v1329 = vpop.f32.mrf.mxu0
    %1330 = vmatprep.mubr.bf16.mxu0 0
    %1331 = vmatmul.mubr.bf16.gmra.mxu0 %v884
    %v1332 = vpop.f32.mrf.mxu0
    %v1333 = vadd.f32 0.0, %v1332
    %v1334 = vpop.f32.mrf.mxu0
    %v1335 = vpop.f32.mrf.mxu0
    %v1336 = vadd.f32 0.0, %v1335
    %v1337 = vpop.f32.mrf.mxu0
    %1338 = vmatprep.mubr.bf16.mxu0 0
    %1339 = vmatmul.mubr.bf16.gmra.mxu0 %v887
    %v1340 = vpop.f32.mrf.mxu0
    %v1341 = vadd.f32 0.0, %v1340
    %v1342 = vpop.f32.mrf.mxu0
    %v1343 = vpop.f32.mrf.mxu0
    %v1344 = vadd.f32 0.0, %v1343
    %v1345 = vpop.f32.mrf.mxu0
    %1346 = vmatprep.mubr.bf16.mxu0 0
    %1347 = vmatmul.mubr.bf16.gmra.mxu0 %v890
    %v1348 = vpop.f32.mrf.mxu0
    %v1349 = vadd.f32 0.0, %v1348
    %v1350 = vpop.f32.mrf.mxu0
    %v1351 = vpop.f32.mrf.mxu0
    %v1352 = vadd.f32 0.0, %v1351
    %v1353 = vpop.f32.mrf.mxu0
    %1354 = vmatprep.mubr.bf16.mxu0 0
    %1355 = vmatmul.mubr.bf16.gmra.mxu0 %v893
    %v1356 = vpop.f32.mrf.mxu0
    %v1357 = vadd.f32 0.0, %v1356
    %v1358 = vpop.f32.mrf.mxu0
    %v1359 = vpop.f32.mrf.mxu0
    %v1360 = vadd.f32 0.0, %v1359
    %v1361 = vpop.f32.mrf.mxu0
    %1362 = vmatprep.mubr.bf16.mxu0 0
    %1363 = vmatmul.mubr.bf16.gmra.mxu0 %v896
    %v1364 = vpop.f32.mrf.mxu0
    %v1365 = vadd.f32 0.0, %v1364
    %v1366 = vpop.f32.mrf.mxu0
    %v1367 = vpop.f32.mrf.mxu0
    %v1368 = vadd.f32 0.0, %v1367
    %v1369 = vpop.f32.mrf.mxu0
    %1370 = vmatprep.mubr.bf16.mxu0 0
    %1371 = vmatmul.mubr.bf16.gmra.mxu0 %v899
    %v1372 = vpop.f32.mrf.mxu0
    %v1373 = vadd.f32 0.0, %v1372
    %v1374 = vpop.f32.mrf.mxu0
    %v1375 = vpop.f32.mrf.mxu0
    %v1376 = vadd.f32 0.0, %v1375
    %v1377 = vpop.f32.mrf.mxu0
    %1378 = vmatprep.mubr.bf16.mxu0 0
    %1379 = vmatmul.mubr.bf16.gmra.mxu0 %v902
    %v1380 = vpop.f32.mrf.mxu0
    %v1381 = vadd.f32 0.0, %v1380
    %v1382 = vpop.f32.mrf.mxu0
    %v1383 = vpop.f32.mrf.mxu0
    %v1384 = vadd.f32 0.0, %v1383
    %v1385 = vpop.f32.mrf.mxu0
    %1386 = vmatprep.mubr.bf16.mxu0 0
    %1387 = vmatmul.mubr.bf16.gmra.mxu0 %v905
    %v1388 = vpop.f32.mrf.mxu0
    %v1389 = vadd.f32 0.0, %v1388
    %v1390 = vpop.f32.mrf.mxu0
    %v1391 = vpop.f32.mrf.mxu0
    %v1392 = vadd.f32 0.0, %v1391
    %v1393 = vpop.f32.mrf.mxu0
    %1394 = vmatprep.mubr.bf16.mxu0 0
    %1395 = vmatmul.mubr.bf16.gmra.mxu0 %v908
    %v1396 = vpop.f32.mrf.mxu0
    %v1397 = vadd.f32 0.0, %v1396
    %v1398 = vpop.f32.mrf.mxu0
    %v1399 = vpop.f32.mrf.mxu0
    %v1400 = vadd.f32 0.0, %v1399
    %v1401 = vpop.f32.mrf.mxu0
    %1402 = vmatprep.mubr.bf16.mxu0 0
    %1403 = vmatmul.mubr.bf16.gmra.mxu0 %v911
    %v1404 = vpop.f32.mrf.mxu0
    %v1405 = vadd.f32 0.0, %v1404
    %v1406 = vpop.f32.mrf.mxu0
    %v1407 = vpop.f32.mrf.mxu0
    %v1408 = vadd.f32 0.0, %v1407
    %v1409 = vpop.f32.mrf.mxu0
    %1410 = vmatprep.mubr.bf16.mxu0 0
    %1411 = vmatmul.mubr.bf16.gmra.mxu0 %v914
    %v1412 = vpop.f32.mrf.mxu0
    %v1413 = vadd.f32 0.0, %v1412
    %v1414 = vpop.f32.mrf.mxu0
    %v1415 = vpop.f32.mrf.mxu0
    %v1416 = vadd.f32 0.0, %v1415
    %v1417 = vpop.f32.mrf.mxu0
    %1418 = vmatprep.mubr.bf16.mxu0 0
    %1419 = vmatmul.mubr.bf16.gmra.mxu0 %v917
    %v1420 = vpop.f32.mrf.mxu0
    %v1421 = vadd.f32 0.0, %v1420
    %v1422 = vpop.f32.mrf.mxu0
    %v1423 = vpop.f32.mrf.mxu0
    %v1424 = vadd.f32 0.0, %v1423
    %v1425 = vpop.f32.mrf.mxu0
    %1426 = vmatprep.mubr.bf16.mxu0 0
    %1427 = vmatmul.mubr.bf16.gmra.mxu0 %v920
    %v1428 = vpop.f32.mrf.mxu0
    %v1429 = vadd.f32 0.0, %v1428
    %v1430 = vpop.f32.mrf.mxu0
    %v1431 = vpop.f32.mrf.mxu0
    %v1432 = vadd.f32 0.0, %v1431
    %v1433 = vpop.f32.mrf.mxu0
    %1434 = vmatprep.mubr.bf16.mxu0 0
    %1435 = vmatmul.mubr.bf16.gmra.mxu0 %v923
    %v1436 = vpop.f32.mrf.mxu0
    %v1437 = vadd.f32 0.0, %v1436
    %v1438 = vpop.f32.mrf.mxu0
    %v1439 = vpop.f32.mrf.mxu0
    %v1440 = vadd.f32 0.0, %v1439
    %v1441 = vpop.f32.mrf.mxu0
    %1442 = vmatprep.mubr.bf16.mxu0 0
    %1443 = vmatmul.mubr.bf16.gmra.mxu0 %v926
    %v1444 = vpop.f32.mrf.mxu0
    %v1445 = vadd.f32 0.0, %v1444
    %v1446 = vpop.f32.mrf.mxu0
    %v1447 = vpop.f32.mrf.mxu0
    %v1448 = vadd.f32 0.0, %v1447
    %v1449 = vpop.f32.mrf.mxu0
    %1450 = vmatprep.mubr.bf16.mxu0 0
    %1451 = vmatmul.mubr.bf16.gmra.mxu0 %v929
    %v1452 = vpop.f32.mrf.mxu0
    %v1453 = vadd.f32 0.0, %v1452
    %v1454 = vpop.f32.mrf.mxu0
    %v1455 = vpop.f32.mrf.mxu0
    %v1456 = vadd.f32 0.0, %v1455
    %v1457 = vpop.f32.mrf.mxu0
    %1458 = vmatprep.mubr.bf16.mxu0 0
    %1459 = vmatmul.mubr.bf16.gmra.mxu0 %v932
    %v1460 = vpop.f32.mrf.mxu0
    %v1461 = vadd.f32 0.0, %v1460
    %v1462 = vpop.f32.mrf.mxu0
    %v1463 = vpop.f32.mrf.mxu0
    %v1464 = vadd.f32 0.0, %v1463
    %v1465 = vpop.f32.mrf.mxu0
    %1466 = vmatprep.mubr.bf16.mxu0 0
    %1467 = vmatmul.mubr.bf16.gmra.mxu0 %v935
    %v1468 = vpop.f32.mrf.mxu0
    %v1469 = vadd.f32 0.0, %v1468
    %v1470 = vpop.f32.mrf.mxu0
    %v1471 = vpop.f32.mrf.mxu0
    %v1472 = vadd.f32 0.0, %v1471
    %v1473 = vpop.f32.mrf.mxu0
    %1474 = vmatprep.mubr.bf16.mxu0 0
    %1475 = vmatmul.mubr.bf16.gmra.mxu0 %v938
    %v1476 = vpop.f32.mrf.mxu0
    %v1477 = vadd.f32 0.0, %v1476
    %v1478 = vpop.f32.mrf.mxu0
    %v1479 = vpop.f32.mrf.mxu0
    %v1480 = vadd.f32 0.0, %v1479
    %v1481 = vpop.f32.mrf.mxu0
    %1482 = vmatprep.mubr.bf16.mxu0 0
    %1483 = vmatmul.mubr.bf16.gmra.mxu0 %v941
    %v1484 = vpop.f32.mrf.mxu0
    %v1485 = vadd.f32 0.0, %v1484
    %v1486 = vpop.f32.mrf.mxu0
    %v1487 = vpop.f32.mrf.mxu0
    %v1488 = vadd.f32 0.0, %v1487
    %v1489 = vpop.f32.mrf.mxu0
    %1490 = vmatprep.mubr.bf16.mxu0 0
    %1491 = vmatmul.mubr.bf16.gmra.mxu0 %v944
    %v1492 = vpop.f32.mrf.mxu0
    %v1493 = vadd.f32 0.0, %v1492
    %v1494 = vpop.f32.mrf.mxu0
    %v1495 = vpop.f32.mrf.mxu0
    %v1496 = vadd.f32 0.0, %v1495
    %v1497 = vpop.f32.mrf.mxu0
    %1498 = vmatprep.mubr.bf16.mxu0 0
    %1499 = vmatmul.mubr.bf16.gmra.mxu0 %v947
    %v1500 = vpop.f32.mrf.mxu0
    %v1501 = vadd.f32 0.0, %v1500
    %v1502 = vpop.f32.mrf.mxu0
    %v1503 = vpop.f32.mrf.mxu0
    %v1504 = vadd.f32 0.0, %v1503
    %v1505 = vpop.f32.mrf.mxu0
    %1506 = vmatprep.mubr.bf16.mxu0 0
    %1507 = vmatmul.mubr.bf16.gmra.mxu0 %v950
    %v1508 = vpop.f32.mrf.mxu0
    %v1509 = vadd.f32 0.0, %v1508
    %v1510 = vpop.f32.mrf.mxu0
    %v1511 = vpop.f32.mrf.mxu0
    %v1512 = vadd.f32 0.0, %v1511
    %v1513 = vpop.f32.mrf.mxu0
    %1514 = vmatprep.mubr.bf16.mxu0 0
    %1515 = vmatmul.mubr.bf16.gmra.mxu0 %v953
    %v1516 = vpop.f32.mrf.mxu0
    %v1517 = vadd.f32 0.0, %v1516
    %v1518 = vpop.f32.mrf.mxu0
    %v1519 = vpop.f32.mrf.mxu0
    %v1520 = vadd.f32 0.0, %v1519
    %v1521 = vpop.f32.mrf.mxu0
    %1522 = vmatprep.mubr.bf16.mxu0 0
    %1523 = vmatmul.mubr.bf16.gmra.mxu0 %v956
    %v1524 = vpop.f32.mrf.mxu0
    %v1525 = vadd.f32 0.0, %v1524
    %v1526 = vpop.f32.mrf.mxu0
    %v1527 = vpop.f32.mrf.mxu0
    %v1528 = vadd.f32 0.0, %v1527
    %v1529 = vpop.f32.mrf.mxu0
    %1530 = vmatprep.mubr.bf16.mxu0 0
    %1531 = vmatmul.mubr.bf16.gmra.mxu0 %v959
    %v1532 = vpop.f32.mrf.mxu0
    %v1533 = vadd.f32 0.0, %v1532
    %v1534 = vpop.f32.mrf.mxu0
    %v1535 = vpop.f32.mrf.mxu0
    %v1536 = vadd.f32 0.0, %v1535
    %v1537 = vpop.f32.mrf.mxu0
    %1538 = vmatprep.mubr.bf16.mxu0 0
    %1539 = vmatmul.mubr.bf16.gmra.mxu0 %v962
    %v1540 = vpop.f32.mrf.mxu0
    %v1541 = vadd.f32 0.0, %v1540
    %v1542 = vpop.f32.mrf.mxu0
    %v1543 = vpop.f32.mrf.mxu0
    %v1544 = vadd.f32 0.0, %v1543
    %v1545 = vpop.f32.mrf.mxu0
    %1546 = vmatprep.mubr.bf16.mxu0 0
    %1547 = vmatmul.mubr.bf16.gmra.mxu0 %v965
    %v1548 = vpop.f32.mrf.mxu0
    %v1549 = vadd.f32 0.0, %v1548
    %v1550 = vpop.f32.mrf.mxu0
    %v1551 = vpop.f32.mrf.mxu0
    %v1552 = vadd.f32 0.0, %v1551
    %v1553 = vpop.f32.mrf.mxu0
    %1554 = vmatprep.mubr.bf16.mxu0 0
    %1555 = vmatmul.mubr.bf16.gmra.mxu0 %v968
    %v1556 = vpop.f32.mrf.mxu0
    %v1557 = vadd.f32 0.0, %v1556
    %v1558 = vpop.f32.mrf.mxu0
    %v1559 = vpop.f32.mrf.mxu0
    %v1560 = vadd.f32 0.0, %v1559
    %v1561 = vpop.f32.mrf.mxu0
    %1562 = vmatprep.mubr.bf16.mxu0 0
    %1563 = vmatmul.mubr.bf16.gmra.mxu0 %v971
    %v1564 = vpop.f32.mrf.mxu0
    %v1565 = vadd.f32 0.0, %v1564
    %v1566 = vpop.f32.mrf.mxu0
    %v1567 = vpop.f32.mrf.mxu0
    %v1568 = vadd.f32 0.0, %v1567
    %v1569 = vpop.f32.mrf.mxu0
    %1570 = vmatprep.mubr.bf16.mxu0 0
    %1571 = vmatmul.mubr.bf16.gmra.mxu0 %v974
    %v1572 = vpop.f32.mrf.mxu0
    %v1573 = vadd.f32 0.0, %v1572
    %v1574 = vpop.f32.mrf.mxu0
    %v1575 = vpop.f32.mrf.mxu0
    %v1576 = vadd.f32 0.0, %v1575
    %v1577 = vpop.f32.mrf.mxu0
    %1578 = vmatprep.mubr.bf16.mxu0 0
    %1579 = vmatmul.mubr.bf16.gmra.mxu0 %v977
    %v1580 = vpop.f32.mrf.mxu0
    %v1581 = vadd.f32 0.0, %v1580
    %v1582 = vpop.f32.mrf.mxu0
    %v1583 = vpop.f32.mrf.mxu0
    %v1584 = vadd.f32 0.0, %v1583
    %v1585 = vpop.f32.mrf.mxu0
    %1586 = vmatprep.mubr.bf16.mxu0 0
    %1587 = vmatmul.mubr.bf16.gmra.mxu0 %v980
    %v1588 = vpop.f32.mrf.mxu0
    %v1589 = vadd.f32 0.0, %v1588
    %v1590 = vpop.f32.mrf.mxu0
    %v1591 = vpop.f32.mrf.mxu0
    %v1592 = vadd.f32 0.0, %v1591
    %v1593 = vpop.f32.mrf.mxu0
    %1594 = vmatprep.mubr.bf16.mxu0 0
    %1595 = vmatmul.mubr.bf16.gmra.mxu0 %v983
    %v1596 = vpop.f32.mrf.mxu0
    %v1597 = vadd.f32 0.0, %v1596
    %v1598 = vpop.f32.mrf.mxu0
    %v1599 = vpop.f32.mrf.mxu0
    %v1600 = vadd.f32 0.0, %v1599
    %v1601 = vpop.f32.mrf.mxu0
    %1602 = vmatprep.mubr.bf16.mxu0 0
    %1603 = vmatmul.mubr.bf16.gmra.mxu0 %v986
    %v1604 = vpop.f32.mrf.mxu0
    %v1605 = vadd.f32 0.0, %v1604
    %v1606 = vpop.f32.mrf.mxu0
    %v1607 = vpop.f32.mrf.mxu0
    %v1608 = vadd.f32 0.0, %v1607
    %v1609 = vpop.f32.mrf.mxu0
    %1610 = vmatprep.mubr.bf16.mxu0 0
    %1611 = vmatmul.mubr.bf16.gmra.mxu0 %v989
    %v1612 = vpop.f32.mrf.mxu0
    %v1613 = vadd.f32 0.0, %v1612
    %v1614 = vpop.f32.mrf.mxu0
    %v1615 = vpop.f32.mrf.mxu0
    %v1616 = vadd.f32 0.0, %v1615
    %v1617 = vpop.f32.mrf.mxu0
    %1618 = vmatprep.mubr.bf16.mxu0 0
    %1619 = vmatmul.mubr.bf16.gmra.mxu0 %v992
    %v1620 = vpop.f32.mrf.mxu0
    %v1621 = vadd.f32 0.0, %v1620
    %v1622 = vpop.f32.mrf.mxu0
    %v1623 = vpop.f32.mrf.mxu0
    %v1624 = vadd.f32 0.0, %v1623
    %v1625 = vpop.f32.mrf.mxu0
    %1626 = vmatprep.mubr.bf16.mxu0 0
    %1627 = vmatmul.mubr.bf16.gmra.mxu0 %v995
    %v1628 = vpop.f32.mrf.mxu0
    %v1629 = vadd.f32 0.0, %v1628
    %v1630 = vpop.f32.mrf.mxu0
    %v1631 = vpop.f32.mrf.mxu0
    %v1632 = vadd.f32 0.0, %v1631
    %v1633 = vpop.f32.mrf.mxu0
    %1634 = vmatprep.mubr.bf16.mxu0 0
    %1635 = vmatmul.mubr.bf16.gmra.mxu0 %v998
    %v1636 = vpop.f32.mrf.mxu0
    %v1637 = vadd.f32 0.0, %v1636
    %v1638 = vpop.f32.mrf.mxu0
    %v1639 = vpop.f32.mrf.mxu0
    %v1640 = vadd.f32 0.0, %v1639
    %v1641 = vpop.f32.mrf.mxu0
    %1642 = vmatprep.mubr.bf16.mxu0 0
    %1643 = vmatmul.mubr.bf16.gmra.mxu0 %v1001
    %v1644 = vpop.f32.mrf.mxu0
    %v1645 = vadd.f32 0.0, %v1644
    %v1646 = vpop.f32.mrf.mxu0
    %v1647 = vpop.f32.mrf.mxu0
    %v1648 = vadd.f32 0.0, %v1647
    %v1649 = vpop.f32.mrf.mxu0
    %1650 = vmatprep.mubr.bf16.mxu0 0
    %1651 = vmatmul.mubr.bf16.gmra.mxu0 %v1004
    %v1652 = vpop.f32.mrf.mxu0
    %v1653 = vadd.f32 0.0, %v1652
    %v1654 = vpop.f32.mrf.mxu0
    %v1655 = vpop.f32.mrf.mxu0
    %v1656 = vadd.f32 0.0, %v1655
    %v1657 = vpop.f32.mrf.mxu0
    %1658 = vmatprep.mubr.bf16.mxu0 0
    %1659 = vmatmul.mubr.bf16.gmra.mxu0 %v1007
    %v1660 = vpop.f32.mrf.mxu0
    %v1661 = vadd.f32 0.0, %v1660
    %v1662 = vpop.f32.mrf.mxu0
    %v1663 = vpop.f32.mrf.mxu0
    %v1664 = vadd.f32 0.0, %v1663
    %v1665 = vpop.f32.mrf.mxu0
    %1666 = vmatprep.mubr.bf16.mxu0 0
    %1667 = vmatmul.mubr.bf16.gmra.mxu0 %v1010
    %v1668 = vpop.f32.mrf.mxu0
    %v1669 = vadd.f32 0.0, %v1668
    %v1670 = vpop.f32.mrf.mxu0
    %v1671 = vpop.f32.mrf.mxu0
    %v1672 = vadd.f32 0.0, %v1671
    %v1673 = vpop.f32.mrf.mxu0
    %1674 = vmatprep.mubr.bf16.mxu0 0
    %1675 = vmatmul.mubr.bf16.gmra.mxu0 %v1013
    %v1676 = vpop.f32.mrf.mxu0
    %v1677 = vadd.f32 0.0, %v1676
    %v1678 = vpop.f32.mrf.mxu0
    %v1679 = vpop.f32.mrf.mxu0
    %v1680 = vadd.f32 0.0, %v1679
    %v1681 = vpop.f32.mrf.mxu0
    %1682 = vmatprep.mubr.bf16.mxu0 0
    %1683 = vmatmul.mubr.bf16.gmra.mxu0 %v1016
    %v1684 = vpop.f32.mrf.mxu0
    %v1685 = vadd.f32 0.0, %v1684
    %v1686 = vpop.f32.mrf.mxu0
    %v1687 = vpop.f32.mrf.mxu0
    %v1688 = vadd.f32 0.0, %v1687
    %v1689 = vpop.f32.mrf.mxu0
    %1690 = vmatprep.mubr.bf16.mxu0 0
    %1691 = vmatmul.mubr.bf16.gmra.mxu0 %v1019
    %v1692 = vpop.f32.mrf.mxu0
    %v1693 = vadd.f32 0.0, %v1692
    %v1694 = vpop.f32.mrf.mxu0
    %v1695 = vpop.f32.mrf.mxu0
    %v1696 = vadd.f32 0.0, %v1695
    %v1697 = vpop.f32.mrf.mxu0
    %1698 = vmatprep.mubr.bf16.mxu0 0
    %1699 = vmatmul.mubr.bf16.gmra.mxu0 %v1022
    %v1700 = vpop.f32.mrf.mxu0
    %v1701 = vadd.f32 0.0, %v1700
    %v1702 = vpop.f32.mrf.mxu0
    %v1703 = vpop.f32.mrf.mxu0
    %v1704 = vadd.f32 0.0, %v1703
    %v1705 = vpop.f32.mrf.mxu0
    %1706 = vmatprep.mubr.bf16.mxu0 0
    %1707 = vmatmul.mubr.bf16.gmra.mxu0 %v1025
    %v1708 = vpop.f32.mrf.mxu0
    %v1709 = vadd.f32 0.0, %v1708
    %v1710 = vpop.f32.mrf.mxu0
    %v1711 = vpop.f32.mrf.mxu0
    %v1712 = vadd.f32 0.0, %v1711
    %v1713 = vpop.f32.mrf.mxu0
    %1714 = vmatprep.mubr.bf16.mxu0 0
    %1715 = vmatmul.mubr.bf16.gmra.mxu0 %v1028
    %v1716 = vpop.f32.mrf.mxu0
    %v1717 = vadd.f32 0.0, %v1716
    %v1718 = vpop.f32.mrf.mxu0
    %v1719 = vpop.f32.mrf.mxu0
    %v1720 = vadd.f32 0.0, %v1719
    %v1721 = vpop.f32.mrf.mxu0
    %1722 = vmatprep.mubr.bf16.mxu0 0
    %1723 = vmatmul.mubr.bf16.gmra.mxu0 %v1031
    %v1724 = vpop.f32.mrf.mxu0
    %v1725 = vadd.f32 0.0, %v1724
    %v1726 = vpop.f32.mrf.mxu0
    %v1727 = vpop.f32.mrf.mxu0
    %v1728 = vadd.f32 0.0, %v1727
    %v1729 = vpop.f32.mrf.mxu0
    %1730 = vmatprep.mubr.bf16.mxu0 0
    %1731 = vmatmul.mubr.bf16.gmra.mxu0 %v1034
    %v1732 = vpop.f32.mrf.mxu0
    %v1733 = vadd.f32 0.0, %v1732
    %v1734 = vpop.f32.mrf.mxu0
    %v1735 = vpop.f32.mrf.mxu0
    %v1736 = vadd.f32 0.0, %v1735
    %v1737 = vpop.f32.mrf.mxu0
    %1738 = vmatprep.mubr.bf16.mxu0 0
    %1739 = vmatmul.mubr.bf16.gmra.mxu0 %v1037
    %v1740 = vpop.f32.mrf.mxu0
    %v1741 = vadd.f32 0.0, %v1740
    %v1742 = vpop.f32.mrf.mxu0
    %v1743 = vpop.f32.mrf.mxu0
    %v1744 = vadd.f32 0.0, %v1743
    %v1745 = vpop.f32.mrf.mxu0
    %1746 = vmatprep.mubr.bf16.mxu0 0
    %1747 = vmatmul.mubr.bf16.gmra.mxu0 %v1040
    %v1748 = vpop.f32.mrf.mxu0
    %v1749 = vadd.f32 0.0, %v1748
    %v1750 = vpop.f32.mrf.mxu0
    %v1751 = vpop.f32.mrf.mxu0
    %v1752 = vadd.f32 0.0, %v1751
    %v1753 = vpop.f32.mrf.mxu0
    %1754 = vmatprep.mubr.bf16.mxu0 0
    %1755 = vmatmul.mubr.bf16.gmra.mxu0 %v1043
    %v1756 = vpop.f32.mrf.mxu0
    %v1757 = vadd.f32 0.0, %v1756
    %v1758 = vpop.f32.mrf.mxu0
    %v1759 = vpop.f32.mrf.mxu0
    %v1760 = vadd.f32 0.0, %v1759
    %v1761 = vpop.f32.mrf.mxu0
    %1762 = vmatprep.mubr.bf16.mxu0 0
    %1763 = vmatmul.mubr.bf16.gmra.mxu0 %v1046
    %v1764 = vpop.f32.mrf.mxu0
    %v1765 = vadd.f32 0.0, %v1764
    %v1766 = vpop.f32.mrf.mxu0
    %v1767 = vpop.f32.mrf.mxu0
    %v1768 = vadd.f32 0.0, %v1767
    %v1769 = vpop.f32.mrf.mxu0
    %1770 = vmatprep.mubr.bf16.mxu0 0
    %1771 = vmatmul.mubr.bf16.gmra.mxu0 %v1049
    %v1772 = vpop.f32.mrf.mxu0
    %v1773 = vadd.f32 0.0, %v1772
    %v1774 = vpop.f32.mrf.mxu0
    %v1775 = vpop.f32.mrf.mxu0
    %v1776 = vadd.f32 0.0, %v1775
    %v1777 = vpop.f32.mrf.mxu0
    %1778 = vmatprep.mubr.bf16.mxu0 0
    %1779 = vmatmul.mubr.bf16.gmra.mxu0 %v1052
    %v1780 = vpop.f32.mrf.mxu0
    %v1781 = vadd.f32 0.0, %v1780
    %v1782 = vpop.f32.mrf.mxu0
    %v1783 = vpop.f32.mrf.mxu0
    %v1784 = vadd.f32 0.0, %v1783
    %v1785 = vpop.f32.mrf.mxu0
    %1786 = vmatprep.mubr.bf16.mxu0 0
    %1787 = vmatmul.mubr.bf16.gmra.mxu0 %v1055
    %v1788 = vpop.f32.mrf.mxu0
    %v1789 = vadd.f32 0.0, %v1788
    %v1790 = vpop.f32.mrf.mxu0
    %v1791 = vpop.f32.mrf.mxu0
    %v1792 = vadd.f32 0.0, %v1791
    %v1793 = vpop.f32.mrf.mxu0
    %1794 = vmatprep.mubr.bf16.mxu0 0
    %1795 = vmatmul.mubr.bf16.gmra.mxu0 %v1058
    %v1796 = vpop.f32.mrf.mxu0
    %v1797 = vadd.f32 0.0, %v1796
    %v1798 = vpop.f32.mrf.mxu0
    %v1799 = vpop.f32.mrf.mxu0
    %v1800 = vadd.f32 0.0, %v1799
    %v1801 = vpop.f32.mrf.mxu0
    %1802 = vmatprep.mubr.bf16.mxu0 0
    %1803 = vmatmul.mubr.bf16.gmra.mxu0 %v1061
    %v1804 = vpop.f32.mrf.mxu0
    %v1805 = vadd.f32 0.0, %v1804
    %v1806 = vpop.f32.mrf.mxu0
    %v1807 = vpop.f32.mrf.mxu0
    %v1808 = vadd.f32 0.0, %v1807
    %v1809 = vpop.f32.mrf.mxu0
    %1810 = vmatprep.mubr.bf16.mxu0 0
    %1811 = vmatmul.mubr.bf16.gmra.mxu0 %v1064
    %v1812 = vpop.f32.mrf.mxu0
    %v1813 = vadd.f32 0.0, %v1812
    %v1814 = vpop.f32.mrf.mxu0
    %v1815 = vpop.f32.mrf.mxu0
    %v1816 = vadd.f32 0.0, %v1815
    %v1817 = vpop.f32.mrf.mxu0
    %1818 = vmatprep.mubr.bf16.mxu0 0
    %1819 = vmatmul.mubr.bf16.gmra.mxu0 %v1067
    %v1820 = vpop.f32.mrf.mxu0
    %v1821 = vadd.f32 0.0, %v1820
    %v1822 = vpop.f32.mrf.mxu0
    %v1823 = vpop.f32.mrf.mxu0
    %v1824 = vadd.f32 0.0, %v1823
    %v1825 = vpop.f32.mrf.mxu0
    %1826 = vmatprep.mubr.bf16.mxu0 0
    %1827 = vmatmul.mubr.bf16.gmra.mxu0 %v1070
    %v1828 = vpop.f32.mrf.mxu0
    %v1829 = vadd.f32 0.0, %v1828
    %v1830 = vpop.f32.mrf.mxu0
    %v1831 = vpop.f32.mrf.mxu0
    %v1832 = vadd.f32 0.0, %v1831
    %v1833 = vpop.f32.mrf.mxu0
    %1834 = vmatprep.mubr.bf16.mxu0 0
    %1835 = vmatmul.mubr.bf16.gmra.mxu0 %v1073
    %v1836 = vpop.f32.mrf.mxu0
    %v1837 = vadd.f32 0.0, %v1836
    %v1838 = vpop.f32.mrf.mxu0
    %v1839 = vpop.f32.mrf.mxu0
    %v1840 = vadd.f32 0.0, %v1839
    %v1841 = vpop.f32.mrf.mxu0
    %1842 = vmatprep.mubr.bf16.mxu0 0
    %1843 = vmatmul.mubr.bf16.gmra.mxu0 %v1076
    %v1844 = vpop.f32.mrf.mxu0
    %v1845 = vadd.f32 0.0, %v1844
    %v1846 = vpop.f32.mrf.mxu0
    %v1847 = vpop.f32.mrf.mxu0
    %v1848 = vadd.f32 0.0, %v1847
    %v1849 = vpop.f32.mrf.mxu0
    %1850 = vmatprep.mubr.bf16.mxu0 0
    %1851 = vmatmul.mubr.bf16.gmra.mxu0 %v1079
    %v1852 = vpop.f32.mrf.mxu0
    %v1853 = vadd.f32 0.0, %v1852
    %v1854 = vpop.f32.mrf.mxu0
    %v1855 = vpop.f32.mrf.mxu0
    %v1856 = vadd.f32 0.0, %v1855
    %v1857 = vpop.f32.mrf.mxu0
    %1858 = vmatprep.mubr.bf16.mxu0 0
    %1859 = vmatmul.mubr.bf16.gmra.mxu0 %v1082
    %v1860 = vpop.f32.mrf.mxu0
    %v1861 = vadd.f32 0.0, %v1860
    %v1862 = vpop.f32.mrf.mxu0
    %v1863 = vpop.f32.mrf.mxu0
    %v1864 = vadd.f32 0.0, %v1863
    %v1865 = vpop.f32.mrf.mxu0
    %1866 = vmatprep.mubr.bf16.mxu0 0
    %1867 = vmatmul.mubr.bf16.gmra.mxu0 %v1085
    %v1868 = vpop.f32.mrf.mxu0
    %v1869 = vadd.f32 0.0, %v1868
    %v1870 = vpop.f32.mrf.mxu0
    %v1871 = vpop.f32.mrf.mxu0
    %v1872 = vadd.f32 0.0, %v1871
    %v1873 = vpop.f32.mrf.mxu0
    %1874 = vmatprep.mubr.bf16.mxu0 0
    %1875 = vmatmul.mubr.bf16.gmra.mxu0 %v1088
    %v1876 = vpop.f32.mrf.mxu0
    %v1877 = vadd.f32 0.0, %v1876
    %v1878 = vpop.f32.mrf.mxu0
    %v1879 = vpop.f32.mrf.mxu0
    %v1880 = vadd.f32 0.0, %v1879
    %v1881 = vpop.f32.mrf.mxu0
    %1882 = vmatprep.mubr.bf16.mxu0 0
    %1883 = vmatmul.mubr.bf16.gmra.mxu0 %v1091
    %v1884 = vpop.f32.mrf.mxu0
    %v1885 = vadd.f32 0.0, %v1884
    %v1886 = vpop.f32.mrf.mxu0
    %v1887 = vpop.f32.mrf.mxu0
    %v1888 = vadd.f32 0.0, %v1887
    %v1889 = vpop.f32.mrf.mxu0
    %1890 = vmatprep.mubr.bf16.mxu0 0
    %1891 = vmatmul.mubr.bf16.gmra.mxu0 %v1094
    %v1892 = vpop.f32.mrf.mxu0
    %v1893 = vadd.f32 0.0, %v1892
    %v1894 = vpop.f32.mrf.mxu0
    %v1895 = vpop.f32.mrf.mxu0
    %v1896 = vadd.f32 0.0, %v1895
    %v1897 = vpop.f32.mrf.mxu0
    %1898 = vmatprep.mubr.bf16.mxu0 0
    %1899 = vmatmul.mubr.bf16.gmra.mxu0 %v1097
    %v1900 = vpop.f32.mrf.mxu0
    %v1901 = vadd.f32 0.0, %v1900
    %v1902 = vpop.f32.mrf.mxu0
    %v1903 = vpop.f32.mrf.mxu0
    %v1904 = vadd.f32 0.0, %v1903
    %v1905 = vpop.f32.mrf.mxu0
    %1906 = vmatprep.mubr.bf16.mxu0 0
    %1907 = vmatmul.mubr.bf16.gmra.mxu0 %v1100
    %v1908 = vpop.f32.mrf.mxu0
    %v1909 = vadd.f32 0.0, %v1908
    %v1910 = vpop.f32.mrf.mxu0
    %v1911 = vpop.f32.mrf.mxu0
    %v1912 = vadd.f32 0.0, %v1911
    %v1913 = vpop.f32.mrf.mxu0
    %1914 = vmatprep.mubr.bf16.mxu0 0
    %1915 = vmatmul.mubr.bf16.gmra.mxu0 %v1103
    %v1916 = vpop.f32.mrf.mxu0
    %v1917 = vadd.f32 0.0, %v1916
    %v1918 = vpop.f32.mrf.mxu0
    %v1919 = vpop.f32.mrf.mxu0
    %v1920 = vadd.f32 0.0, %v1919
    %v1921 = vpop.f32.mrf.mxu0
    %1922 = vmatprep.mubr.bf16.mxu0 0
    %1923 = vmatmul.mubr.bf16.gmra.mxu0 %v1106
    %v1924 = vpop.f32.mrf.mxu0
    %v1925 = vadd.f32 0.0, %v1924
    %v1926 = vpop.f32.mrf.mxu0
    %v1927 = vpop.f32.mrf.mxu0
    %v1928 = vadd.f32 0.0, %v1927
    %v1929 = vpop.f32.mrf.mxu0
    %1930 = vmatprep.mubr.bf16.mxu0 0
    %1931 = vmatmul.mubr.bf16.gmra.mxu0 %v1109
    %v1932 = vpop.f32.mrf.mxu0
    %v1933 = vadd.f32 0.0, %v1932
    %v1934 = vpop.f32.mrf.mxu0
    %v1935 = vpop.f32.mrf.mxu0
    %v1936 = vadd.f32 0.0, %v1935
    %v1937 = vpop.f32.mrf.mxu0
    %1938 = vmatprep.mubr.bf16.mxu0 0
    %1939 = vmatmul.mubr.bf16.gmra.mxu0 %v1112
    %v1940 = vpop.f32.mrf.mxu0
    %v1941 = vadd.f32 0.0, %v1940
    %v1942 = vpop.f32.mrf.mxu0
    %v1943 = vpop.f32.mrf.mxu0
    %v1944 = vadd.f32 0.0, %v1943
    %v1945 = vpop.f32.mrf.mxu0
    %1946 = vmatprep.mubr.bf16.mxu0 0
    %1947 = vmatmul.mubr.bf16.gmra.mxu0 %v1115
    %v1948 = vpop.f32.mrf.mxu0
    %v1949 = vadd.f32 0.0, %v1948
    %v1950 = vpop.f32.mrf.mxu0
    %v1951 = vpop.f32.mrf.mxu0
    %v1952 = vadd.f32 0.0, %v1951
    %v1953 = vpop.f32.mrf.mxu0
    %1954 = vmatprep.mubr.bf16.mxu0 0
    %1955 = vmatmul.mubr.bf16.gmra.mxu0 %v1118
    %v1956 = vpop.f32.mrf.mxu0
    %v1957 = vadd.f32 0.0, %v1956
    %v1958 = vpop.f32.mrf.mxu0
    %v1959 = vpop.f32.mrf.mxu0
    %v1960 = vadd.f32 0.0, %v1959
    %v1961 = vpop.f32.mrf.mxu0
    %1962 = vmatprep.mubr.bf16.mxu0 0
    %1963 = vmatmul.mubr.bf16.gmra.mxu0 %v1121
    %v1964 = vpop.f32.mrf.mxu0
    %v1965 = vadd.f32 0.0, %v1964
    %v1966 = vpop.f32.mrf.mxu0
    %v1967 = vpop.f32.mrf.mxu0
    %v1968 = vadd.f32 0.0, %v1967
    %v1969 = vpop.f32.mrf.mxu0
    %1970 = vmatprep.mubr.bf16.mxu0 0
    %1971 = vmatmul.mubr.bf16.gmra.mxu0 %v1124
    %v1972 = vpop.f32.mrf.mxu0
    %v1973 = vadd.f32 0.0, %v1972
    %v1974 = vpop.f32.mrf.mxu0
    %v1975 = vpop.f32.mrf.mxu0
    %v1976 = vadd.f32 0.0, %v1975
    %v1977 = vpop.f32.mrf.mxu0
    %1978 = vmatprep.mubr.bf16.mxu0 0
    %1979 = vmatmul.mubr.bf16.gmra.mxu0 %v1127
    %v1980 = vpop.f32.mrf.mxu0
    %v1981 = vadd.f32 0.0, %v1980
    %v1982 = vpop.f32.mrf.mxu0
    %v1983 = vpop.f32.mrf.mxu0
    %v1984 = vadd.f32 0.0, %v1983
    %v1985 = vpop.f32.mrf.mxu0
    %1986 = vmatprep.mubr.bf16.mxu0 0
    %1987 = vmatmul.mubr.bf16.gmra.mxu0 %v1130
    %v1988 = vpop.f32.mrf.mxu0
    %v1989 = vadd.f32 0.0, %v1988
    %v1990 = vpop.f32.mrf.mxu0
    %v1991 = vpop.f32.mrf.mxu0
    %v1992 = vadd.f32 0.0, %v1991
    %v1993 = vpop.f32.mrf.mxu0
    %1994 = vmatprep.mubr.bf16.mxu0 0
    %1995 = vmatmul.mubr.bf16.gmra.mxu0 %v1133
    %v1996 = vpop.f32.mrf.mxu0
    %v1997 = vadd.f32 0.0, %v1996
    %v1998 = vpop.f32.mrf.mxu0
    %v1999 = vpop.f32.mrf.mxu0
    %v2000 = vadd.f32 0.0, %v1999
    %v2001 = vpop.f32.mrf.mxu0
    %2002 = vmatprep.mubr.bf16.mxu0 0
    %2003 = vmatmul.mubr.bf16.gmra.mxu0 %v1136
    %v2004 = vpop.f32.mrf.mxu0
    %v2005 = vadd.f32 0.0, %v2004
    %v2006 = vpop.f32.mrf.mxu0
    %v2007 = vpop.f32.mrf.mxu0
    %v2008 = vadd.f32 0.0, %v2007
    %v2009 = vpop.f32.mrf.mxu0
    %2010 = vmatprep.mubr.bf16.mxu0 0
    %2011 = vmatmul.mubr.bf16.gmra.mxu0 %v1139
    %v2012 = vpop.f32.mrf.mxu0
    %v2013 = vadd.f32 0.0, %v2012
    %v2014 = vpop.f32.mrf.mxu0
    %v2015 = vpop.f32.mrf.mxu0
    %v2016 = vadd.f32 0.0, %v2015
    %v2017 = vpop.f32.mrf.mxu0
    %2018 = vmatprep.mubr.bf16.mxu0 0
    %2019 = vmatmul.mubr.bf16.gmra.mxu0 %v1142
    %v2020 = vpop.f32.mrf.mxu0
    %v2021 = vadd.f32 0.0, %v2020
    %v2022 = vpop.f32.mrf.mxu0
    %v2023 = vpop.f32.mrf.mxu0
    %v2024 = vadd.f32 0.0, %v2023
    %v2025 = vpop.f32.mrf.mxu0
    %2026 = vmatprep.mubr.bf16.mxu0 0
    %2027 = vmatmul.mubr.bf16.gmra.mxu0 %v1145
    %v2028 = vpop.f32.mrf.mxu0
    %v2029 = vadd.f32 0.0, %v2028
    %v2030 = vpop.f32.mrf.mxu0
    %v2031 = vpop.f32.mrf.mxu0
    %v2032 = vadd.f32 0.0, %v2031
    %v2033 = vpop.f32.mrf.mxu0
    %2034 = vmatprep.mubr.bf16.mxu0 0
    %2035 = vmatmul.mubr.bf16.gmra.mxu0 %v1148
    %v2036 = vpop.f32.mrf.mxu0
    %v2037 = vadd.f32 0.0, %v2036
    %v2038 = vpop.f32.mrf.mxu0
    %v2039 = vpop.f32.mrf.mxu0
    %v2040 = vadd.f32 0.0, %v2039
    %v2041 = vpop.f32.mrf.mxu0
    %2042 = vmatprep.mubr.bf16.mxu0 0
    %2043 = vmatmul.mubr.bf16.gmra.mxu0 %v1151
    %v2044 = vpop.f32.mrf.mxu0
    %v2045 = vadd.f32 0.0, %v2044
    %v2046 = vpop.f32.mrf.mxu0
    %v2047 = vpop.f32.mrf.mxu0
    %v2048 = vadd.f32 0.0, %v2047
    %v2049 = vpop.f32.mrf.mxu0
    %2050 = vmatprep.mubr.bf16.mxu0 0
    %2051 = vmatmul.mubr.bf16.gmra.mxu0 %v1154
    %v2052 = vpop.f32.mrf.mxu0
    %v2053 = vadd.f32 0.0, %v2052
    %v2054 = vpop.f32.mrf.mxu0
    %v2055 = vpop.f32.mrf.mxu0
    %v2056 = vadd.f32 0.0, %v2055
    %v2057 = vpop.f32.mrf.mxu0
    %2058 = vmatprep.mubr.bf16.mxu0 0
    %2059 = vmatmul.mubr.bf16.gmra.mxu0 %v1157
    %v2060 = vpop.f32.mrf.mxu0
    %v2061 = vadd.f32 0.0, %v2060
    %v2062 = vpop.f32.mrf.mxu0
    %v2063 = vpop.f32.mrf.mxu0
    %v2064 = vadd.f32 0.0, %v2063
    %v2065 = vpop.f32.mrf.mxu0
    %2066 = vmatprep.mubr.bf16.mxu0 0
    %2067 = vmatmul.mubr.bf16.gmra.mxu0 %v1160
    %v2068 = vpop.f32.mrf.mxu0
    %v2069 = vadd.f32 0.0, %v2068
    %v2070 = vpop.f32.mrf.mxu0
    %v2071 = vpop.f32.mrf.mxu0
    %v2072 = vadd.f32 0.0, %v2071
    %v2073 = vpop.f32.mrf.mxu0
    %2074 = vmatprep.mubr.bf16.mxu0 0
    %2075 = vmatmul.mubr.bf16.gmra.mxu0 %v1163
    %v2076 = vpop.f32.mrf.mxu0
    %v2077 = vadd.f32 0.0, %v2076
    %v2078 = vpop.f32.mrf.mxu0
    %v2079 = vpop.f32.mrf.mxu0
    %v2080 = vadd.f32 0.0, %v2079
    %v2081 = vpop.f32.mrf.mxu0
    %2082 = vmatprep.mubr.bf16.mxu0 0
    %2083 = vmatmul.mubr.bf16.gmra.mxu0 %v1166
    %v2084 = vpop.f32.mrf.mxu0
    %v2085 = vadd.f32 0.0, %v2084
    %v2086 = vpop.f32.mrf.mxu0
    %v2087 = vpop.f32.mrf.mxu0
    %v2088 = vadd.f32 0.0, %v2087
    %v2089 = vpop.f32.mrf.mxu0
    %2090 = vmatprep.mubr.bf16.mxu0 0
    %2091 = vmatmul.mubr.bf16.gmra.mxu0 %v1169
    %v2092 = vpop.f32.mrf.mxu0
    %v2093 = vadd.f32 0.0, %v2092
    %v2094 = vpop.f32.mrf.mxu0
    %v2095 = vpop.f32.mrf.mxu0
    %v2096 = vadd.f32 0.0, %v2095
    %v2097 = vpop.f32.mrf.mxu0
    %2098 = vmatprep.mubr.bf16.mxu0 0
    %2099 = vmatmul.mubr.bf16.gmra.mxu0 %v1172
    %v2100 = vpop.f32.mrf.mxu0
    %v2101 = vadd.f32 0.0, %v2100
    %v2102 = vpop.f32.mrf.mxu0
    %v2103 = vpop.f32.mrf.mxu0
    %v2104 = vadd.f32 0.0, %v2103
    %v2105 = vpop.f32.mrf.mxu0
    %2106 = vdwg.mxu0
    %v2107 = vmax.f32 %v1213, 0.0
    %v2108 = vmax.f32 %v1216, 0.0
    %v2109 = vmax.f32 %v1221, 0.0
    %v2110 = vmax.f32 %v1224, 0.0
    %v2111 = vmax.f32 %v1229, 0.0
    %v2112 = vmax.f32 %v1232, 0.0
    %v2113 = vmax.f32 %v1237, 0.0
    %v2114 = vmax.f32 %v1240, 0.0
    %v2115 = vmax.f32 %v1245, 0.0
    %v2116 = vmax.f32 %v1248, 0.0
    %v2117 = vmax.f32 %v1253, 0.0
    %v2118 = vmax.f32 %v1256, 0.0
    %v2119 = vmax.f32 %v1261, 0.0
    %v2120 = vmax.f32 %v1264, 0.0
    %v2121 = vmax.f32 %v1269, 0.0
    %v2122 = vmax.f32 %v1272, 0.0
    %v2123 = vmax.f32 %v1277, 0.0
    %v2124 = vmax.f32 %v1280, 0.0
    %v2125 = vmax.f32 %v1285, 0.0
    %v2126 = vmax.f32 %v1288, 0.0
    %v2127 = vmax.f32 %v1293, 0.0
    %v2128 = vmax.f32 %v1296, 0.0
    %v2129 = vmax.f32 %v1301, 0.0
    %v2130 = vmax.f32 %v1304, 0.0
    %v2131 = vmax.f32 %v1309, 0.0
    %v2132 = vmax.f32 %v1312, 0.0
    %v2133 = vmax.f32 %v1317, 0.0
    %v2134 = vmax.f32 %v1320, 0.0
    %v2135 = vmax.f32 %v1325, 0.0
    %v2136 = vmax.f32 %v1328, 0.0
    %v2137 = vmax.f32 %v1333, 0.0
    %v2138 = vmax.f32 %v1336, 0.0
    %v2139 = vmax.f32 %v1341, 0.0
    %v2140 = vmax.f32 %v1344, 0.0
    %v2141 = vmax.f32 %v1349, 0.0
    %v2142 = vmax.f32 %v1352, 0.0
    %v2143 = vmax.f32 %v1357, 0.0
    %v2144 = vmax.f32 %v1360, 0.0
    %v2145 = vmax.f32 %v1365, 0.0
    %v2146 = vmax.f32 %v1368, 0.0
    %v2147 = vmax.f32 %v1373, 0.0
    %v2148 = vmax.f32 %v1376, 0.0
    %v2149 = vmax.f32 %v1381, 0.0
    %v2150 = vmax.f32 %v1384, 0.0
    %v2151 = vmax.f32 %v1389, 0.0
    %v2152 = vmax.f32 %v1392, 0.0
    %v2153 = vmax.f32 %v1397, 0.0
    %v2154 = vmax.f32 %v1400, 0.0
    %v2155 = vmax.f32 %v1405, 0.0
    %v2156 = vmax.f32 %v1408, 0.0
    %v2157 = vmax.f32 %v1413, 0.0
    %v2158 = vmax.f32 %v1416, 0.0
    %v2159 = vmax.f32 %v1421, 0.0
    %v2160 = vmax.f32 %v1424, 0.0
    %v2161 = vmax.f32 %v1429, 0.0
    %v2162 = vmax.f32 %v1432, 0.0
    %v2163 = vmax.f32 %v1437, 0.0
    %v2164 = vmax.f32 %v1440, 0.0
    %v2165 = vmax.f32 %v1445, 0.0
    %v2166 = vmax.f32 %v1448, 0.0
    %v2167 = vmax.f32 %v1453, 0.0
    %v2168 = vmax.f32 %v1456, 0.0
    %v2169 = vmax.f32 %v1461, 0.0
    %v2170 = vmax.f32 %v1464, 0.0
    %v2171 = vmax.f32 %v1469, 0.0
    %v2172 = vmax.f32 %v1472, 0.0
    %v2173 = vmax.f32 %v1477, 0.0
    %v2174 = vmax.f32 %v1480, 0.0
    %v2175 = vmax.f32 %v1485, 0.0
    %v2176 = vmax.f32 %v1488, 0.0
    %v2177 = vmax.f32 %v1493, 0.0
    %v2178 = vmax.f32 %v1496, 0.0
    %v2179 = vmax.f32 %v1501, 0.0
    %v2180 = vmax.f32 %v1504, 0.0
    %v2181 = vmax.f32 %v1509, 0.0
    %v2182 = vmax.f32 %v1512, 0.0
    %v2183 = vmax.f32 %v1517, 0.0
    %v2184 = vmax.f32 %v1520, 0.0
    %v2185 = vmax.f32 %v1525, 0.0
    %v2186 = vmax.f32 %v1528, 0.0
    %v2187 = vmax.f32 %v1533, 0.0
    %v2188 = vmax.f32 %v1536, 0.0
    %v2189 = vmax.f32 %v1541, 0.0
    %v2190 = vmax.f32 %v1544, 0.0
    %v2191 = vmax.f32 %v1549, 0.0
    %v2192 = vmax.f32 %v1552, 0.0
    %v2193 = vmax.f32 %v1557, 0.0
    %v2194 = vmax.f32 %v1560, 0.0
    %v2195 = vmax.f32 %v1565, 0.0
    %v2196 = vmax.f32 %v1568, 0.0
    %v2197 = vmax.f32 %v1573, 0.0
    %v2198 = vmax.f32 %v1576, 0.0
    %v2199 = vmax.f32 %v1581, 0.0
    %v2200 = vmax.f32 %v1584, 0.0
    %v2201 = vmax.f32 %v1589, 0.0
    %v2202 = vmax.f32 %v1592, 0.0
    %v2203 = vmax.f32 %v1597, 0.0
    %v2204 = vmax.f32 %v1600, 0.0
    %v2205 = vmax.f32 %v1605, 0.0
    %v2206 = vmax.f32 %v1608, 0.0
    %v2207 = vmax.f32 %v1613, 0.0
    %v2208 = vmax.f32 %v1616, 0.0
    %v2209 = vmax.f32 %v1621, 0.0
    %v2210 = vmax.f32 %v1624, 0.0
    %v2211 = vmax.f32 %v1629, 0.0
    %v2212 = vmax.f32 %v1632, 0.0
    %v2213 = vmax.f32 %v1637, 0.0
    %v2214 = vmax.f32 %v1640, 0.0
    %v2215 = vmax.f32 %v1645, 0.0
    %v2216 = vmax.f32 %v1648, 0.0
    %v2217 = vmax.f32 %v1653, 0.0
    %v2218 = vmax.f32 %v1656, 0.0
    %v2219 = vmax.f32 %v1661, 0.0
    %v2220 = vmax.f32 %v1664, 0.0
    %v2221 = vmax.f32 %v1669, 0.0
    %v2222 = vmax.f32 %v1672, 0.0
    %v2223 = vmax.f32 %v1677, 0.0
    %v2224 = vmax.f32 %v1680, 0.0
    %v2225 = vmax.f32 %v1685, 0.0
    %v2226 = vmax.f32 %v1688, 0.0
    %v2227 = vmax.f32 %v1693, 0.0
    %v2228 = vmax.f32 %v1696, 0.0
    %v2229 = vmax.f32 %v1701, 0.0
    %v2230 = vmax.f32 %v1704, 0.0
    %v2231 = vmax.f32 %v1709, 0.0
    %v2232 = vmax.f32 %v1712, 0.0
    %v2233 = vmax.f32 %v1717, 0.0
    %v2234 = vmax.f32 %v1720, 0.0
    %v2235 = vmax.f32 %v1725, 0.0
    %v2236 = vmax.f32 %v1728, 0.0
    %v2237 = vmax.f32 %v1733, 0.0
    %v2238 = vmax.f32 %v1736, 0.0
    %v2239 = vmax.f32 %v1741, 0.0
    %v2240 = vmax.f32 %v1744, 0.0
    %v2241 = vmax.f32 %v1749, 0.0
    %v2242 = vmax.f32 %v1752, 0.0
    %v2243 = vmax.f32 %v1757, 0.0
    %v2244 = vmax.f32 %v1760, 0.0
    %v2245 = vmax.f32 %v1765, 0.0
    %v2246 = vmax.f32 %v1768, 0.0
    %v2247 = vmax.f32 %v1773, 0.0
    %v2248 = vmax.f32 %v1776, 0.0
    %v2249 = vmax.f32 %v1781, 0.0
    %v2250 = vmax.f32 %v1784, 0.0
    %v2251 = vmax.f32 %v1789, 0.0
    %v2252 = vmax.f32 %v1792, 0.0
    %v2253 = vmax.f32 %v1797, 0.0
    %v2254 = vmax.f32 %v1800, 0.0
    %v2255 = vmax.f32 %v1805, 0.0
    %v2256 = vmax.f32 %v1808, 0.0
    %v2257 = vmax.f32 %v1813, 0.0
    %v2258 = vmax.f32 %v1816, 0.0
    %v2259 = vmax.f32 %v1821, 0.0
    %v2260 = vmax.f32 %v1824, 0.0
    %v2261 = vmax.f32 %v1829, 0.0
    %v2262 = vmax.f32 %v1832, 0.0
    %v2263 = vmax.f32 %v1837, 0.0
    %v2264 = vmax.f32 %v1840, 0.0
    %v2265 = vmax.f32 %v1845, 0.0
    %v2266 = vmax.f32 %v1848, 0.0
    %v2267 = vmax.f32 %v1853, 0.0
    %v2268 = vmax.f32 %v1856, 0.0
    %v2269 = vmax.f32 %v1861, 0.0
    %v2270 = vmax.f32 %v1864, 0.0
    %v2271 = vmax.f32 %v1869, 0.0
    %v2272 = vmax.f32 %v1872, 0.0
    %v2273 = vmax.f32 %v1877, 0.0
    %v2274 = vmax.f32 %v1880, 0.0
    %v2275 = vmax.f32 %v1885, 0.0
    %v2276 = vmax.f32 %v1888, 0.0
    %v2277 = vmax.f32 %v1893, 0.0
    %v2278 = vmax.f32 %v1896, 0.0
    %v2279 = vmax.f32 %v1901, 0.0
    %v2280 = vmax.f32 %v1904, 0.0
    %v2281 = vmax.f32 %v1909, 0.0
    %v2282 = vmax.f32 %v1912, 0.0
    %v2283 = vmax.f32 %v1917, 0.0
    %v2284 = vmax.f32 %v1920, 0.0
    %v2285 = vmax.f32 %v1925, 0.0
    %v2286 = vmax.f32 %v1928, 0.0
    %v2287 = vmax.f32 %v1933, 0.0
    %v2288 = vmax.f32 %v1936, 0.0
    %v2289 = vmax.f32 %v1941, 0.0
    %v2290 = vmax.f32 %v1944, 0.0
    %v2291 = vmax.f32 %v1949, 0.0
    %v2292 = vmax.f32 %v1952, 0.0
    %v2293 = vmax.f32 %v1957, 0.0
    %v2294 = vmax.f32 %v1960, 0.0
    %v2295 = vmax.f32 %v1965, 0.0
    %v2296 = vmax.f32 %v1968, 0.0
    %v2297 = vmax.f32 %v1973, 0.0
    %v2298 = vmax.f32 %v1976, 0.0
    %v2299 = vmax.f32 %v1981, 0.0
    %v2300 = vmax.f32 %v1984, 0.0
    %v2301 = vmax.f32 %v1989, 0.0
    %v2302 = vmax.f32 %v1992, 0.0
    %v2303 = vmax.f32 %v1997, 0.0
    %v2304 = vmax.f32 %v2000, 0.0
    %v2305 = vmax.f32 %v2005, 0.0
    %v2306 = vmax.f32 %v2008, 0.0
    %v2307 = vmax.f32 %v2013, 0.0
    %v2308 = vmax.f32 %v2016, 0.0
    %v2309 = vmax.f32 %v2021, 0.0
    %v2310 = vmax.f32 %v2024, 0.0
    %v2311 = vmax.f32 %v2029, 0.0
    %v2312 = vmax.f32 %v2032, 0.0
    %v2313 = vmax.f32 %v2037, 0.0
    %v2314 = vmax.f32 %v2040, 0.0
    %v2315 = vmax.f32 %v2045, 0.0
    %v2316 = vmax.f32 %v2048, 0.0
    %v2317 = vmax.f32 %v2053, 0.0
    %v2318 = vmax.f32 %v2056, 0.0
    %v2319 = vmax.f32 %v2061, 0.0
    %v2320 = vmax.f32 %v2064, 0.0
    %v2321 = vmax.f32 %v2069, 0.0
    %v2322 = vmax.f32 %v2072, 0.0
    %v2323 = vmax.f32 %v2077, 0.0
    %v2324 = vmax.f32 %v2080, 0.0
    %v2325 = vmax.f32 %v2085, 0.0
    %v2326 = vmax.f32 %v2088, 0.0
    %v2327 = vmax.f32 %v2093, 0.0
    %v2328 = vmax.f32 %v2096, 0.0
    %v2329 = vmax.f32 %v2101, 0.0
    %v2330 = vmax.f32 %v2104, 0.0
    %v2331 = vpack.c.bf16 %v2108, %v2107
    %v2332 = vpack.c.bf16 %v2110, %v2109
    %v2333 = vpack.c.bf16 %v2112, %v2111
    %v2334 = vpack.c.bf16 %v2114, %v2113
    %v2335 = vpack.c.bf16 %v2116, %v2115
    %v2336 = vpack.c.bf16 %v2118, %v2117
    %v2337 = vpack.c.bf16 %v2120, %v2119
    %v2338 = vpack.c.bf16 %v2122, %v2121
    %v2339 = vpack.c.bf16 %v2124, %v2123
    %v2340 = vpack.c.bf16 %v2126, %v2125
    %v2341 = vpack.c.bf16 %v2128, %v2127
    %v2342 = vpack.c.bf16 %v2130, %v2129
    %v2343 = vpack.c.bf16 %v2132, %v2131
    %v2344 = vpack.c.bf16 %v2134, %v2133
    %v2345 = vpack.c.bf16 %v2136, %v2135
    %v2346 = vpack.c.bf16 %v2138, %v2137
    %v2347 = vpack.c.bf16 %v2140, %v2139
    %v2348 = vpack.c.bf16 %v2142, %v2141
    %v2349 = vpack.c.bf16 %v2144, %v2143
    %v2350 = vpack.c.bf16 %v2146, %v2145
    %v2351 = vpack.c.bf16 %v2148, %v2147
    %v2352 = vpack.c.bf16 %v2150, %v2149
    %v2353 = vpack.c.bf16 %v2152, %v2151
    %v2354 = vpack.c.bf16 %v2154, %v2153
    %v2355 = vpack.c.bf16 %v2156, %v2155
    %v2356 = vpack.c.bf16 %v2158, %v2157
    %v2357 = vpack.c.bf16 %v2160, %v2159
    %v2358 = vpack.c.bf16 %v2162, %v2161
    %v2359 = vpack.c.bf16 %v2164, %v2163
    %v2360 = vpack.c.bf16 %v2166, %v2165
    %v2361 = vpack.c.bf16 %v2168, %v2167
    %v2362 = vpack.c.bf16 %v2170, %v2169
    %v2363 = vpack.c.bf16 %v2172, %v2171
    %v2364 = vpack.c.bf16 %v2174, %v2173
    %v2365 = vpack.c.bf16 %v2176, %v2175
    %v2366 = vpack.c.bf16 %v2178, %v2177
    %v2367 = vpack.c.bf16 %v2180, %v2179
    %v2368 = vpack.c.bf16 %v2182, %v2181
    %v2369 = vpack.c.bf16 %v2184, %v2183
    %v2370 = vpack.c.bf16 %v2186, %v2185
    %v2371 = vpack.c.bf16 %v2188, %v2187
    %v2372 = vpack.c.bf16 %v2190, %v2189
    %v2373 = vpack.c.bf16 %v2192, %v2191
    %v2374 = vpack.c.bf16 %v2194, %v2193
    %v2375 = vpack.c.bf16 %v2196, %v2195
    %v2376 = vpack.c.bf16 %v2198, %v2197
    %v2377 = vpack.c.bf16 %v2200, %v2199
    %v2378 = vpack.c.bf16 %v2202, %v2201
    %v2379 = vpack.c.bf16 %v2204, %v2203
    %v2380 = vpack.c.bf16 %v2206, %v2205
    %v2381 = vpack.c.bf16 %v2208, %v2207
    %v2382 = vpack.c.bf16 %v2210, %v2209
    %v2383 = vpack.c.bf16 %v2212, %v2211
    %v2384 = vpack.c.bf16 %v2214, %v2213
    %v2385 = vpack.c.bf16 %v2216, %v2215
    %v2386 = vpack.c.bf16 %v2218, %v2217
    %v2387 = vpack.c.bf16 %v2220, %v2219
    %v2388 = vpack.c.bf16 %v2222, %v2221
    %v2389 = vpack.c.bf16 %v2224, %v2223
    %v2390 = vpack.c.bf16 %v2226, %v2225
    %v2391 = vpack.c.bf16 %v2228, %v2227
    %v2392 = vpack.c.bf16 %v2230, %v2229
    %v2393 = vpack.c.bf16 %v2232, %v2231
    %v2394 = vpack.c.bf16 %v2234, %v2233
    %v2395 = vpack.c.bf16 %v2236, %v2235
    %v2396 = vpack.c.bf16 %v2238, %v2237
    %v2397 = vpack.c.bf16 %v2240, %v2239
    %v2398 = vpack.c.bf16 %v2242, %v2241
    %v2399 = vpack.c.bf16 %v2244, %v2243
    %v2400 = vpack.c.bf16 %v2246, %v2245
    %v2401 = vpack.c.bf16 %v2248, %v2247
    %v2402 = vpack.c.bf16 %v2250, %v2249
    %v2403 = vpack.c.bf16 %v2252, %v2251
    %v2404 = vpack.c.bf16 %v2254, %v2253
    %v2405 = vpack.c.bf16 %v2256, %v2255
    %v2406 = vpack.c.bf16 %v2258, %v2257
    %v2407 = vpack.c.bf16 %v2260, %v2259
    %v2408 = vpack.c.bf16 %v2262, %v2261
    %v2409 = vpack.c.bf16 %v2264, %v2263
    %v2410 = vpack.c.bf16 %v2266, %v2265
    %v2411 = vpack.c.bf16 %v2268, %v2267
    %v2412 = vpack.c.bf16 %v2270, %v2269
    %v2413 = vpack.c.bf16 %v2272, %v2271
    %v2414 = vpack.c.bf16 %v2274, %v2273
    %v2415 = vpack.c.bf16 %v2276, %v2275
    %v2416 = vpack.c.bf16 %v2278, %v2277
    %v2417 = vpack.c.bf16 %v2280, %v2279
    %v2418 = vpack.c.bf16 %v2282, %v2281
    %v2419 = vpack.c.bf16 %v2284, %v2283
    %v2420 = vpack.c.bf16 %v2286, %v2285
    %v2421 = vpack.c.bf16 %v2288, %v2287
    %v2422 = vpack.c.bf16 %v2290, %v2289
    %v2423 = vpack.c.bf16 %v2292, %v2291
    %v2424 = vpack.c.bf16 %v2294, %v2293
    %v2425 = vpack.c.bf16 %v2296, %v2295
    %v2426 = vpack.c.bf16 %v2298, %v2297
    %v2427 = vpack.c.bf16 %v2300, %v2299
    %v2428 = vpack.c.bf16 %v2302, %v2301
    %v2429 = vpack.c.bf16 %v2304, %v2303
    %v2430 = vpack.c.bf16 %v2306, %v2305
    %v2431 = vpack.c.bf16 %v2308, %v2307
    %v2432 = vpack.c.bf16 %v2310, %v2309
    %v2433 = vpack.c.bf16 %v2312, %v2311
    %v2434 = vpack.c.bf16 %v2314, %v2313
    %v2435 = vpack.c.bf16 %v2316, %v2315
    %v2436 = vpack.c.bf16 %v2318, %v2317
    %v2437 = vpack.c.bf16 %v2320, %v2319
    %v2438 = vpack.c.bf16 %v2322, %v2321
    %v2439 = vpack.c.bf16 %v2324, %v2323
    %v2440 = vpack.c.bf16 %v2326, %v2325
    %v2441 = vpack.c.bf16 %v2328, %v2327
    %v2442 = vpack.c.bf16 %v2330, %v2329
    %v2443 = vld [vmem:[%s2] sm:$0xf]
    %v2444 = vld [vmem:[%s2 + $0x4] sm:$0xf]
    %v2445 = vld [vmem:[%s2 + $0x8] sm:$0xf]
    %v2446 = vld [vmem:[%s2 + $0xc] sm:$0xf]
    %v2447 = vld [vmem:[%s2 + $0x10] sm:$0xf]
    %v2448 = vld [vmem:[%s2 + $0x14] sm:$0xf]
    %v2449 = vld [vmem:[%s2 + $0x18] sm:$0xf]
    %v2450 = vld [vmem:[%s2 + $0x1c] sm:$0xf]
    %s2451 = scalar_lea.vmem %s2, 32
    %v2452 = vld [vmem:[%s2451] sm:$0xf]
    %v2453 = vld [vmem:[%s2451 + $0x4] sm:$0xf]
    %v2454 = vld [vmem:[%s2451 + $0x8] sm:$0xf]
    %v2455 = vld [vmem:[%s2451 + $0xc] sm:$0xf]
    %v2456 = vld [vmem:[%s2451 + $0x10] sm:$0xf]
    %v2457 = vld [vmem:[%s2451 + $0x14] sm:$0xf]
    %v2458 = vld [vmem:[%s2451 + $0x18] sm:$0xf]
    %v2459 = vld [vmem:[%s2451 + $0x1c] sm:$0xf]
    %v2468 = vunpack.c.l.b16 %v2452
    %v2469 = vunpack.c.l.b16 %v2453
    %v2470 = vunpack.c.l.b16 %v2454
    %v2471 = vunpack.c.l.b16 %v2455
    %v2472 = vunpack.c.l.b16 %v2456
    %v2473 = vunpack.c.l.b16 %v2457
    %v2474 = vunpack.c.l.b16 %v2458
    %v2475 = vunpack.c.l.b16 %v2459
    %v2476 = vpack.c.b16 %v2469, %v2468
    %v2477 = vpack.c.b16 %v2471, %v2470
    %v2478 = vpack.c.b16 %v2473, %v2472
    %v2479 = vpack.c.b16 %v2475, %v2474
    %vm2484 = vcmask 523264
    %v2486 = vsel %vm2484, %v2338, 0
    %v2489 = vsel %vm2484, %v2339, 0
    %v2492 = vsel %vm2484, %v2340, 0
    %v2495 = vsel %vm2484, %v2341, 0
    %v2498 = vsel %vm2484, %v2342, 0
    %v2501 = vsel %vm2484, %v2343, 0
    %v2504 = vsel %vm2484, %v2344, 0
    %2506 = vmatprep.subr.bf16.mxu0 0
    %2507 = vmatpush1.bf16.msra.mxu0 0
    %2508 = vmatprep.subr.bf16.mxu0 0
    %2509 = vmatpush1.bf16.msra.mxu0 0
    %2510 = vmatprep.subr.bf16.mxu0 0
    %2511 = vmatpush1.bf16.msra.mxu0 0
    %2512 = vmatprep.subr.bf16.mxu0 0
    %2513 = vmatpush1.bf16.msra.mxu0 0
    %2514 = vmatprep.subr.bf16.mxu0 0
    %2515 = vmatpush1.bf16.msra.mxu0 %v2479
    %2516 = vmatprep.subr.bf16.mxu0 0
    %2517 = vmatpush1.bf16.msra.mxu0 %v2478
    %2518 = vmatprep.subr.bf16.mxu0 0
    %2519 = vmatpush1.bf16.msra.mxu0 %v2477
    %2520 = vmatprep.subr.bf16.mxu0 0
    %2521 = vmatpush1.bf16.msra.mxu0 %v2476
    %2522 = vmatprep.subr.bf16.mxu0 0
    %2523 = vmatpush2.bf16.msra.mxu0 0
    %2524 = vmatprep.subr.bf16.mxu0 0
    %2525 = vmatpush2.bf16.msra.mxu0 0
    %2526 = vmatprep.subr.bf16.mxu0 0
    %2527 = vmatpush2.bf16.msra.mxu0 0
    %2528 = vmatprep.subr.bf16.mxu0 0
    %2529 = vmatpush2.bf16.msra.mxu0 0
    %2530 = vmatprep.subr.bf16.mxu0 0
    %2531 = vmatpush2.bf16.msra.mxu0 0
    %2532 = vmatprep.subr.bf16.mxu0 0
    %2533 = vmatpush2.bf16.msra.mxu0 0
    %2534 = vmatprep.subr.bf16.mxu0 0
    %2535 = vmatpush2.bf16.msra.mxu0 0
    %2536 = vmatprep.subr.bf16.mxu0 0
    %2537 = vmatpush2.bf16.msra.mxu0 0
    %2538 = vmatprep.mubr.bf16.mxu0 0
    %2539 = vmatmul.mubr.bf16.gmra.mxu0 %v2486
    %v2540 = vpop.f32.mrf.mxu0
    %v2541 = vadd.f32 0.0, %v2540
    %v2542 = vpop.f32.mrf.mxu0
    %v2543 = vpop.f32.mrf.mxu0
    %v2544 = vadd.f32 0.0, %v2543
    %v2545 = vpop.f32.mrf.mxu0
    %2546 = vmatprep.mubr.bf16.mxu0 0
    %2547 = vmatmul.mubr.bf16.gmra.mxu0 %v2489
    %v2548 = vpop.f32.mrf.mxu0
    %v2549 = vadd.f32 0.0, %v2548
    %v2550 = vpop.f32.mrf.mxu0
    %v2551 = vpop.f32.mrf.mxu0
    %v2552 = vadd.f32 0.0, %v2551
    %v2553 = vpop.f32.mrf.mxu0
    %2554 = vmatprep.mubr.bf16.mxu0 0
    %2555 = vmatmul.mubr.bf16.gmra.mxu0 %v2492
    %v2556 = vpop.f32.mrf.mxu0
    %v2557 = vadd.f32 0.0, %v2556
    %v2558 = vpop.f32.mrf.mxu0
    %v2559 = vpop.f32.mrf.mxu0
    %v2560 = vadd.f32 0.0, %v2559
    %v2561 = vpop.f32.mrf.mxu0
    %2562 = vmatprep.mubr.bf16.mxu0 0
    %2563 = vmatmul.mubr.bf16.gmra.mxu0 %v2495
    %v2564 = vpop.f32.mrf.mxu0
    %v2565 = vadd.f32 0.0, %v2564
    %v2566 = vpop.f32.mrf.mxu0
    %v2567 = vpop.f32.mrf.mxu0
    %v2568 = vadd.f32 0.0, %v2567
    %v2569 = vpop.f32.mrf.mxu0
    %2570 = vmatprep.mubr.bf16.mxu0 0
    %2571 = vmatmul.mubr.bf16.gmra.mxu0 %v2498
    %v2572 = vpop.f32.mrf.mxu0
    %v2573 = vadd.f32 0.0, %v2572
    %v2574 = vpop.f32.mrf.mxu0
    %v2575 = vpop.f32.mrf.mxu0
    %v2576 = vadd.f32 0.0, %v2575
    %v2577 = vpop.f32.mrf.mxu0
    %2578 = vmatprep.mubr.bf16.mxu0 0
    %2579 = vmatmul.mubr.bf16.gmra.mxu0 %v2501
    %v2580 = vpop.f32.mrf.mxu0
    %v2581 = vadd.f32 0.0, %v2580
    %v2582 = vpop.f32.mrf.mxu0
    %v2583 = vpop.f32.mrf.mxu0
    %v2584 = vadd.f32 0.0, %v2583
    %v2585 = vpop.f32.mrf.mxu0
    %2586 = vmatprep.mubr.bf16.mxu0 0
    %2587 = vmatmul.mubr.bf16.gmra.mxu0 %v2504
    %v2588 = vpop.f32.mrf.mxu0
    %v2589 = vadd.f32 0.0, %v2588
    %v2590 = vpop.f32.mrf.mxu0
    %v2591 = vpop.f32.mrf.mxu0
    %v2592 = vadd.f32 0.0, %v2591
    %v2593 = vpop.f32.mrf.mxu0
    %2594 = vdwg.mxu0
    %v2603 = vunpack.c.l.b16 %v2443
    %v2604 = vunpack.c.l.b16 %v2444
    %v2605 = vunpack.c.l.b16 %v2445
    %v2606 = vunpack.c.l.b16 %v2446
    %v2607 = vunpack.c.l.b16 %v2447
    %v2608 = vunpack.c.l.b16 %v2448
    %v2609 = vunpack.c.l.b16 %v2449
    %v2610 = vunpack.c.l.b16 %v2450
    %v2611 = vpack.c.b16 %v2604, %v2603
    %v2612 = vpack.c.b16 %v2606, %v2605
    %v2613 = vpack.c.b16 %v2608, %v2607
    %v2614 = vpack.c.b16 %v2610, %v2609
    %v2620 = vsel %vm2484, %v2331, 0
    %v2623 = vsel %vm2484, %v2332, 0
    %v2626 = vsel %vm2484, %v2333, 0
    %v2629 = vsel %vm2484, %v2334, 0
    %v2632 = vsel %vm2484, %v2335, 0
    %v2635 = vsel %vm2484, %v2336, 0
    %v2638 = vsel %vm2484, %v2337, 0
    %2640 = vmatprep.subr.bf16.mxu0 0
    %2641 = vmatpush1.bf16.msra.mxu0 0
    %2642 = vmatprep.subr.bf16.mxu0 0
    %2643 = vmatpush1.bf16.msra.mxu0 0
    %2644 = vmatprep.subr.bf16.mxu0 0
    %2645 = vmatpush1.bf16.msra.mxu0 0
    %2646 = vmatprep.subr.bf16.mxu0 0
    %2647 = vmatpush1.bf16.msra.mxu0 0
    %2648 = vmatprep.subr.bf16.mxu0 0
    %2649 = vmatpush1.bf16.msra.mxu0 %v2614
    %2650 = vmatprep.subr.bf16.mxu0 0
    %2651 = vmatpush1.bf16.msra.mxu0 %v2613
    %2652 = vmatprep.subr.bf16.mxu0 0
    %2653 = vmatpush1.bf16.msra.mxu0 %v2612
    %2654 = vmatprep.subr.bf16.mxu0 0
    %2655 = vmatpush1.bf16.msra.mxu0 %v2611
    %2656 = vmatprep.subr.bf16.mxu0 0
    %2657 = vmatpush2.bf16.msra.mxu0 0
    %2658 = vmatprep.subr.bf16.mxu0 0
    %2659 = vmatpush2.bf16.msra.mxu0 0
    %2660 = vmatprep.subr.bf16.mxu0 0
    %2661 = vmatpush2.bf16.msra.mxu0 0
    %2662 = vmatprep.subr.bf16.mxu0 0
    %2663 = vmatpush2.bf16.msra.mxu0 0
    %2664 = vmatprep.subr.bf16.mxu0 0
    %2665 = vmatpush2.bf16.msra.mxu0 0
    %2666 = vmatprep.subr.bf16.mxu0 0
    %2667 = vmatpush2.bf16.msra.mxu0 0
    %2668 = vmatprep.subr.bf16.mxu0 0
    %2669 = vmatpush2.bf16.msra.mxu0 0
    %2670 = vmatprep.subr.bf16.mxu0 0
    %2671 = vmatpush2.bf16.msra.mxu0 0
    %2672 = vmatprep.mubr.bf16.mxu0 0
    %2673 = vmatmul.mubr.bf16.gmra.mxu0 %v2620
    %v2674 = vpop.f32.mrf.mxu0
    %v2675 = vadd.f32 %v2541, %v2674
    %v2676 = vpop.f32.mrf.mxu0
    %v2677 = vpop.f32.mrf.mxu0
    %v2678 = vadd.f32 %v2544, %v2677
    %v2679 = vpop.f32.mrf.mxu0
    %2680 = vmatprep.mubr.bf16.mxu0 0
    %2681 = vmatmul.mubr.bf16.gmra.mxu0 %v2623
    %v2682 = vpop.f32.mrf.mxu0
    %v2683 = vadd.f32 %v2549, %v2682
    %v2684 = vpop.f32.mrf.mxu0
    %v2685 = vpop.f32.mrf.mxu0
    %v2686 = vadd.f32 %v2552, %v2685
    %v2687 = vpop.f32.mrf.mxu0
    %2688 = vmatprep.mubr.bf16.mxu0 0
    %2689 = vmatmul.mubr.bf16.gmra.mxu0 %v2626
    %v2690 = vpop.f32.mrf.mxu0
    %v2691 = vadd.f32 %v2557, %v2690
    %v2692 = vpop.f32.mrf.mxu0
    %v2693 = vpop.f32.mrf.mxu0
    %v2694 = vadd.f32 %v2560, %v2693
    %v2695 = vpop.f32.mrf.mxu0
    %2696 = vmatprep.mubr.bf16.mxu0 0
    %2697 = vmatmul.mubr.bf16.gmra.mxu0 %v2629
    %v2698 = vpop.f32.mrf.mxu0
    %v2699 = vadd.f32 %v2565, %v2698
    %v2700 = vpop.f32.mrf.mxu0
    %v2701 = vpop.f32.mrf.mxu0
    %v2702 = vadd.f32 %v2568, %v2701
    %v2703 = vpop.f32.mrf.mxu0
    %2704 = vmatprep.mubr.bf16.mxu0 0
    %2705 = vmatmul.mubr.bf16.gmra.mxu0 %v2632
    %v2706 = vpop.f32.mrf.mxu0
    %v2707 = vadd.f32 %v2573, %v2706
    %v2708 = vpop.f32.mrf.mxu0
    %v2709 = vpop.f32.mrf.mxu0
    %v2710 = vadd.f32 %v2576, %v2709
    %v2711 = vpop.f32.mrf.mxu0
    %2712 = vmatprep.mubr.bf16.mxu0 0
    %2713 = vmatmul.mubr.bf16.gmra.mxu0 %v2635
    %v2714 = vpop.f32.mrf.mxu0
    %v2715 = vadd.f32 %v2581, %v2714
    %v2716 = vpop.f32.mrf.mxu0
    %v2717 = vpop.f32.mrf.mxu0
    %v2718 = vadd.f32 %v2584, %v2717
    %v2719 = vpop.f32.mrf.mxu0
    %2720 = vmatprep.mubr.bf16.mxu0 0
    %2721 = vmatmul.mubr.bf16.gmra.mxu0 %v2638
    %v2722 = vpop.f32.mrf.mxu0
    %v2723 = vadd.f32 %v2589, %v2722
    %v2724 = vpop.f32.mrf.mxu0
    %v2725 = vpop.f32.mrf.mxu0
    %v2726 = vadd.f32 %v2592, %v2725
    %v2727 = vpop.f32.mrf.mxu0
    %2728 = vdwg.mxu0
    %s2729 = scalar_lea.vmem %s2, 64
    %v2730 = vld [vmem:[%s2729] sm:$0xf]
    %v2731 = vld [vmem:[%s2729 + $0x4] sm:$0xf]
    %v2732 = vld [vmem:[%s2729 + $0x8] sm:$0xf]
    %v2733 = vld [vmem:[%s2729 + $0xc] sm:$0xf]
    %v2734 = vld [vmem:[%s2729 + $0x10] sm:$0xf]
    %v2735 = vld [vmem:[%s2729 + $0x14] sm:$0xf]
    %v2736 = vld [vmem:[%s2729 + $0x18] sm:$0xf]
    %v2737 = vld [vmem:[%s2729 + $0x1c] sm:$0xf]
    %v2746 = vunpack.c.l.b16 %v2730
    %v2747 = vunpack.c.l.b16 %v2731
    %v2748 = vunpack.c.l.b16 %v2732
    %v2749 = vunpack.c.l.b16 %v2733
    %v2750 = vunpack.c.l.b16 %v2734
    %v2751 = vunpack.c.l.b16 %v2735
    %v2752 = vunpack.c.l.b16 %v2736
    %v2753 = vunpack.c.l.b16 %v2737
    %v2754 = vpack.c.b16 %v2747, %v2746
    %v2755 = vpack.c.b16 %v2749, %v2748
    %v2756 = vpack.c.b16 %v2751, %v2750
    %v2757 = vpack.c.b16 %v2753, %v2752
    %v2763 = vsel %vm2484, %v2345, 0
    %v2766 = vsel %vm2484, %v2346, 0
    %v2769 = vsel %vm2484, %v2347, 0
    %v2772 = vsel %vm2484, %v2348, 0
    %v2775 = vsel %vm2484, %v2349, 0
    %v2778 = vsel %vm2484, %v2350, 0
    %v2781 = vsel %vm2484, %v2351, 0
    %2783 = vmatprep.subr.bf16.mxu0 0
    %2784 = vmatpush1.bf16.msra.mxu0 0
    %2785 = vmatprep.subr.bf16.mxu0 0
    %2786 = vmatpush1.bf16.msra.mxu0 0
    %2787 = vmatprep.subr.bf16.mxu0 0
    %2788 = vmatpush1.bf16.msra.mxu0 0
    %2789 = vmatprep.subr.bf16.mxu0 0
    %2790 = vmatpush1.bf16.msra.mxu0 0
    %2791 = vmatprep.subr.bf16.mxu0 0
    %2792 = vmatpush1.bf16.msra.mxu0 %v2757
    %2793 = vmatprep.subr.bf16.mxu0 0
    %2794 = vmatpush1.bf16.msra.mxu0 %v2756
    %2795 = vmatprep.subr.bf16.mxu0 0
    %2796 = vmatpush1.bf16.msra.mxu0 %v2755
    %2797 = vmatprep.subr.bf16.mxu0 0
    %2798 = vmatpush1.bf16.msra.mxu0 %v2754
    %2799 = vmatprep.subr.bf16.mxu0 0
    %2800 = vmatpush2.bf16.msra.mxu0 0
    %2801 = vmatprep.subr.bf16.mxu0 0
    %2802 = vmatpush2.bf16.msra.mxu0 0
    %2803 = vmatprep.subr.bf16.mxu0 0
    %2804 = vmatpush2.bf16.msra.mxu0 0
    %2805 = vmatprep.subr.bf16.mxu0 0
    %2806 = vmatpush2.bf16.msra.mxu0 0
    %2807 = vmatprep.subr.bf16.mxu0 0
    %2808 = vmatpush2.bf16.msra.mxu0 0
    %2809 = vmatprep.subr.bf16.mxu0 0
    %2810 = vmatpush2.bf16.msra.mxu0 0
    %2811 = vmatprep.subr.bf16.mxu0 0
    %2812 = vmatpush2.bf16.msra.mxu0 0
    %2813 = vmatprep.subr.bf16.mxu0 0
    %2814 = vmatpush2.bf16.msra.mxu0 0
    %2815 = vmatprep.mubr.bf16.mxu0 0
    %2816 = vmatmul.mubr.bf16.gmra.mxu0 %v2763
    %v2817 = vpop.f32.mrf.mxu0
    %v2818 = vadd.f32 0.0, %v2817
    %v2819 = vpop.f32.mrf.mxu0
    %v2820 = vpop.f32.mrf.mxu0
    %v2821 = vadd.f32 0.0, %v2820
    %v2822 = vpop.f32.mrf.mxu0
    %2823 = vmatprep.mubr.bf16.mxu0 0
    %2824 = vmatmul.mubr.bf16.gmra.mxu0 %v2766
    %v2825 = vpop.f32.mrf.mxu0
    %v2826 = vadd.f32 0.0, %v2825
    %v2827 = vpop.f32.mrf.mxu0
    %v2828 = vpop.f32.mrf.mxu0
    %v2829 = vadd.f32 0.0, %v2828
    %v2830 = vpop.f32.mrf.mxu0
    %2831 = vmatprep.mubr.bf16.mxu0 0
    %2832 = vmatmul.mubr.bf16.gmra.mxu0 %v2769
    %v2833 = vpop.f32.mrf.mxu0
    %v2834 = vadd.f32 0.0, %v2833
    %v2835 = vpop.f32.mrf.mxu0
    %v2836 = vpop.f32.mrf.mxu0
    %v2837 = vadd.f32 0.0, %v2836
    %v2838 = vpop.f32.mrf.mxu0
    %2839 = vmatprep.mubr.bf16.mxu0 0
    %2840 = vmatmul.mubr.bf16.gmra.mxu0 %v2772
    %v2841 = vpop.f32.mrf.mxu0
    %v2842 = vadd.f32 0.0, %v2841
    %v2843 = vpop.f32.mrf.mxu0
    %v2844 = vpop.f32.mrf.mxu0
    %v2845 = vadd.f32 0.0, %v2844
    %v2846 = vpop.f32.mrf.mxu0
    %2847 = vmatprep.mubr.bf16.mxu0 0
    %2848 = vmatmul.mubr.bf16.gmra.mxu0 %v2775
    %v2849 = vpop.f32.mrf.mxu0
    %v2850 = vadd.f32 0.0, %v2849
    %v2851 = vpop.f32.mrf.mxu0
    %v2852 = vpop.f32.mrf.mxu0
    %v2853 = vadd.f32 0.0, %v2852
    %v2854 = vpop.f32.mrf.mxu0
    %2855 = vmatprep.mubr.bf16.mxu0 0
    %2856 = vmatmul.mubr.bf16.gmra.mxu0 %v2778
    %v2857 = vpop.f32.mrf.mxu0
    %v2858 = vadd.f32 0.0, %v2857
    %v2859 = vpop.f32.mrf.mxu0
    %v2860 = vpop.f32.mrf.mxu0
    %v2861 = vadd.f32 0.0, %v2860
    %v2862 = vpop.f32.mrf.mxu0
    %2863 = vmatprep.mubr.bf16.mxu0 0
    %2864 = vmatmul.mubr.bf16.gmra.mxu0 %v2781
    %v2865 = vpop.f32.mrf.mxu0
    %v2866 = vadd.f32 0.0, %v2865
    %v2867 = vpop.f32.mrf.mxu0
    %v2868 = vpop.f32.mrf.mxu0
    %v2869 = vadd.f32 0.0, %v2868
    %v2870 = vpop.f32.mrf.mxu0
    %2871 = vdwg.mxu0
    %v2872 = vadd.f32 %v2675, %v2818
    %v2873 = vadd.f32 %v2678, %v2821
    %v2874 = vadd.f32 %v2683, %v2826
    %v2875 = vadd.f32 %v2686, %v2829
    %v2876 = vadd.f32 %v2691, %v2834
    %v2877 = vadd.f32 %v2694, %v2837
    %v2878 = vadd.f32 %v2699, %v2842
    %v2879 = vadd.f32 %v2702, %v2845
    %v2880 = vadd.f32 %v2707, %v2850
    %v2881 = vadd.f32 %v2710, %v2853
    %v2882 = vadd.f32 %v2715, %v2858
    %v2883 = vadd.f32 %v2718, %v2861
    %v2884 = vadd.f32 %v2723, %v2866
    %v2885 = vadd.f32 %v2726, %v2869
    %s2886 = scalar_lea.vmem %s2, 96
    %v2887 = vld [vmem:[%s2886] sm:$0xf]
    %v2888 = vld [vmem:[%s2886 + $0x4] sm:$0xf]
    %v2889 = vld [vmem:[%s2886 + $0x8] sm:$0xf]
    %v2890 = vld [vmem:[%s2886 + $0xc] sm:$0xf]
    %v2891 = vld [vmem:[%s2886 + $0x10] sm:$0xf]
    %v2892 = vld [vmem:[%s2886 + $0x14] sm:$0xf]
    %v2893 = vld [vmem:[%s2886 + $0x18] sm:$0xf]
    %v2894 = vld [vmem:[%s2886 + $0x1c] sm:$0xf]
    %v2903 = vunpack.c.l.b16 %v2887
    %v2904 = vunpack.c.l.b16 %v2888
    %v2905 = vunpack.c.l.b16 %v2889
    %v2906 = vunpack.c.l.b16 %v2890
    %v2907 = vunpack.c.l.b16 %v2891
    %v2908 = vunpack.c.l.b16 %v2892
    %v2909 = vunpack.c.l.b16 %v2893
    %v2910 = vunpack.c.l.b16 %v2894
    %v2911 = vpack.c.b16 %v2904, %v2903
    %v2912 = vpack.c.b16 %v2906, %v2905
    %v2913 = vpack.c.b16 %v2908, %v2907
    %v2914 = vpack.c.b16 %v2910, %v2909
    %v2920 = vsel %vm2484, %v2352, 0
    %v2923 = vsel %vm2484, %v2353, 0
    %v2926 = vsel %vm2484, %v2354, 0
    %v2929 = vsel %vm2484, %v2355, 0
    %v2932 = vsel %vm2484, %v2356, 0
    %v2935 = vsel %vm2484, %v2357, 0
    %v2938 = vsel %vm2484, %v2358, 0
    %2940 = vmatprep.subr.bf16.mxu0 0
    %2941 = vmatpush1.bf16.msra.mxu0 0
    %2942 = vmatprep.subr.bf16.mxu0 0
    %2943 = vmatpush1.bf16.msra.mxu0 0
    %2944 = vmatprep.subr.bf16.mxu0 0
    %2945 = vmatpush1.bf16.msra.mxu0 0
    %2946 = vmatprep.subr.bf16.mxu0 0
    %2947 = vmatpush1.bf16.msra.mxu0 0
    %2948 = vmatprep.subr.bf16.mxu0 0
    %2949 = vmatpush1.bf16.msra.mxu0 %v2914
    %2950 = vmatprep.subr.bf16.mxu0 0
    %2951 = vmatpush1.bf16.msra.mxu0 %v2913
    %2952 = vmatprep.subr.bf16.mxu0 0
    %2953 = vmatpush1.bf16.msra.mxu0 %v2912
    %2954 = vmatprep.subr.bf16.mxu0 0
    %2955 = vmatpush1.bf16.msra.mxu0 %v2911
    %2956 = vmatprep.subr.bf16.mxu0 0
    %2957 = vmatpush2.bf16.msra.mxu0 0
    %2958 = vmatprep.subr.bf16.mxu0 0
    %2959 = vmatpush2.bf16.msra.mxu0 0
    %2960 = vmatprep.subr.bf16.mxu0 0
    %2961 = vmatpush2.bf16.msra.mxu0 0
    %2962 = vmatprep.subr.bf16.mxu0 0
    %2963 = vmatpush2.bf16.msra.mxu0 0
    %2964 = vmatprep.subr.bf16.mxu0 0
    %2965 = vmatpush2.bf16.msra.mxu0 0
    %2966 = vmatprep.subr.bf16.mxu0 0
    %2967 = vmatpush2.bf16.msra.mxu0 0
    %2968 = vmatprep.subr.bf16.mxu0 0
    %2969 = vmatpush2.bf16.msra.mxu0 0
    %2970 = vmatprep.subr.bf16.mxu0 0
    %2971 = vmatpush2.bf16.msra.mxu0 0
    %2972 = vmatprep.mubr.bf16.mxu0 0
    %2973 = vmatmul.mubr.bf16.gmra.mxu0 %v2920
    %v2974 = vpop.f32.mrf.mxu0
    %v2975 = vadd.f32 0.0, %v2974
    %v2976 = vpop.f32.mrf.mxu0
    %v2977 = vpop.f32.mrf.mxu0
    %v2978 = vadd.f32 0.0, %v2977
    %v2979 = vpop.f32.mrf.mxu0
    %2980 = vmatprep.mubr.bf16.mxu0 0
    %2981 = vmatmul.mubr.bf16.gmra.mxu0 %v2923
    %v2982 = vpop.f32.mrf.mxu0
    %v2983 = vadd.f32 0.0, %v2982
    %v2984 = vpop.f32.mrf.mxu0
    %v2985 = vpop.f32.mrf.mxu0
    %v2986 = vadd.f32 0.0, %v2985
    %v2987 = vpop.f32.mrf.mxu0
    %2988 = vmatprep.mubr.bf16.mxu0 0
    %2989 = vmatmul.mubr.bf16.gmra.mxu0 %v2926
    %v2990 = vpop.f32.mrf.mxu0
    %v2991 = vadd.f32 0.0, %v2990
    %v2992 = vpop.f32.mrf.mxu0
    %v2993 = vpop.f32.mrf.mxu0
    %v2994 = vadd.f32 0.0, %v2993
    %v2995 = vpop.f32.mrf.mxu0
    %2996 = vmatprep.mubr.bf16.mxu0 0
    %2997 = vmatmul.mubr.bf16.gmra.mxu0 %v2929
    %v2998 = vpop.f32.mrf.mxu0
    %v2999 = vadd.f32 0.0, %v2998
    %v3000 = vpop.f32.mrf.mxu0
    %v3001 = vpop.f32.mrf.mxu0
    %v3002 = vadd.f32 0.0, %v3001
    %v3003 = vpop.f32.mrf.mxu0
    %3004 = vmatprep.mubr.bf16.mxu0 0
    %3005 = vmatmul.mubr.bf16.gmra.mxu0 %v2932
    %v3006 = vpop.f32.mrf.mxu0
    %v3007 = vadd.f32 0.0, %v3006
    %v3008 = vpop.f32.mrf.mxu0
    %v3009 = vpop.f32.mrf.mxu0
    %v3010 = vadd.f32 0.0, %v3009
    %v3011 = vpop.f32.mrf.mxu0
    %3012 = vmatprep.mubr.bf16.mxu0 0
    %3013 = vmatmul.mubr.bf16.gmra.mxu0 %v2935
    %v3014 = vpop.f32.mrf.mxu0
    %v3015 = vadd.f32 0.0, %v3014
    %v3016 = vpop.f32.mrf.mxu0
    %v3017 = vpop.f32.mrf.mxu0
    %v3018 = vadd.f32 0.0, %v3017
    %v3019 = vpop.f32.mrf.mxu0
    %3020 = vmatprep.mubr.bf16.mxu0 0
    %3021 = vmatmul.mubr.bf16.gmra.mxu0 %v2938
    %v3022 = vpop.f32.mrf.mxu0
    %v3023 = vadd.f32 0.0, %v3022
    %v3024 = vpop.f32.mrf.mxu0
    %v3025 = vpop.f32.mrf.mxu0
    %v3026 = vadd.f32 0.0, %v3025
    %v3027 = vpop.f32.mrf.mxu0
    %3028 = vdwg.mxu0
    %v3029 = vadd.f32 %v2872, %v2975
    %v3030 = vadd.f32 %v2873, %v2978
    %v3031 = vadd.f32 %v2874, %v2983
    %v3032 = vadd.f32 %v2875, %v2986
    %v3033 = vadd.f32 %v2876, %v2991
    %v3034 = vadd.f32 %v2877, %v2994
    %v3035 = vadd.f32 %v2878, %v2999
    %v3036 = vadd.f32 %v2879, %v3002
    %v3037 = vadd.f32 %v2880, %v3007
    %v3038 = vadd.f32 %v2881, %v3010
    %v3039 = vadd.f32 %v2882, %v3015
    %v3040 = vadd.f32 %v2883, %v3018
    %v3041 = vadd.f32 %v2884, %v3023
    %v3042 = vadd.f32 %v2885, %v3026
    %s3043 = scalar_lea.vmem %s2, 128
    %v3044 = vld [vmem:[%s3043] sm:$0xf]
    %v3045 = vld [vmem:[%s3043 + $0x4] sm:$0xf]
    %v3046 = vld [vmem:[%s3043 + $0x8] sm:$0xf]
    %v3047 = vld [vmem:[%s3043 + $0xc] sm:$0xf]
    %v3048 = vld [vmem:[%s3043 + $0x10] sm:$0xf]
    %v3049 = vld [vmem:[%s3043 + $0x14] sm:$0xf]
    %v3050 = vld [vmem:[%s3043 + $0x18] sm:$0xf]
    %v3051 = vld [vmem:[%s3043 + $0x1c] sm:$0xf]
    %v3060 = vunpack.c.l.b16 %v3044
    %v3061 = vunpack.c.l.b16 %v3045
    %v3062 = vunpack.c.l.b16 %v3046
    %v3063 = vunpack.c.l.b16 %v3047
    %v3064 = vunpack.c.l.b16 %v3048
    %v3065 = vunpack.c.l.b16 %v3049
    %v3066 = vunpack.c.l.b16 %v3050
    %v3067 = vunpack.c.l.b16 %v3051
    %v3068 = vpack.c.b16 %v3061, %v3060
    %v3069 = vpack.c.b16 %v3063, %v3062
    %v3070 = vpack.c.b16 %v3065, %v3064
    %v3071 = vpack.c.b16 %v3067, %v3066
    %v3077 = vsel %vm2484, %v2359, 0
    %v3080 = vsel %vm2484, %v2360, 0
    %v3083 = vsel %vm2484, %v2361, 0
    %v3086 = vsel %vm2484, %v2362, 0
    %v3089 = vsel %vm2484, %v2363, 0
    %v3092 = vsel %vm2484, %v2364, 0
    %v3095 = vsel %vm2484, %v2365, 0
    %3097 = vmatprep.subr.bf16.mxu0 0
    %3098 = vmatpush1.bf16.msra.mxu0 0
    %3099 = vmatprep.subr.bf16.mxu0 0
    %3100 = vmatpush1.bf16.msra.mxu0 0
    %3101 = vmatprep.subr.bf16.mxu0 0
    %3102 = vmatpush1.bf16.msra.mxu0 0
    %3103 = vmatprep.subr.bf16.mxu0 0
    %3104 = vmatpush1.bf16.msra.mxu0 0
    %3105 = vmatprep.subr.bf16.mxu0 0
    %3106 = vmatpush1.bf16.msra.mxu0 %v3071
    %3107 = vmatprep.subr.bf16.mxu0 0
    %3108 = vmatpush1.bf16.msra.mxu0 %v3070
    %3109 = vmatprep.subr.bf16.mxu0 0
    %3110 = vmatpush1.bf16.msra.mxu0 %v3069
    %3111 = vmatprep.subr.bf16.mxu0 0
    %3112 = vmatpush1.bf16.msra.mxu0 %v3068
    %3113 = vmatprep.subr.bf16.mxu0 0
    %3114 = vmatpush2.bf16.msra.mxu0 0
    %3115 = vmatprep.subr.bf16.mxu0 0
    %3116 = vmatpush2.bf16.msra.mxu0 0
    %3117 = vmatprep.subr.bf16.mxu0 0
    %3118 = vmatpush2.bf16.msra.mxu0 0
    %3119 = vmatprep.subr.bf16.mxu0 0
    %3120 = vmatpush2.bf16.msra.mxu0 0
    %3121 = vmatprep.subr.bf16.mxu0 0
    %3122 = vmatpush2.bf16.msra.mxu0 0
    %3123 = vmatprep.subr.bf16.mxu0 0
    %3124 = vmatpush2.bf16.msra.mxu0 0
    %3125 = vmatprep.subr.bf16.mxu0 0
    %3126 = vmatpush2.bf16.msra.mxu0 0
    %3127 = vmatprep.subr.bf16.mxu0 0
    %3128 = vmatpush2.bf16.msra.mxu0 0
    %3129 = vmatprep.mubr.bf16.mxu0 0
    %3130 = vmatmul.mubr.bf16.gmra.mxu0 %v3077
    %v3131 = vpop.f32.mrf.mxu0
    %v3132 = vadd.f32 0.0, %v3131
    %v3133 = vpop.f32.mrf.mxu0
    %v3134 = vpop.f32.mrf.mxu0
    %v3135 = vadd.f32 0.0, %v3134
    %v3136 = vpop.f32.mrf.mxu0
    %3137 = vmatprep.mubr.bf16.mxu0 0
    %3138 = vmatmul.mubr.bf16.gmra.mxu0 %v3080
    %v3139 = vpop.f32.mrf.mxu0
    %v3140 = vadd.f32 0.0, %v3139
    %v3141 = vpop.f32.mrf.mxu0
    %v3142 = vpop.f32.mrf.mxu0
    %v3143 = vadd.f32 0.0, %v3142
    %v3144 = vpop.f32.mrf.mxu0
    %3145 = vmatprep.mubr.bf16.mxu0 0
    %3146 = vmatmul.mubr.bf16.gmra.mxu0 %v3083
    %v3147 = vpop.f32.mrf.mxu0
    %v3148 = vadd.f32 0.0, %v3147
    %v3149 = vpop.f32.mrf.mxu0
    %v3150 = vpop.f32.mrf.mxu0
    %v3151 = vadd.f32 0.0, %v3150
    %v3152 = vpop.f32.mrf.mxu0
    %3153 = vmatprep.mubr.bf16.mxu0 0
    %3154 = vmatmul.mubr.bf16.gmra.mxu0 %v3086
    %v3155 = vpop.f32.mrf.mxu0
    %v3156 = vadd.f32 0.0, %v3155
    %v3157 = vpop.f32.mrf.mxu0
    %v3158 = vpop.f32.mrf.mxu0
    %v3159 = vadd.f32 0.0, %v3158
    %v3160 = vpop.f32.mrf.mxu0
    %3161 = vmatprep.mubr.bf16.mxu0 0
    %3162 = vmatmul.mubr.bf16.gmra.mxu0 %v3089
    %v3163 = vpop.f32.mrf.mxu0
    %v3164 = vadd.f32 0.0, %v3163
    %v3165 = vpop.f32.mrf.mxu0
    %v3166 = vpop.f32.mrf.mxu0
    %v3167 = vadd.f32 0.0, %v3166
    %v3168 = vpop.f32.mrf.mxu0
    %3169 = vmatprep.mubr.bf16.mxu0 0
    %3170 = vmatmul.mubr.bf16.gmra.mxu0 %v3092
    %v3171 = vpop.f32.mrf.mxu0
    %v3172 = vadd.f32 0.0, %v3171
    %v3173 = vpop.f32.mrf.mxu0
    %v3174 = vpop.f32.mrf.mxu0
    %v3175 = vadd.f32 0.0, %v3174
    %v3176 = vpop.f32.mrf.mxu0
    %3177 = vmatprep.mubr.bf16.mxu0 0
    %3178 = vmatmul.mubr.bf16.gmra.mxu0 %v3095
    %v3179 = vpop.f32.mrf.mxu0
    %v3180 = vadd.f32 0.0, %v3179
    %v3181 = vpop.f32.mrf.mxu0
    %v3182 = vpop.f32.mrf.mxu0
    %v3183 = vadd.f32 0.0, %v3182
    %v3184 = vpop.f32.mrf.mxu0
    %3185 = vdwg.mxu0
    %v3186 = vadd.f32 %v3029, %v3132
    %v3187 = vadd.f32 %v3030, %v3135
    %v3188 = vadd.f32 %v3031, %v3140
    %v3189 = vadd.f32 %v3032, %v3143
    %v3190 = vadd.f32 %v3033, %v3148
    %v3191 = vadd.f32 %v3034, %v3151
    %v3192 = vadd.f32 %v3035, %v3156
    %v3193 = vadd.f32 %v3036, %v3159
    %v3194 = vadd.f32 %v3037, %v3164
    %v3195 = vadd.f32 %v3038, %v3167
    %v3196 = vadd.f32 %v3039, %v3172
    %v3197 = vadd.f32 %v3040, %v3175
    %v3198 = vadd.f32 %v3041, %v3180
    %v3199 = vadd.f32 %v3042, %v3183
    %s3200 = scalar_lea.vmem %s2, 160
    %v3201 = vld [vmem:[%s3200] sm:$0xf]
    %v3202 = vld [vmem:[%s3200 + $0x4] sm:$0xf]
    %v3203 = vld [vmem:[%s3200 + $0x8] sm:$0xf]
    %v3204 = vld [vmem:[%s3200 + $0xc] sm:$0xf]
    %v3205 = vld [vmem:[%s3200 + $0x10] sm:$0xf]
    %v3206 = vld [vmem:[%s3200 + $0x14] sm:$0xf]
    %v3207 = vld [vmem:[%s3200 + $0x18] sm:$0xf]
    %v3208 = vld [vmem:[%s3200 + $0x1c] sm:$0xf]
    %v3217 = vunpack.c.l.b16 %v3201
    %v3218 = vunpack.c.l.b16 %v3202
    %v3219 = vunpack.c.l.b16 %v3203
    %v3220 = vunpack.c.l.b16 %v3204
    %v3221 = vunpack.c.l.b16 %v3205
    %v3222 = vunpack.c.l.b16 %v3206
    %v3223 = vunpack.c.l.b16 %v3207
    %v3224 = vunpack.c.l.b16 %v3208
    %v3225 = vpack.c.b16 %v3218, %v3217
    %v3226 = vpack.c.b16 %v3220, %v3219
    %v3227 = vpack.c.b16 %v3222, %v3221
    %v3228 = vpack.c.b16 %v3224, %v3223
    %v3234 = vsel %vm2484, %v2366, 0
    %v3237 = vsel %vm2484, %v2367, 0
    %v3240 = vsel %vm2484, %v2368, 0
    %v3243 = vsel %vm2484, %v2369, 0
    %v3246 = vsel %vm2484, %v2370, 0
    %v3249 = vsel %vm2484, %v2371, 0
    %v3252 = vsel %vm2484, %v2372, 0
    %3254 = vmatprep.subr.bf16.mxu0 0
    %3255 = vmatpush1.bf16.msra.mxu0 0
    %3256 = vmatprep.subr.bf16.mxu0 0
    %3257 = vmatpush1.bf16.msra.mxu0 0
    %3258 = vmatprep.subr.bf16.mxu0 0
    %3259 = vmatpush1.bf16.msra.mxu0 0
    %3260 = vmatprep.subr.bf16.mxu0 0
    %3261 = vmatpush1.bf16.msra.mxu0 0
    %3262 = vmatprep.subr.bf16.mxu0 0
    %3263 = vmatpush1.bf16.msra.mxu0 %v3228
    %3264 = vmatprep.subr.bf16.mxu0 0
    %3265 = vmatpush1.bf16.msra.mxu0 %v3227
    %3266 = vmatprep.subr.bf16.mxu0 0
    %3267 = vmatpush1.bf16.msra.mxu0 %v3226
    %3268 = vmatprep.subr.bf16.mxu0 0
    %3269 = vmatpush1.bf16.msra.mxu0 %v3225
    %3270 = vmatprep.subr.bf16.mxu0 0
    %3271 = vmatpush2.bf16.msra.mxu0 0
    %3272 = vmatprep.subr.bf16.mxu0 0
    %3273 = vmatpush2.bf16.msra.mxu0 0
    %3274 = vmatprep.subr.bf16.mxu0 0
    %3275 = vmatpush2.bf16.msra.mxu0 0
    %3276 = vmatprep.subr.bf16.mxu0 0
    %3277 = vmatpush2.bf16.msra.mxu0 0
    %3278 = vmatprep.subr.bf16.mxu0 0
    %3279 = vmatpush2.bf16.msra.mxu0 0
    %3280 = vmatprep.subr.bf16.mxu0 0
    %3281 = vmatpush2.bf16.msra.mxu0 0
    %3282 = vmatprep.subr.bf16.mxu0 0
    %3283 = vmatpush2.bf16.msra.mxu0 0
    %3284 = vmatprep.subr.bf16.mxu0 0
    %3285 = vmatpush2.bf16.msra.mxu0 0
    %3286 = vmatprep.mubr.bf16.mxu0 0
    %3287 = vmatmul.mubr.bf16.gmra.mxu0 %v3234
    %v3288 = vpop.f32.mrf.mxu0
    %v3289 = vadd.f32 0.0, %v3288
    %v3290 = vpop.f32.mrf.mxu0
    %v3291 = vpop.f32.mrf.mxu0
    %v3292 = vadd.f32 0.0, %v3291
    %v3293 = vpop.f32.mrf.mxu0
    %3294 = vmatprep.mubr.bf16.mxu0 0
    %3295 = vmatmul.mubr.bf16.gmra.mxu0 %v3237
    %v3296 = vpop.f32.mrf.mxu0
    %v3297 = vadd.f32 0.0, %v3296
    %v3298 = vpop.f32.mrf.mxu0
    %v3299 = vpop.f32.mrf.mxu0
    %v3300 = vadd.f32 0.0, %v3299
    %v3301 = vpop.f32.mrf.mxu0
    %3302 = vmatprep.mubr.bf16.mxu0 0
    %3303 = vmatmul.mubr.bf16.gmra.mxu0 %v3240
    %v3304 = vpop.f32.mrf.mxu0
    %v3305 = vadd.f32 0.0, %v3304
    %v3306 = vpop.f32.mrf.mxu0
    %v3307 = vpop.f32.mrf.mxu0
    %v3308 = vadd.f32 0.0, %v3307
    %v3309 = vpop.f32.mrf.mxu0
    %3310 = vmatprep.mubr.bf16.mxu0 0
    %3311 = vmatmul.mubr.bf16.gmra.mxu0 %v3243
    %v3312 = vpop.f32.mrf.mxu0
    %v3313 = vadd.f32 0.0, %v3312
    %v3314 = vpop.f32.mrf.mxu0
    %v3315 = vpop.f32.mrf.mxu0
    %v3316 = vadd.f32 0.0, %v3315
    %v3317 = vpop.f32.mrf.mxu0
    %3318 = vmatprep.mubr.bf16.mxu0 0
    %3319 = vmatmul.mubr.bf16.gmra.mxu0 %v3246
    %v3320 = vpop.f32.mrf.mxu0
    %v3321 = vadd.f32 0.0, %v3320
    %v3322 = vpop.f32.mrf.mxu0
    %v3323 = vpop.f32.mrf.mxu0
    %v3324 = vadd.f32 0.0, %v3323
    %v3325 = vpop.f32.mrf.mxu0
    %3326 = vmatprep.mubr.bf16.mxu0 0
    %3327 = vmatmul.mubr.bf16.gmra.mxu0 %v3249
    %v3328 = vpop.f32.mrf.mxu0
    %v3329 = vadd.f32 0.0, %v3328
    %v3330 = vpop.f32.mrf.mxu0
    %v3331 = vpop.f32.mrf.mxu0
    %v3332 = vadd.f32 0.0, %v3331
    %v3333 = vpop.f32.mrf.mxu0
    %3334 = vmatprep.mubr.bf16.mxu0 0
    %3335 = vmatmul.mubr.bf16.gmra.mxu0 %v3252
    %v3336 = vpop.f32.mrf.mxu0
    %v3337 = vadd.f32 0.0, %v3336
    %v3338 = vpop.f32.mrf.mxu0
    %v3339 = vpop.f32.mrf.mxu0
    %v3340 = vadd.f32 0.0, %v3339
    %v3341 = vpop.f32.mrf.mxu0
    %3342 = vdwg.mxu0
    %v3343 = vadd.f32 %v3186, %v3289
    %v3344 = vadd.f32 %v3187, %v3292
    %v3345 = vadd.f32 %v3188, %v3297
    %v3346 = vadd.f32 %v3189, %v3300
    %v3347 = vadd.f32 %v3190, %v3305
    %v3348 = vadd.f32 %v3191, %v3308
    %v3349 = vadd.f32 %v3192, %v3313
    %v3350 = vadd.f32 %v3193, %v3316
    %v3351 = vadd.f32 %v3194, %v3321
    %v3352 = vadd.f32 %v3195, %v3324
    %v3353 = vadd.f32 %v3196, %v3329
    %v3354 = vadd.f32 %v3197, %v3332
    %v3355 = vadd.f32 %v3198, %v3337
    %v3356 = vadd.f32 %v3199, %v3340
    %s3357 = scalar_lea.vmem %s2, 192
    %v3358 = vld [vmem:[%s3357] sm:$0xf]
    %v3359 = vld [vmem:[%s3357 + $0x4] sm:$0xf]
    %v3360 = vld [vmem:[%s3357 + $0x8] sm:$0xf]
    %v3361 = vld [vmem:[%s3357 + $0xc] sm:$0xf]
    %v3362 = vld [vmem:[%s3357 + $0x10] sm:$0xf]
    %v3363 = vld [vmem:[%s3357 + $0x14] sm:$0xf]
    %v3364 = vld [vmem:[%s3357 + $0x18] sm:$0xf]
    %v3365 = vld [vmem:[%s3357 + $0x1c] sm:$0xf]
    %v3374 = vunpack.c.l.b16 %v3358
    %v3375 = vunpack.c.l.b16 %v3359
    %v3376 = vunpack.c.l.b16 %v3360
    %v3377 = vunpack.c.l.b16 %v3361
    %v3378 = vunpack.c.l.b16 %v3362
    %v3379 = vunpack.c.l.b16 %v3363
    %v3380 = vunpack.c.l.b16 %v3364
    %v3381 = vunpack.c.l.b16 %v3365
    %v3382 = vpack.c.b16 %v3375, %v3374
    %v3383 = vpack.c.b16 %v3377, %v3376
    %v3384 = vpack.c.b16 %v3379, %v3378
    %v3385 = vpack.c.b16 %v3381, %v3380
    %v3391 = vsel %vm2484, %v2373, 0
    %v3394 = vsel %vm2484, %v2374, 0
    %v3397 = vsel %vm2484, %v2375, 0
    %v3400 = vsel %vm2484, %v2376, 0
    %v3403 = vsel %vm2484, %v2377, 0
    %v3406 = vsel %vm2484, %v2378, 0
    %v3409 = vsel %vm2484, %v2379, 0
    %3411 = vmatprep.subr.bf16.mxu0 0
    %3412 = vmatpush1.bf16.msra.mxu0 0
    %3413 = vmatprep.subr.bf16.mxu0 0
    %3414 = vmatpush1.bf16.msra.mxu0 0
    %3415 = vmatprep.subr.bf16.mxu0 0
    %3416 = vmatpush1.bf16.msra.mxu0 0
    %3417 = vmatprep.subr.bf16.mxu0 0
    %3418 = vmatpush1.bf16.msra.mxu0 0
    %3419 = vmatprep.subr.bf16.mxu0 0
    %3420 = vmatpush1.bf16.msra.mxu0 %v3385
    %3421 = vmatprep.subr.bf16.mxu0 0
    %3422 = vmatpush1.bf16.msra.mxu0 %v3384
    %3423 = vmatprep.subr.bf16.mxu0 0
    %3424 = vmatpush1.bf16.msra.mxu0 %v3383
    %3425 = vmatprep.subr.bf16.mxu0 0
    %3426 = vmatpush1.bf16.msra.mxu0 %v3382
    %3427 = vmatprep.subr.bf16.mxu0 0
    %3428 = vmatpush2.bf16.msra.mxu0 0
    %3429 = vmatprep.subr.bf16.mxu0 0
    %3430 = vmatpush2.bf16.msra.mxu0 0
    %3431 = vmatprep.subr.bf16.mxu0 0
    %3432 = vmatpush2.bf16.msra.mxu0 0
    %3433 = vmatprep.subr.bf16.mxu0 0
    %3434 = vmatpush2.bf16.msra.mxu0 0
    %3435 = vmatprep.subr.bf16.mxu0 0
    %3436 = vmatpush2.bf16.msra.mxu0 0
    %3437 = vmatprep.subr.bf16.mxu0 0
    %3438 = vmatpush2.bf16.msra.mxu0 0
    %3439 = vmatprep.subr.bf16.mxu0 0
    %3440 = vmatpush2.bf16.msra.mxu0 0
    %3441 = vmatprep.subr.bf16.mxu0 0
    %3442 = vmatpush2.bf16.msra.mxu0 0
    %3443 = vmatprep.mubr.bf16.mxu0 0
    %3444 = vmatmul.mubr.bf16.gmra.mxu0 %v3391
    %v3445 = vpop.f32.mrf.mxu0
    %v3446 = vadd.f32 0.0, %v3445
    %v3447 = vpop.f32.mrf.mxu0
    %v3448 = vpop.f32.mrf.mxu0
    %v3449 = vadd.f32 0.0, %v3448
    %v3450 = vpop.f32.mrf.mxu0
    %3451 = vmatprep.mubr.bf16.mxu0 0
    %3452 = vmatmul.mubr.bf16.gmra.mxu0 %v3394
    %v3453 = vpop.f32.mrf.mxu0
    %v3454 = vadd.f32 0.0, %v3453
    %v3455 = vpop.f32.mrf.mxu0
    %v3456 = vpop.f32.mrf.mxu0
    %v3457 = vadd.f32 0.0, %v3456
    %v3458 = vpop.f32.mrf.mxu0
    %3459 = vmatprep.mubr.bf16.mxu0 0
    %3460 = vmatmul.mubr.bf16.gmra.mxu0 %v3397
    %v3461 = vpop.f32.mrf.mxu0
    %v3462 = vadd.f32 0.0, %v3461
    %v3463 = vpop.f32.mrf.mxu0
    %v3464 = vpop.f32.mrf.mxu0
    %v3465 = vadd.f32 0.0, %v3464
    %v3466 = vpop.f32.mrf.mxu0
    %3467 = vmatprep.mubr.bf16.mxu0 0
    %3468 = vmatmul.mubr.bf16.gmra.mxu0 %v3400
    %v3469 = vpop.f32.mrf.mxu0
    %v3470 = vadd.f32 0.0, %v3469
    %v3471 = vpop.f32.mrf.mxu0
    %v3472 = vpop.f32.mrf.mxu0
    %v3473 = vadd.f32 0.0, %v3472
    %v3474 = vpop.f32.mrf.mxu0
    %3475 = vmatprep.mubr.bf16.mxu0 0
    %3476 = vmatmul.mubr.bf16.gmra.mxu0 %v3403
    %v3477 = vpop.f32.mrf.mxu0
    %v3478 = vadd.f32 0.0, %v3477
    %v3479 = vpop.f32.mrf.mxu0
    %v3480 = vpop.f32.mrf.mxu0
    %v3481 = vadd.f32 0.0, %v3480
    %v3482 = vpop.f32.mrf.mxu0
    %3483 = vmatprep.mubr.bf16.mxu0 0
    %3484 = vmatmul.mubr.bf16.gmra.mxu0 %v3406
    %v3485 = vpop.f32.mrf.mxu0
    %v3486 = vadd.f32 0.0, %v3485
    %v3487 = vpop.f32.mrf.mxu0
    %v3488 = vpop.f32.mrf.mxu0
    %v3489 = vadd.f32 0.0, %v3488
    %v3490 = vpop.f32.mrf.mxu0
    %3491 = vmatprep.mubr.bf16.mxu0 0
    %3492 = vmatmul.mubr.bf16.gmra.mxu0 %v3409
    %v3493 = vpop.f32.mrf.mxu0
    %v3494 = vadd.f32 0.0, %v3493
    %v3495 = vpop.f32.mrf.mxu0
    %v3496 = vpop.f32.mrf.mxu0
    %v3497 = vadd.f32 0.0, %v3496
    %v3498 = vpop.f32.mrf.mxu0
    %3499 = vdwg.mxu0
    %v3500 = vadd.f32 %v3343, %v3446
    %v3501 = vadd.f32 %v3344, %v3449
    %v3502 = vadd.f32 %v3345, %v3454
    %v3503 = vadd.f32 %v3346, %v3457
    %v3504 = vadd.f32 %v3347, %v3462
    %v3505 = vadd.f32 %v3348, %v3465
    %v3506 = vadd.f32 %v3349, %v3470
    %v3507 = vadd.f32 %v3350, %v3473
    %v3508 = vadd.f32 %v3351, %v3478
    %v3509 = vadd.f32 %v3352, %v3481
    %v3510 = vadd.f32 %v3353, %v3486
    %v3511 = vadd.f32 %v3354, %v3489
    %v3512 = vadd.f32 %v3355, %v3494
    %v3513 = vadd.f32 %v3356, %v3497
    %s3514 = scalar_lea.vmem %s2, 224
    %v3515 = vld [vmem:[%s3514] sm:$0xf]
    %v3516 = vld [vmem:[%s3514 + $0x4] sm:$0xf]
    %v3517 = vld [vmem:[%s3514 + $0x8] sm:$0xf]
    %v3518 = vld [vmem:[%s3514 + $0xc] sm:$0xf]
    %v3519 = vld [vmem:[%s3514 + $0x10] sm:$0xf]
    %v3520 = vld [vmem:[%s3514 + $0x14] sm:$0xf]
    %v3521 = vld [vmem:[%s3514 + $0x18] sm:$0xf]
    %v3522 = vld [vmem:[%s3514 + $0x1c] sm:$0xf]
    %v3531 = vunpack.c.l.b16 %v3515
    %v3532 = vunpack.c.l.b16 %v3516
    %v3533 = vunpack.c.l.b16 %v3517
    %v3534 = vunpack.c.l.b16 %v3518
    %v3535 = vunpack.c.l.b16 %v3519
    %v3536 = vunpack.c.l.b16 %v3520
    %v3537 = vunpack.c.l.b16 %v3521
    %v3538 = vunpack.c.l.b16 %v3522
    %v3539 = vpack.c.b16 %v3532, %v3531
    %v3540 = vpack.c.b16 %v3534, %v3533
    %v3541 = vpack.c.b16 %v3536, %v3535
    %v3542 = vpack.c.b16 %v3538, %v3537
    %v3548 = vsel %vm2484, %v2380, 0
    %v3551 = vsel %vm2484, %v2381, 0
    %v3554 = vsel %vm2484, %v2382, 0
    %v3557 = vsel %vm2484, %v2383, 0
    %v3560 = vsel %vm2484, %v2384, 0
    %v3563 = vsel %vm2484, %v2385, 0
    %v3566 = vsel %vm2484, %v2386, 0
    %3568 = vmatprep.subr.bf16.mxu0 0
    %3569 = vmatpush1.bf16.msra.mxu0 0
    %3570 = vmatprep.subr.bf16.mxu0 0
    %3571 = vmatpush1.bf16.msra.mxu0 0
    %3572 = vmatprep.subr.bf16.mxu0 0
    %3573 = vmatpush1.bf16.msra.mxu0 0
    %3574 = vmatprep.subr.bf16.mxu0 0
    %3575 = vmatpush1.bf16.msra.mxu0 0
    %3576 = vmatprep.subr.bf16.mxu0 0
    %3577 = vmatpush1.bf16.msra.mxu0 %v3542
    %3578 = vmatprep.subr.bf16.mxu0 0
    %3579 = vmatpush1.bf16.msra.mxu0 %v3541
    %3580 = vmatprep.subr.bf16.mxu0 0
    %3581 = vmatpush1.bf16.msra.mxu0 %v3540
    %3582 = vmatprep.subr.bf16.mxu0 0
    %3583 = vmatpush1.bf16.msra.mxu0 %v3539
    %3584 = vmatprep.subr.bf16.mxu0 0
    %3585 = vmatpush2.bf16.msra.mxu0 0
    %3586 = vmatprep.subr.bf16.mxu0 0
    %3587 = vmatpush2.bf16.msra.mxu0 0
    %3588 = vmatprep.subr.bf16.mxu0 0
    %3589 = vmatpush2.bf16.msra.mxu0 0
    %3590 = vmatprep.subr.bf16.mxu0 0
    %3591 = vmatpush2.bf16.msra.mxu0 0
    %3592 = vmatprep.subr.bf16.mxu0 0
    %3593 = vmatpush2.bf16.msra.mxu0 0
    %3594 = vmatprep.subr.bf16.mxu0 0
    %3595 = vmatpush2.bf16.msra.mxu0 0
    %3596 = vmatprep.subr.bf16.mxu0 0
    %3597 = vmatpush2.bf16.msra.mxu0 0
    %3598 = vmatprep.subr.bf16.mxu0 0
    %3599 = vmatpush2.bf16.msra.mxu0 0
    %3600 = vmatprep.mubr.bf16.mxu0 0
    %3601 = vmatmul.mubr.bf16.gmra.mxu0 %v3548
    %v3602 = vpop.f32.mrf.mxu0
    %v3603 = vadd.f32 0.0, %v3602
    %v3604 = vpop.f32.mrf.mxu0
    %v3605 = vpop.f32.mrf.mxu0
    %v3606 = vadd.f32 0.0, %v3605
    %v3607 = vpop.f32.mrf.mxu0
    %3608 = vmatprep.mubr.bf16.mxu0 0
    %3609 = vmatmul.mubr.bf16.gmra.mxu0 %v3551
    %v3610 = vpop.f32.mrf.mxu0
    %v3611 = vadd.f32 0.0, %v3610
    %v3612 = vpop.f32.mrf.mxu0
    %v3613 = vpop.f32.mrf.mxu0
    %v3614 = vadd.f32 0.0, %v3613
    %v3615 = vpop.f32.mrf.mxu0
    %3616 = vmatprep.mubr.bf16.mxu0 0
    %3617 = vmatmul.mubr.bf16.gmra.mxu0 %v3554
    %v3618 = vpop.f32.mrf.mxu0
    %v3619 = vadd.f32 0.0, %v3618
    %v3620 = vpop.f32.mrf.mxu0
    %v3621 = vpop.f32.mrf.mxu0
    %v3622 = vadd.f32 0.0, %v3621
    %v3623 = vpop.f32.mrf.mxu0
    %3624 = vmatprep.mubr.bf16.mxu0 0
    %3625 = vmatmul.mubr.bf16.gmra.mxu0 %v3557
    %v3626 = vpop.f32.mrf.mxu0
    %v3627 = vadd.f32 0.0, %v3626
    %v3628 = vpop.f32.mrf.mxu0
    %v3629 = vpop.f32.mrf.mxu0
    %v3630 = vadd.f32 0.0, %v3629
    %v3631 = vpop.f32.mrf.mxu0
    %3632 = vmatprep.mubr.bf16.mxu0 0
    %3633 = vmatmul.mubr.bf16.gmra.mxu0 %v3560
    %v3634 = vpop.f32.mrf.mxu0
    %v3635 = vadd.f32 0.0, %v3634
    %v3636 = vpop.f32.mrf.mxu0
    %v3637 = vpop.f32.mrf.mxu0
    %v3638 = vadd.f32 0.0, %v3637
    %v3639 = vpop.f32.mrf.mxu0
    %3640 = vmatprep.mubr.bf16.mxu0 0
    %3641 = vmatmul.mubr.bf16.gmra.mxu0 %v3563
    %v3642 = vpop.f32.mrf.mxu0
    %v3643 = vadd.f32 0.0, %v3642
    %v3644 = vpop.f32.mrf.mxu0
    %v3645 = vpop.f32.mrf.mxu0
    %v3646 = vadd.f32 0.0, %v3645
    %v3647 = vpop.f32.mrf.mxu0
    %3648 = vmatprep.mubr.bf16.mxu0 0
    %3649 = vmatmul.mubr.bf16.gmra.mxu0 %v3566
    %v3650 = vpop.f32.mrf.mxu0
    %v3651 = vadd.f32 0.0, %v3650
    %v3652 = vpop.f32.mrf.mxu0
    %v3653 = vpop.f32.mrf.mxu0
    %v3654 = vadd.f32 0.0, %v3653
    %v3655 = vpop.f32.mrf.mxu0
    %3656 = vdwg.mxu0
    %v3657 = vadd.f32 %v3500, %v3603
    %v3658 = vadd.f32 %v3501, %v3606
    %v3659 = vadd.f32 %v3502, %v3611
    %v3660 = vadd.f32 %v3503, %v3614
    %v3661 = vadd.f32 %v3504, %v3619
    %v3662 = vadd.f32 %v3505, %v3622
    %v3663 = vadd.f32 %v3506, %v3627
    %v3664 = vadd.f32 %v3507, %v3630
    %v3665 = vadd.f32 %v3508, %v3635
    %v3666 = vadd.f32 %v3509, %v3638
    %v3667 = vadd.f32 %v3510, %v3643
    %v3668 = vadd.f32 %v3511, %v3646
    %v3669 = vadd.f32 %v3512, %v3651
    %v3670 = vadd.f32 %v3513, %v3654
    %s3671 = scalar_lea.vmem %s2, 256
    %v3672 = vld [vmem:[%s3671] sm:$0xf]
    %v3673 = vld [vmem:[%s3671 + $0x4] sm:$0xf]
    %v3674 = vld [vmem:[%s3671 + $0x8] sm:$0xf]
    %v3675 = vld [vmem:[%s3671 + $0xc] sm:$0xf]
    %v3676 = vld [vmem:[%s3671 + $0x10] sm:$0xf]
    %v3677 = vld [vmem:[%s3671 + $0x14] sm:$0xf]
    %v3678 = vld [vmem:[%s3671 + $0x18] sm:$0xf]
    %v3679 = vld [vmem:[%s3671 + $0x1c] sm:$0xf]
    %v3688 = vunpack.c.l.b16 %v3672
    %v3689 = vunpack.c.l.b16 %v3673
    %v3690 = vunpack.c.l.b16 %v3674
    %v3691 = vunpack.c.l.b16 %v3675
    %v3692 = vunpack.c.l.b16 %v3676
    %v3693 = vunpack.c.l.b16 %v3677
    %v3694 = vunpack.c.l.b16 %v3678
    %v3695 = vunpack.c.l.b16 %v3679
    %v3696 = vpack.c.b16 %v3689, %v3688
    %v3697 = vpack.c.b16 %v3691, %v3690
    %v3698 = vpack.c.b16 %v3693, %v3692
    %v3699 = vpack.c.b16 %v3695, %v3694
    %v3705 = vsel %vm2484, %v2387, 0
    %v3708 = vsel %vm2484, %v2388, 0
    %v3711 = vsel %vm2484, %v2389, 0
    %v3714 = vsel %vm2484, %v2390, 0
    %v3717 = vsel %vm2484, %v2391, 0
    %v3720 = vsel %vm2484, %v2392, 0
    %v3723 = vsel %vm2484, %v2393, 0
    %3725 = vmatprep.subr.bf16.mxu0 0
    %3726 = vmatpush1.bf16.msra.mxu0 0
    %3727 = vmatprep.subr.bf16.mxu0 0
    %3728 = vmatpush1.bf16.msra.mxu0 0
    %3729 = vmatprep.subr.bf16.mxu0 0
    %3730 = vmatpush1.bf16.msra.mxu0 0
    %3731 = vmatprep.subr.bf16.mxu0 0
    %3732 = vmatpush1.bf16.msra.mxu0 0
    %3733 = vmatprep.subr.bf16.mxu0 0
    %3734 = vmatpush1.bf16.msra.mxu0 %v3699
    %3735 = vmatprep.subr.bf16.mxu0 0
    %3736 = vmatpush1.bf16.msra.mxu0 %v3698
    %3737 = vmatprep.subr.bf16.mxu0 0
    %3738 = vmatpush1.bf16.msra.mxu0 %v3697
    %3739 = vmatprep.subr.bf16.mxu0 0
    %3740 = vmatpush1.bf16.msra.mxu0 %v3696
    %3741 = vmatprep.subr.bf16.mxu0 0
    %3742 = vmatpush2.bf16.msra.mxu0 0
    %3743 = vmatprep.subr.bf16.mxu0 0
    %3744 = vmatpush2.bf16.msra.mxu0 0
    %3745 = vmatprep.subr.bf16.mxu0 0
    %3746 = vmatpush2.bf16.msra.mxu0 0
    %3747 = vmatprep.subr.bf16.mxu0 0
    %3748 = vmatpush2.bf16.msra.mxu0 0
    %3749 = vmatprep.subr.bf16.mxu0 0
    %3750 = vmatpush2.bf16.msra.mxu0 0
    %3751 = vmatprep.subr.bf16.mxu0 0
    %3752 = vmatpush2.bf16.msra.mxu0 0
    %3753 = vmatprep.subr.bf16.mxu0 0
    %3754 = vmatpush2.bf16.msra.mxu0 0
    %3755 = vmatprep.subr.bf16.mxu0 0
    %3756 = vmatpush2.bf16.msra.mxu0 0
    %3757 = vmatprep.mubr.bf16.mxu0 0
    %3758 = vmatmul.mubr.bf16.gmra.mxu0 %v3705
    %v3759 = vpop.f32.mrf.mxu0
    %v3760 = vadd.f32 0.0, %v3759
    %v3761 = vpop.f32.mrf.mxu0
    %v3762 = vpop.f32.mrf.mxu0
    %v3763 = vadd.f32 0.0, %v3762
    %v3764 = vpop.f32.mrf.mxu0
    %3765 = vmatprep.mubr.bf16.mxu0 0
    %3766 = vmatmul.mubr.bf16.gmra.mxu0 %v3708
    %v3767 = vpop.f32.mrf.mxu0
    %v3768 = vadd.f32 0.0, %v3767
    %v3769 = vpop.f32.mrf.mxu0
    %v3770 = vpop.f32.mrf.mxu0
    %v3771 = vadd.f32 0.0, %v3770
    %v3772 = vpop.f32.mrf.mxu0
    %3773 = vmatprep.mubr.bf16.mxu0 0
    %3774 = vmatmul.mubr.bf16.gmra.mxu0 %v3711
    %v3775 = vpop.f32.mrf.mxu0
    %v3776 = vadd.f32 0.0, %v3775
    %v3777 = vpop.f32.mrf.mxu0
    %v3778 = vpop.f32.mrf.mxu0
    %v3779 = vadd.f32 0.0, %v3778
    %v3780 = vpop.f32.mrf.mxu0
    %3781 = vmatprep.mubr.bf16.mxu0 0
    %3782 = vmatmul.mubr.bf16.gmra.mxu0 %v3714
    %v3783 = vpop.f32.mrf.mxu0
    %v3784 = vadd.f32 0.0, %v3783
    %v3785 = vpop.f32.mrf.mxu0
    %v3786 = vpop.f32.mrf.mxu0
    %v3787 = vadd.f32 0.0, %v3786
    %v3788 = vpop.f32.mrf.mxu0
    %3789 = vmatprep.mubr.bf16.mxu0 0
    %3790 = vmatmul.mubr.bf16.gmra.mxu0 %v3717
    %v3791 = vpop.f32.mrf.mxu0
    %v3792 = vadd.f32 0.0, %v3791
    %v3793 = vpop.f32.mrf.mxu0
    %v3794 = vpop.f32.mrf.mxu0
    %v3795 = vadd.f32 0.0, %v3794
    %v3796 = vpop.f32.mrf.mxu0
    %3797 = vmatprep.mubr.bf16.mxu0 0
    %3798 = vmatmul.mubr.bf16.gmra.mxu0 %v3720
    %v3799 = vpop.f32.mrf.mxu0
    %v3800 = vadd.f32 0.0, %v3799
    %v3801 = vpop.f32.mrf.mxu0
    %v3802 = vpop.f32.mrf.mxu0
    %v3803 = vadd.f32 0.0, %v3802
    %v3804 = vpop.f32.mrf.mxu0
    %3805 = vmatprep.mubr.bf16.mxu0 0
    %3806 = vmatmul.mubr.bf16.gmra.mxu0 %v3723
    %v3807 = vpop.f32.mrf.mxu0
    %v3808 = vadd.f32 0.0, %v3807
    %v3809 = vpop.f32.mrf.mxu0
    %v3810 = vpop.f32.mrf.mxu0
    %v3811 = vadd.f32 0.0, %v3810
    %v3812 = vpop.f32.mrf.mxu0
    %3813 = vdwg.mxu0
    %v3814 = vadd.f32 %v3657, %v3760
    %v3815 = vadd.f32 %v3658, %v3763
    %v3816 = vadd.f32 %v3659, %v3768
    %v3817 = vadd.f32 %v3660, %v3771
    %v3818 = vadd.f32 %v3661, %v3776
    %v3819 = vadd.f32 %v3662, %v3779
    %v3820 = vadd.f32 %v3663, %v3784
    %v3821 = vadd.f32 %v3664, %v3787
    %v3822 = vadd.f32 %v3665, %v3792
    %v3823 = vadd.f32 %v3666, %v3795
    %v3824 = vadd.f32 %v3667, %v3800
    %v3825 = vadd.f32 %v3668, %v3803
    %v3826 = vadd.f32 %v3669, %v3808
    %v3827 = vadd.f32 %v3670, %v3811
    %s3828 = scalar_lea.vmem %s2, 288
    %v3829 = vld [vmem:[%s3828] sm:$0xf]
    %v3830 = vld [vmem:[%s3828 + $0x4] sm:$0xf]
    %v3831 = vld [vmem:[%s3828 + $0x8] sm:$0xf]
    %v3832 = vld [vmem:[%s3828 + $0xc] sm:$0xf]
    %v3833 = vld [vmem:[%s3828 + $0x10] sm:$0xf]
    %v3834 = vld [vmem:[%s3828 + $0x14] sm:$0xf]
    %v3835 = vld [vmem:[%s3828 + $0x18] sm:$0xf]
    %v3836 = vld [vmem:[%s3828 + $0x1c] sm:$0xf]
    %v3845 = vunpack.c.l.b16 %v3829
    %v3846 = vunpack.c.l.b16 %v3830
    %v3847 = vunpack.c.l.b16 %v3831
    %v3848 = vunpack.c.l.b16 %v3832
    %v3849 = vunpack.c.l.b16 %v3833
    %v3850 = vunpack.c.l.b16 %v3834
    %v3851 = vunpack.c.l.b16 %v3835
    %v3852 = vunpack.c.l.b16 %v3836
    %v3853 = vpack.c.b16 %v3846, %v3845
    %v3854 = vpack.c.b16 %v3848, %v3847
    %v3855 = vpack.c.b16 %v3850, %v3849
    %v3856 = vpack.c.b16 %v3852, %v3851
    %v3862 = vsel %vm2484, %v2394, 0
    %v3865 = vsel %vm2484, %v2395, 0
    %v3868 = vsel %vm2484, %v2396, 0
    %v3871 = vsel %vm2484, %v2397, 0
    %v3874 = vsel %vm2484, %v2398, 0
    %v3877 = vsel %vm2484, %v2399, 0
    %v3880 = vsel %vm2484, %v2400, 0
    %3882 = vmatprep.subr.bf16.mxu0 0
    %3883 = vmatpush1.bf16.msra.mxu0 0
    %3884 = vmatprep.subr.bf16.mxu0 0
    %3885 = vmatpush1.bf16.msra.mxu0 0
    %3886 = vmatprep.subr.bf16.mxu0 0
    %3887 = vmatpush1.bf16.msra.mxu0 0
    %3888 = vmatprep.subr.bf16.mxu0 0
    %3889 = vmatpush1.bf16.msra.mxu0 0
    %3890 = vmatprep.subr.bf16.mxu0 0
    %3891 = vmatpush1.bf16.msra.mxu0 %v3856
    %3892 = vmatprep.subr.bf16.mxu0 0
    %3893 = vmatpush1.bf16.msra.mxu0 %v3855
    %3894 = vmatprep.subr.bf16.mxu0 0
    %3895 = vmatpush1.bf16.msra.mxu0 %v3854
    %3896 = vmatprep.subr.bf16.mxu0 0
    %3897 = vmatpush1.bf16.msra.mxu0 %v3853
    %3898 = vmatprep.subr.bf16.mxu0 0
    %3899 = vmatpush2.bf16.msra.mxu0 0
    %3900 = vmatprep.subr.bf16.mxu0 0
    %3901 = vmatpush2.bf16.msra.mxu0 0
    %3902 = vmatprep.subr.bf16.mxu0 0
    %3903 = vmatpush2.bf16.msra.mxu0 0
    %3904 = vmatprep.subr.bf16.mxu0 0
    %3905 = vmatpush2.bf16.msra.mxu0 0
    %3906 = vmatprep.subr.bf16.mxu0 0
    %3907 = vmatpush2.bf16.msra.mxu0 0
    %3908 = vmatprep.subr.bf16.mxu0 0
    %3909 = vmatpush2.bf16.msra.mxu0 0
    %3910 = vmatprep.subr.bf16.mxu0 0
    %3911 = vmatpush2.bf16.msra.mxu0 0
    %3912 = vmatprep.subr.bf16.mxu0 0
    %3913 = vmatpush2.bf16.msra.mxu0 0
    %3914 = vmatprep.mubr.bf16.mxu0 0
    %3915 = vmatmul.mubr.bf16.gmra.mxu0 %v3862
    %v3916 = vpop.f32.mrf.mxu0
    %v3917 = vadd.f32 0.0, %v3916
    %v3918 = vpop.f32.mrf.mxu0
    %v3919 = vpop.f32.mrf.mxu0
    %v3920 = vadd.f32 0.0, %v3919
    %v3921 = vpop.f32.mrf.mxu0
    %3922 = vmatprep.mubr.bf16.mxu0 0
    %3923 = vmatmul.mubr.bf16.gmra.mxu0 %v3865
    %v3924 = vpop.f32.mrf.mxu0
    %v3925 = vadd.f32 0.0, %v3924
    %v3926 = vpop.f32.mrf.mxu0
    %v3927 = vpop.f32.mrf.mxu0
    %v3928 = vadd.f32 0.0, %v3927
    %v3929 = vpop.f32.mrf.mxu0
    %3930 = vmatprep.mubr.bf16.mxu0 0
    %3931 = vmatmul.mubr.bf16.gmra.mxu0 %v3868
    %v3932 = vpop.f32.mrf.mxu0
    %v3933 = vadd.f32 0.0, %v3932
    %v3934 = vpop.f32.mrf.mxu0
    %v3935 = vpop.f32.mrf.mxu0
    %v3936 = vadd.f32 0.0, %v3935
    %v3937 = vpop.f32.mrf.mxu0
    %3938 = vmatprep.mubr.bf16.mxu0 0
    %3939 = vmatmul.mubr.bf16.gmra.mxu0 %v3871
    %v3940 = vpop.f32.mrf.mxu0
    %v3941 = vadd.f32 0.0, %v3940
    %v3942 = vpop.f32.mrf.mxu0
    %v3943 = vpop.f32.mrf.mxu0
    %v3944 = vadd.f32 0.0, %v3943
    %v3945 = vpop.f32.mrf.mxu0
    %3946 = vmatprep.mubr.bf16.mxu0 0
    %3947 = vmatmul.mubr.bf16.gmra.mxu0 %v3874
    %v3948 = vpop.f32.mrf.mxu0
    %v3949 = vadd.f32 0.0, %v3948
    %v3950 = vpop.f32.mrf.mxu0
    %v3951 = vpop.f32.mrf.mxu0
    %v3952 = vadd.f32 0.0, %v3951
    %v3953 = vpop.f32.mrf.mxu0
    %3954 = vmatprep.mubr.bf16.mxu0 0
    %3955 = vmatmul.mubr.bf16.gmra.mxu0 %v3877
    %v3956 = vpop.f32.mrf.mxu0
    %v3957 = vadd.f32 0.0, %v3956
    %v3958 = vpop.f32.mrf.mxu0
    %v3959 = vpop.f32.mrf.mxu0
    %v3960 = vadd.f32 0.0, %v3959
    %v3961 = vpop.f32.mrf.mxu0
    %3962 = vmatprep.mubr.bf16.mxu0 0
    %3963 = vmatmul.mubr.bf16.gmra.mxu0 %v3880
    %v3964 = vpop.f32.mrf.mxu0
    %v3965 = vadd.f32 0.0, %v3964
    %v3966 = vpop.f32.mrf.mxu0
    %v3967 = vpop.f32.mrf.mxu0
    %v3968 = vadd.f32 0.0, %v3967
    %v3969 = vpop.f32.mrf.mxu0
    %3970 = vdwg.mxu0
    %v3971 = vadd.f32 %v3814, %v3917
    %v3972 = vadd.f32 %v3815, %v3920
    %v3973 = vadd.f32 %v3816, %v3925
    %v3974 = vadd.f32 %v3817, %v3928
    %v3975 = vadd.f32 %v3818, %v3933
    %v3976 = vadd.f32 %v3819, %v3936
    %v3977 = vadd.f32 %v3820, %v3941
    %v3978 = vadd.f32 %v3821, %v3944
    %v3979 = vadd.f32 %v3822, %v3949
    %v3980 = vadd.f32 %v3823, %v3952
    %v3981 = vadd.f32 %v3824, %v3957
    %v3982 = vadd.f32 %v3825, %v3960
    %v3983 = vadd.f32 %v3826, %v3965
    %v3984 = vadd.f32 %v3827, %v3968
    %s3985 = scalar_lea.vmem %s2, 320
    %v3986 = vld [vmem:[%s3985] sm:$0xf]
    %v3987 = vld [vmem:[%s3985 + $0x4] sm:$0xf]
    %v3988 = vld [vmem:[%s3985 + $0x8] sm:$0xf]
    %v3989 = vld [vmem:[%s3985 + $0xc] sm:$0xf]
    %v3990 = vld [vmem:[%s3985 + $0x10] sm:$0xf]
    %v3991 = vld [vmem:[%s3985 + $0x14] sm:$0xf]
    %v3992 = vld [vmem:[%s3985 + $0x18] sm:$0xf]
    %v3993 = vld [vmem:[%s3985 + $0x1c] sm:$0xf]
    %v4002 = vunpack.c.l.b16 %v3986
    %v4003 = vunpack.c.l.b16 %v3987
    %v4004 = vunpack.c.l.b16 %v3988
    %v4005 = vunpack.c.l.b16 %v3989
    %v4006 = vunpack.c.l.b16 %v3990
    %v4007 = vunpack.c.l.b16 %v3991
    %v4008 = vunpack.c.l.b16 %v3992
    %v4009 = vunpack.c.l.b16 %v3993
    %v4010 = vpack.c.b16 %v4003, %v4002
    %v4011 = vpack.c.b16 %v4005, %v4004
    %v4012 = vpack.c.b16 %v4007, %v4006
    %v4013 = vpack.c.b16 %v4009, %v4008
    %v4019 = vsel %vm2484, %v2401, 0
    %v4022 = vsel %vm2484, %v2402, 0
    %v4025 = vsel %vm2484, %v2403, 0
    %v4028 = vsel %vm2484, %v2404, 0
    %v4031 = vsel %vm2484, %v2405, 0
    %v4034 = vsel %vm2484, %v2406, 0
    %v4037 = vsel %vm2484, %v2407, 0
    %4039 = vmatprep.subr.bf16.mxu0 0
    %4040 = vmatpush1.bf16.msra.mxu0 0
    %4041 = vmatprep.subr.bf16.mxu0 0
    %4042 = vmatpush1.bf16.msra.mxu0 0
    %4043 = vmatprep.subr.bf16.mxu0 0
    %4044 = vmatpush1.bf16.msra.mxu0 0
    %4045 = vmatprep.subr.bf16.mxu0 0
    %4046 = vmatpush1.bf16.msra.mxu0 0
    %4047 = vmatprep.subr.bf16.mxu0 0
    %4048 = vmatpush1.bf16.msra.mxu0 %v4013
    %4049 = vmatprep.subr.bf16.mxu0 0
    %4050 = vmatpush1.bf16.msra.mxu0 %v4012
    %4051 = vmatprep.subr.bf16.mxu0 0
    %4052 = vmatpush1.bf16.msra.mxu0 %v4011
    %4053 = vmatprep.subr.bf16.mxu0 0
    %4054 = vmatpush1.bf16.msra.mxu0 %v4010
    %4055 = vmatprep.subr.bf16.mxu0 0
    %4056 = vmatpush2.bf16.msra.mxu0 0
    %4057 = vmatprep.subr.bf16.mxu0 0
    %4058 = vmatpush2.bf16.msra.mxu0 0
    %4059 = vmatprep.subr.bf16.mxu0 0
    %4060 = vmatpush2.bf16.msra.mxu0 0
    %4061 = vmatprep.subr.bf16.mxu0 0
    %4062 = vmatpush2.bf16.msra.mxu0 0
    %4063 = vmatprep.subr.bf16.mxu0 0
    %4064 = vmatpush2.bf16.msra.mxu0 0
    %4065 = vmatprep.subr.bf16.mxu0 0
    %4066 = vmatpush2.bf16.msra.mxu0 0
    %4067 = vmatprep.subr.bf16.mxu0 0
    %4068 = vmatpush2.bf16.msra.mxu0 0
    %4069 = vmatprep.subr.bf16.mxu0 0
    %4070 = vmatpush2.bf16.msra.mxu0 0
    %4071 = vmatprep.mubr.bf16.mxu0 0
    %4072 = vmatmul.mubr.bf16.gmra.mxu0 %v4019
    %v4073 = vpop.f32.mrf.mxu0
    %v4074 = vadd.f32 0.0, %v4073
    %v4075 = vpop.f32.mrf.mxu0
    %v4076 = vpop.f32.mrf.mxu0
    %v4077 = vadd.f32 0.0, %v4076
    %v4078 = vpop.f32.mrf.mxu0
    %4079 = vmatprep.mubr.bf16.mxu0 0
    %4080 = vmatmul.mubr.bf16.gmra.mxu0 %v4022
    %v4081 = vpop.f32.mrf.mxu0
    %v4082 = vadd.f32 0.0, %v4081
    %v4083 = vpop.f32.mrf.mxu0
    %v4084 = vpop.f32.mrf.mxu0
    %v4085 = vadd.f32 0.0, %v4084
    %v4086 = vpop.f32.mrf.mxu0
    %4087 = vmatprep.mubr.bf16.mxu0 0
    %4088 = vmatmul.mubr.bf16.gmra.mxu0 %v4025
    %v4089 = vpop.f32.mrf.mxu0
    %v4090 = vadd.f32 0.0, %v4089
    %v4091 = vpop.f32.mrf.mxu0
    %v4092 = vpop.f32.mrf.mxu0
    %v4093 = vadd.f32 0.0, %v4092
    %v4094 = vpop.f32.mrf.mxu0
    %4095 = vmatprep.mubr.bf16.mxu0 0
    %4096 = vmatmul.mubr.bf16.gmra.mxu0 %v4028
    %v4097 = vpop.f32.mrf.mxu0
    %v4098 = vadd.f32 0.0, %v4097
    %v4099 = vpop.f32.mrf.mxu0
    %v4100 = vpop.f32.mrf.mxu0
    %v4101 = vadd.f32 0.0, %v4100
    %v4102 = vpop.f32.mrf.mxu0
    %4103 = vmatprep.mubr.bf16.mxu0 0
    %4104 = vmatmul.mubr.bf16.gmra.mxu0 %v4031
    %v4105 = vpop.f32.mrf.mxu0
    %v4106 = vadd.f32 0.0, %v4105
    %v4107 = vpop.f32.mrf.mxu0
    %v4108 = vpop.f32.mrf.mxu0
    %v4109 = vadd.f32 0.0, %v4108
    %v4110 = vpop.f32.mrf.mxu0
    %4111 = vmatprep.mubr.bf16.mxu0 0
    %4112 = vmatmul.mubr.bf16.gmra.mxu0 %v4034
    %v4113 = vpop.f32.mrf.mxu0
    %v4114 = vadd.f32 0.0, %v4113
    %v4115 = vpop.f32.mrf.mxu0
    %v4116 = vpop.f32.mrf.mxu0
    %v4117 = vadd.f32 0.0, %v4116
    %v4118 = vpop.f32.mrf.mxu0
    %4119 = vmatprep.mubr.bf16.mxu0 0
    %4120 = vmatmul.mubr.bf16.gmra.mxu0 %v4037
    %v4121 = vpop.f32.mrf.mxu0
    %v4122 = vadd.f32 0.0, %v4121
    %v4123 = vpop.f32.mrf.mxu0
    %v4124 = vpop.f32.mrf.mxu0
    %v4125 = vadd.f32 0.0, %v4124
    %v4126 = vpop.f32.mrf.mxu0
    %4127 = vdwg.mxu0
    %v4128 = vadd.f32 %v3971, %v4074
    %v4129 = vadd.f32 %v3972, %v4077
    %v4130 = vadd.f32 %v3973, %v4082
    %v4131 = vadd.f32 %v3974, %v4085
    %v4132 = vadd.f32 %v3975, %v4090
    %v4133 = vadd.f32 %v3976, %v4093
    %v4134 = vadd.f32 %v3977, %v4098
    %v4135 = vadd.f32 %v3978, %v4101
    %v4136 = vadd.f32 %v3979, %v4106
    %v4137 = vadd.f32 %v3980, %v4109
    %v4138 = vadd.f32 %v3981, %v4114
    %v4139 = vadd.f32 %v3982, %v4117
    %v4140 = vadd.f32 %v3983, %v4122
    %v4141 = vadd.f32 %v3984, %v4125
    %s4142 = scalar_lea.vmem %s2, 352
    %v4143 = vld [vmem:[%s4142] sm:$0xf]
    %v4144 = vld [vmem:[%s4142 + $0x4] sm:$0xf]
    %v4145 = vld [vmem:[%s4142 + $0x8] sm:$0xf]
    %v4146 = vld [vmem:[%s4142 + $0xc] sm:$0xf]
    %v4147 = vld [vmem:[%s4142 + $0x10] sm:$0xf]
    %v4148 = vld [vmem:[%s4142 + $0x14] sm:$0xf]
    %v4149 = vld [vmem:[%s4142 + $0x18] sm:$0xf]
    %v4150 = vld [vmem:[%s4142 + $0x1c] sm:$0xf]
    %v4159 = vunpack.c.l.b16 %v4143
    %v4160 = vunpack.c.l.b16 %v4144
    %v4161 = vunpack.c.l.b16 %v4145
    %v4162 = vunpack.c.l.b16 %v4146
    %v4163 = vunpack.c.l.b16 %v4147
    %v4164 = vunpack.c.l.b16 %v4148
    %v4165 = vunpack.c.l.b16 %v4149
    %v4166 = vunpack.c.l.b16 %v4150
    %v4167 = vpack.c.b16 %v4160, %v4159
    %v4168 = vpack.c.b16 %v4162, %v4161
    %v4169 = vpack.c.b16 %v4164, %v4163
    %v4170 = vpack.c.b16 %v4166, %v4165
    %v4176 = vsel %vm2484, %v2408, 0
    %v4179 = vsel %vm2484, %v2409, 0
    %v4182 = vsel %vm2484, %v2410, 0
    %v4185 = vsel %vm2484, %v2411, 0
    %v4188 = vsel %vm2484, %v2412, 0
    %v4191 = vsel %vm2484, %v2413, 0
    %v4194 = vsel %vm2484, %v2414, 0
    %4196 = vmatprep.subr.bf16.mxu0 0
    %4197 = vmatpush1.bf16.msra.mxu0 0
    %4198 = vmatprep.subr.bf16.mxu0 0
    %4199 = vmatpush1.bf16.msra.mxu0 0
    %4200 = vmatprep.subr.bf16.mxu0 0
    %4201 = vmatpush1.bf16.msra.mxu0 0
    %4202 = vmatprep.subr.bf16.mxu0 0
    %4203 = vmatpush1.bf16.msra.mxu0 0
    %4204 = vmatprep.subr.bf16.mxu0 0
    %4205 = vmatpush1.bf16.msra.mxu0 %v4170
    %4206 = vmatprep.subr.bf16.mxu0 0
    %4207 = vmatpush1.bf16.msra.mxu0 %v4169
    %4208 = vmatprep.subr.bf16.mxu0 0
    %4209 = vmatpush1.bf16.msra.mxu0 %v4168
    %4210 = vmatprep.subr.bf16.mxu0 0
    %4211 = vmatpush1.bf16.msra.mxu0 %v4167
    %4212 = vmatprep.subr.bf16.mxu0 0
    %4213 = vmatpush2.bf16.msra.mxu0 0
    %4214 = vmatprep.subr.bf16.mxu0 0
    %4215 = vmatpush2.bf16.msra.mxu0 0
    %4216 = vmatprep.subr.bf16.mxu0 0
    %4217 = vmatpush2.bf16.msra.mxu0 0
    %4218 = vmatprep.subr.bf16.mxu0 0
    %4219 = vmatpush2.bf16.msra.mxu0 0
    %4220 = vmatprep.subr.bf16.mxu0 0
    %4221 = vmatpush2.bf16.msra.mxu0 0
    %4222 = vmatprep.subr.bf16.mxu0 0
    %4223 = vmatpush2.bf16.msra.mxu0 0
    %4224 = vmatprep.subr.bf16.mxu0 0
    %4225 = vmatpush2.bf16.msra.mxu0 0
    %4226 = vmatprep.subr.bf16.mxu0 0
    %4227 = vmatpush2.bf16.msra.mxu0 0
    %4228 = vmatprep.mubr.bf16.mxu0 0
    %4229 = vmatmul.mubr.bf16.gmra.mxu0 %v4176
    %v4230 = vpop.f32.mrf.mxu0
    %v4231 = vadd.f32 0.0, %v4230
    %v4232 = vpop.f32.mrf.mxu0
    %v4233 = vpop.f32.mrf.mxu0
    %v4234 = vadd.f32 0.0, %v4233
    %v4235 = vpop.f32.mrf.mxu0
    %4236 = vmatprep.mubr.bf16.mxu0 0
    %4237 = vmatmul.mubr.bf16.gmra.mxu0 %v4179
    %v4238 = vpop.f32.mrf.mxu0
    %v4239 = vadd.f32 0.0, %v4238
    %v4240 = vpop.f32.mrf.mxu0
    %v4241 = vpop.f32.mrf.mxu0
    %v4242 = vadd.f32 0.0, %v4241
    %v4243 = vpop.f32.mrf.mxu0
    %4244 = vmatprep.mubr.bf16.mxu0 0
    %4245 = vmatmul.mubr.bf16.gmra.mxu0 %v4182
    %v4246 = vpop.f32.mrf.mxu0
    %v4247 = vadd.f32 0.0, %v4246
    %v4248 = vpop.f32.mrf.mxu0
    %v4249 = vpop.f32.mrf.mxu0
    %v4250 = vadd.f32 0.0, %v4249
    %v4251 = vpop.f32.mrf.mxu0
    %4252 = vmatprep.mubr.bf16.mxu0 0
    %4253 = vmatmul.mubr.bf16.gmra.mxu0 %v4185
    %v4254 = vpop.f32.mrf.mxu0
    %v4255 = vadd.f32 0.0, %v4254
    %v4256 = vpop.f32.mrf.mxu0
    %v4257 = vpop.f32.mrf.mxu0
    %v4258 = vadd.f32 0.0, %v4257
    %v4259 = vpop.f32.mrf.mxu0
    %4260 = vmatprep.mubr.bf16.mxu0 0
    %4261 = vmatmul.mubr.bf16.gmra.mxu0 %v4188
    %v4262 = vpop.f32.mrf.mxu0
    %v4263 = vadd.f32 0.0, %v4262
    %v4264 = vpop.f32.mrf.mxu0
    %v4265 = vpop.f32.mrf.mxu0
    %v4266 = vadd.f32 0.0, %v4265
    %v4267 = vpop.f32.mrf.mxu0
    %4268 = vmatprep.mubr.bf16.mxu0 0
    %4269 = vmatmul.mubr.bf16.gmra.mxu0 %v4191
    %v4270 = vpop.f32.mrf.mxu0
    %v4271 = vadd.f32 0.0, %v4270
    %v4272 = vpop.f32.mrf.mxu0
    %v4273 = vpop.f32.mrf.mxu0
    %v4274 = vadd.f32 0.0, %v4273
    %v4275 = vpop.f32.mrf.mxu0
    %4276 = vmatprep.mubr.bf16.mxu0 0
    %4277 = vmatmul.mubr.bf16.gmra.mxu0 %v4194
    %v4278 = vpop.f32.mrf.mxu0
    %v4279 = vadd.f32 0.0, %v4278
    %v4280 = vpop.f32.mrf.mxu0
    %v4281 = vpop.f32.mrf.mxu0
    %v4282 = vadd.f32 0.0, %v4281
    %v4283 = vpop.f32.mrf.mxu0
    %4284 = vdwg.mxu0
    %v4285 = vadd.f32 %v4128, %v4231
    %v4286 = vadd.f32 %v4129, %v4234
    %v4287 = vadd.f32 %v4130, %v4239
    %v4288 = vadd.f32 %v4131, %v4242
    %v4289 = vadd.f32 %v4132, %v4247
    %v4290 = vadd.f32 %v4133, %v4250
    %v4291 = vadd.f32 %v4134, %v4255
    %v4292 = vadd.f32 %v4135, %v4258
    %v4293 = vadd.f32 %v4136, %v4263
    %v4294 = vadd.f32 %v4137, %v4266
    %v4295 = vadd.f32 %v4138, %v4271
    %v4296 = vadd.f32 %v4139, %v4274
    %v4297 = vadd.f32 %v4140, %v4279
    %v4298 = vadd.f32 %v4141, %v4282
    %s4299 = scalar_lea.vmem %s2, 384
    %v4300 = vld [vmem:[%s4299] sm:$0xf]
    %v4301 = vld [vmem:[%s4299 + $0x4] sm:$0xf]
    %v4302 = vld [vmem:[%s4299 + $0x8] sm:$0xf]
    %v4303 = vld [vmem:[%s4299 + $0xc] sm:$0xf]
    %v4304 = vld [vmem:[%s4299 + $0x10] sm:$0xf]
    %v4305 = vld [vmem:[%s4299 + $0x14] sm:$0xf]
    %v4306 = vld [vmem:[%s4299 + $0x18] sm:$0xf]
    %v4307 = vld [vmem:[%s4299 + $0x1c] sm:$0xf]
    %v4316 = vunpack.c.l.b16 %v4300
    %v4317 = vunpack.c.l.b16 %v4301
    %v4318 = vunpack.c.l.b16 %v4302
    %v4319 = vunpack.c.l.b16 %v4303
    %v4320 = vunpack.c.l.b16 %v4304
    %v4321 = vunpack.c.l.b16 %v4305
    %v4322 = vunpack.c.l.b16 %v4306
    %v4323 = vunpack.c.l.b16 %v4307
    %v4324 = vpack.c.b16 %v4317, %v4316
    %v4325 = vpack.c.b16 %v4319, %v4318
    %v4326 = vpack.c.b16 %v4321, %v4320
    %v4327 = vpack.c.b16 %v4323, %v4322
    %v4333 = vsel %vm2484, %v2415, 0
    %v4336 = vsel %vm2484, %v2416, 0
    %v4339 = vsel %vm2484, %v2417, 0
    %v4342 = vsel %vm2484, %v2418, 0
    %v4345 = vsel %vm2484, %v2419, 0
    %v4348 = vsel %vm2484, %v2420, 0
    %v4351 = vsel %vm2484, %v2421, 0
    %4353 = vmatprep.subr.bf16.mxu0 0
    %4354 = vmatpush1.bf16.msra.mxu0 0
    %4355 = vmatprep.subr.bf16.mxu0 0
    %4356 = vmatpush1.bf16.msra.mxu0 0
    %4357 = vmatprep.subr.bf16.mxu0 0
    %4358 = vmatpush1.bf16.msra.mxu0 0
    %4359 = vmatprep.subr.bf16.mxu0 0
    %4360 = vmatpush1.bf16.msra.mxu0 0
    %4361 = vmatprep.subr.bf16.mxu0 0
    %4362 = vmatpush1.bf16.msra.mxu0 %v4327
    %4363 = vmatprep.subr.bf16.mxu0 0
    %4364 = vmatpush1.bf16.msra.mxu0 %v4326
    %4365 = vmatprep.subr.bf16.mxu0 0
    %4366 = vmatpush1.bf16.msra.mxu0 %v4325
    %4367 = vmatprep.subr.bf16.mxu0 0
    %4368 = vmatpush1.bf16.msra.mxu0 %v4324
    %4369 = vmatprep.subr.bf16.mxu0 0
    %4370 = vmatpush2.bf16.msra.mxu0 0
    %4371 = vmatprep.subr.bf16.mxu0 0
    %4372 = vmatpush2.bf16.msra.mxu0 0
    %4373 = vmatprep.subr.bf16.mxu0 0
    %4374 = vmatpush2.bf16.msra.mxu0 0
    %4375 = vmatprep.subr.bf16.mxu0 0
    %4376 = vmatpush2.bf16.msra.mxu0 0
    %4377 = vmatprep.subr.bf16.mxu0 0
    %4378 = vmatpush2.bf16.msra.mxu0 0
    %4379 = vmatprep.subr.bf16.mxu0 0
    %4380 = vmatpush2.bf16.msra.mxu0 0
    %4381 = vmatprep.subr.bf16.mxu0 0
    %4382 = vmatpush2.bf16.msra.mxu0 0
    %4383 = vmatprep.subr.bf16.mxu0 0
    %4384 = vmatpush2.bf16.msra.mxu0 0
    %4385 = vmatprep.mubr.bf16.mxu0 0
    %4386 = vmatmul.mubr.bf16.gmra.mxu0 %v4333
    %v4387 = vpop.f32.mrf.mxu0
    %v4388 = vadd.f32 0.0, %v4387
    %v4389 = vpop.f32.mrf.mxu0
    %v4390 = vpop.f32.mrf.mxu0
    %v4391 = vadd.f32 0.0, %v4390
    %v4392 = vpop.f32.mrf.mxu0
    %4393 = vmatprep.mubr.bf16.mxu0 0
    %4394 = vmatmul.mubr.bf16.gmra.mxu0 %v4336
    %v4395 = vpop.f32.mrf.mxu0
    %v4396 = vadd.f32 0.0, %v4395
    %v4397 = vpop.f32.mrf.mxu0
    %v4398 = vpop.f32.mrf.mxu0
    %v4399 = vadd.f32 0.0, %v4398
    %v4400 = vpop.f32.mrf.mxu0
    %4401 = vmatprep.mubr.bf16.mxu0 0
    %4402 = vmatmul.mubr.bf16.gmra.mxu0 %v4339
    %v4403 = vpop.f32.mrf.mxu0
    %v4404 = vadd.f32 0.0, %v4403
    %v4405 = vpop.f32.mrf.mxu0
    %v4406 = vpop.f32.mrf.mxu0
    %v4407 = vadd.f32 0.0, %v4406
    %v4408 = vpop.f32.mrf.mxu0
    %4409 = vmatprep.mubr.bf16.mxu0 0
    %4410 = vmatmul.mubr.bf16.gmra.mxu0 %v4342
    %v4411 = vpop.f32.mrf.mxu0
    %v4412 = vadd.f32 0.0, %v4411
    %v4413 = vpop.f32.mrf.mxu0
    %v4414 = vpop.f32.mrf.mxu0
    %v4415 = vadd.f32 0.0, %v4414
    %v4416 = vpop.f32.mrf.mxu0
    %4417 = vmatprep.mubr.bf16.mxu0 0
    %4418 = vmatmul.mubr.bf16.gmra.mxu0 %v4345
    %v4419 = vpop.f32.mrf.mxu0
    %v4420 = vadd.f32 0.0, %v4419
    %v4421 = vpop.f32.mrf.mxu0
    %v4422 = vpop.f32.mrf.mxu0
    %v4423 = vadd.f32 0.0, %v4422
    %v4424 = vpop.f32.mrf.mxu0
    %4425 = vmatprep.mubr.bf16.mxu0 0
    %4426 = vmatmul.mubr.bf16.gmra.mxu0 %v4348
    %v4427 = vpop.f32.mrf.mxu0
    %v4428 = vadd.f32 0.0, %v4427
    %v4429 = vpop.f32.mrf.mxu0
    %v4430 = vpop.f32.mrf.mxu0
    %v4431 = vadd.f32 0.0, %v4430
    %v4432 = vpop.f32.mrf.mxu0
    %4433 = vmatprep.mubr.bf16.mxu0 0
    %4434 = vmatmul.mubr.bf16.gmra.mxu0 %v4351
    %v4435 = vpop.f32.mrf.mxu0
    %v4436 = vadd.f32 0.0, %v4435
    %v4437 = vpop.f32.mrf.mxu0
    %v4438 = vpop.f32.mrf.mxu0
    %v4439 = vadd.f32 0.0, %v4438
    %v4440 = vpop.f32.mrf.mxu0
    %4441 = vdwg.mxu0
    %v4442 = vadd.f32 %v4285, %v4388
    %v4443 = vadd.f32 %v4286, %v4391
    %v4444 = vadd.f32 %v4287, %v4396
    %v4445 = vadd.f32 %v4288, %v4399
    %v4446 = vadd.f32 %v4289, %v4404
    %v4447 = vadd.f32 %v4290, %v4407
    %v4448 = vadd.f32 %v4291, %v4412
    %v4449 = vadd.f32 %v4292, %v4415
    %v4450 = vadd.f32 %v4293, %v4420
    %v4451 = vadd.f32 %v4294, %v4423
    %v4452 = vadd.f32 %v4295, %v4428
    %v4453 = vadd.f32 %v4296, %v4431
    %v4454 = vadd.f32 %v4297, %v4436
    %v4455 = vadd.f32 %v4298, %v4439
    %s4456 = scalar_lea.vmem %s2, 416
    %v4457 = vld [vmem:[%s4456] sm:$0xf]
    %v4458 = vld [vmem:[%s4456 + $0x4] sm:$0xf]
    %v4459 = vld [vmem:[%s4456 + $0x8] sm:$0xf]
    %v4460 = vld [vmem:[%s4456 + $0xc] sm:$0xf]
    %v4461 = vld [vmem:[%s4456 + $0x10] sm:$0xf]
    %v4462 = vld [vmem:[%s4456 + $0x14] sm:$0xf]
    %v4463 = vld [vmem:[%s4456 + $0x18] sm:$0xf]
    %v4464 = vld [vmem:[%s4456 + $0x1c] sm:$0xf]
    %v4473 = vunpack.c.l.b16 %v4457
    %v4474 = vunpack.c.l.b16 %v4458
    %v4475 = vunpack.c.l.b16 %v4459
    %v4476 = vunpack.c.l.b16 %v4460
    %v4477 = vunpack.c.l.b16 %v4461
    %v4478 = vunpack.c.l.b16 %v4462
    %v4479 = vunpack.c.l.b16 %v4463
    %v4480 = vunpack.c.l.b16 %v4464
    %v4481 = vpack.c.b16 %v4474, %v4473
    %v4482 = vpack.c.b16 %v4476, %v4475
    %v4483 = vpack.c.b16 %v4478, %v4477
    %v4484 = vpack.c.b16 %v4480, %v4479
    %v4490 = vsel %vm2484, %v2422, 0
    %v4493 = vsel %vm2484, %v2423, 0
    %v4496 = vsel %vm2484, %v2424, 0
    %v4499 = vsel %vm2484, %v2425, 0
    %v4502 = vsel %vm2484, %v2426, 0
    %v4505 = vsel %vm2484, %v2427, 0
    %v4508 = vsel %vm2484, %v2428, 0
    %4510 = vmatprep.subr.bf16.mxu0 0
    %4511 = vmatpush1.bf16.msra.mxu0 0
    %4512 = vmatprep.subr.bf16.mxu0 0
    %4513 = vmatpush1.bf16.msra.mxu0 0
    %4514 = vmatprep.subr.bf16.mxu0 0
    %4515 = vmatpush1.bf16.msra.mxu0 0
    %4516 = vmatprep.subr.bf16.mxu0 0
    %4517 = vmatpush1.bf16.msra.mxu0 0
    %4518 = vmatprep.subr.bf16.mxu0 0
    %4519 = vmatpush1.bf16.msra.mxu0 %v4484
    %4520 = vmatprep.subr.bf16.mxu0 0
    %4521 = vmatpush1.bf16.msra.mxu0 %v4483
    %4522 = vmatprep.subr.bf16.mxu0 0
    %4523 = vmatpush1.bf16.msra.mxu0 %v4482
    %4524 = vmatprep.subr.bf16.mxu0 0
    %4525 = vmatpush1.bf16.msra.mxu0 %v4481
    %4526 = vmatprep.subr.bf16.mxu0 0
    %4527 = vmatpush2.bf16.msra.mxu0 0
    %4528 = vmatprep.subr.bf16.mxu0 0
    %4529 = vmatpush2.bf16.msra.mxu0 0
    %4530 = vmatprep.subr.bf16.mxu0 0
    %4531 = vmatpush2.bf16.msra.mxu0 0
    %4532 = vmatprep.subr.bf16.mxu0 0
    %4533 = vmatpush2.bf16.msra.mxu0 0
    %4534 = vmatprep.subr.bf16.mxu0 0
    %4535 = vmatpush2.bf16.msra.mxu0 0
    %4536 = vmatprep.subr.bf16.mxu0 0
    %4537 = vmatpush2.bf16.msra.mxu0 0
    %4538 = vmatprep.subr.bf16.mxu0 0
    %4539 = vmatpush2.bf16.msra.mxu0 0
    %4540 = vmatprep.subr.bf16.mxu0 0
    %4541 = vmatpush2.bf16.msra.mxu0 0
    %4542 = vmatprep.mubr.bf16.mxu0 0
    %4543 = vmatmul.mubr.bf16.gmra.mxu0 %v4490
    %v4544 = vpop.f32.mrf.mxu0
    %v4545 = vadd.f32 0.0, %v4544
    %v4546 = vpop.f32.mrf.mxu0
    %v4547 = vpop.f32.mrf.mxu0
    %v4548 = vadd.f32 0.0, %v4547
    %v4549 = vpop.f32.mrf.mxu0
    %4550 = vmatprep.mubr.bf16.mxu0 0
    %4551 = vmatmul.mubr.bf16.gmra.mxu0 %v4493
    %v4552 = vpop.f32.mrf.mxu0
    %v4553 = vadd.f32 0.0, %v4552
    %v4554 = vpop.f32.mrf.mxu0
    %v4555 = vpop.f32.mrf.mxu0
    %v4556 = vadd.f32 0.0, %v4555
    %v4557 = vpop.f32.mrf.mxu0
    %4558 = vmatprep.mubr.bf16.mxu0 0
    %4559 = vmatmul.mubr.bf16.gmra.mxu0 %v4496
    %v4560 = vpop.f32.mrf.mxu0
    %v4561 = vadd.f32 0.0, %v4560
    %v4562 = vpop.f32.mrf.mxu0
    %v4563 = vpop.f32.mrf.mxu0
    %v4564 = vadd.f32 0.0, %v4563
    %v4565 = vpop.f32.mrf.mxu0
    %4566 = vmatprep.mubr.bf16.mxu0 0
    %4567 = vmatmul.mubr.bf16.gmra.mxu0 %v4499
    %v4568 = vpop.f32.mrf.mxu0
    %v4569 = vadd.f32 0.0, %v4568
    %v4570 = vpop.f32.mrf.mxu0
    %v4571 = vpop.f32.mrf.mxu0
    %v4572 = vadd.f32 0.0, %v4571
    %v4573 = vpop.f32.mrf.mxu0
    %4574 = vmatprep.mubr.bf16.mxu0 0
    %4575 = vmatmul.mubr.bf16.gmra.mxu0 %v4502
    %v4576 = vpop.f32.mrf.mxu0
    %v4577 = vadd.f32 0.0, %v4576
    %v4578 = vpop.f32.mrf.mxu0
    %v4579 = vpop.f32.mrf.mxu0
    %v4580 = vadd.f32 0.0, %v4579
    %v4581 = vpop.f32.mrf.mxu0
    %4582 = vmatprep.mubr.bf16.mxu0 0
    %4583 = vmatmul.mubr.bf16.gmra.mxu0 %v4505
    %v4584 = vpop.f32.mrf.mxu0
    %v4585 = vadd.f32 0.0, %v4584
    %v4586 = vpop.f32.mrf.mxu0
    %v4587 = vpop.f32.mrf.mxu0
    %v4588 = vadd.f32 0.0, %v4587
    %v4589 = vpop.f32.mrf.mxu0
    %4590 = vmatprep.mubr.bf16.mxu0 0
    %4591 = vmatmul.mubr.bf16.gmra.mxu0 %v4508
    %v4592 = vpop.f32.mrf.mxu0
    %v4593 = vadd.f32 0.0, %v4592
    %v4594 = vpop.f32.mrf.mxu0
    %v4595 = vpop.f32.mrf.mxu0
    %v4596 = vadd.f32 0.0, %v4595
    %v4597 = vpop.f32.mrf.mxu0
    %4598 = vdwg.mxu0
    %v4599 = vadd.f32 %v4442, %v4545
    %v4600 = vadd.f32 %v4443, %v4548
    %v4601 = vadd.f32 %v4444, %v4553
    %v4602 = vadd.f32 %v4445, %v4556
    %v4603 = vadd.f32 %v4446, %v4561
    %v4604 = vadd.f32 %v4447, %v4564
    %v4605 = vadd.f32 %v4448, %v4569
    %v4606 = vadd.f32 %v4449, %v4572
    %v4607 = vadd.f32 %v4450, %v4577
    %v4608 = vadd.f32 %v4451, %v4580
    %v4609 = vadd.f32 %v4452, %v4585
    %v4610 = vadd.f32 %v4453, %v4588
    %v4611 = vadd.f32 %v4454, %v4593
    %v4612 = vadd.f32 %v4455, %v4596
    %s4613 = scalar_lea.vmem %s2, 448
    %v4614 = vld [vmem:[%s4613] sm:$0xf]
    %v4615 = vld [vmem:[%s4613 + $0x4] sm:$0xf]
    %v4616 = vld [vmem:[%s4613 + $0x8] sm:$0xf]
    %v4617 = vld [vmem:[%s4613 + $0xc] sm:$0xf]
    %v4618 = vld [vmem:[%s4613 + $0x10] sm:$0xf]
    %v4619 = vld [vmem:[%s4613 + $0x14] sm:$0xf]
    %v4620 = vld [vmem:[%s4613 + $0x18] sm:$0xf]
    %v4621 = vld [vmem:[%s4613 + $0x1c] sm:$0xf]
    %v4630 = vunpack.c.l.b16 %v4614
    %v4631 = vunpack.c.l.b16 %v4615
    %v4632 = vunpack.c.l.b16 %v4616
    %v4633 = vunpack.c.l.b16 %v4617
    %v4634 = vunpack.c.l.b16 %v4618
    %v4635 = vunpack.c.l.b16 %v4619
    %v4636 = vunpack.c.l.b16 %v4620
    %v4637 = vunpack.c.l.b16 %v4621
    %v4638 = vpack.c.b16 %v4631, %v4630
    %v4639 = vpack.c.b16 %v4633, %v4632
    %v4640 = vpack.c.b16 %v4635, %v4634
    %v4641 = vpack.c.b16 %v4637, %v4636
    %v4647 = vsel %vm2484, %v2429, 0
    %v4650 = vsel %vm2484, %v2430, 0
    %v4653 = vsel %vm2484, %v2431, 0
    %v4656 = vsel %vm2484, %v2432, 0
    %v4659 = vsel %vm2484, %v2433, 0
    %v4662 = vsel %vm2484, %v2434, 0
    %v4665 = vsel %vm2484, %v2435, 0
    %4667 = vmatprep.subr.bf16.mxu0 0
    %4668 = vmatpush1.bf16.msra.mxu0 0
    %4669 = vmatprep.subr.bf16.mxu0 0
    %4670 = vmatpush1.bf16.msra.mxu0 0
    %4671 = vmatprep.subr.bf16.mxu0 0
    %4672 = vmatpush1.bf16.msra.mxu0 0
    %4673 = vmatprep.subr.bf16.mxu0 0
    %4674 = vmatpush1.bf16.msra.mxu0 0
    %4675 = vmatprep.subr.bf16.mxu0 0
    %4676 = vmatpush1.bf16.msra.mxu0 %v4641
    %4677 = vmatprep.subr.bf16.mxu0 0
    %4678 = vmatpush1.bf16.msra.mxu0 %v4640
    %4679 = vmatprep.subr.bf16.mxu0 0
    %4680 = vmatpush1.bf16.msra.mxu0 %v4639
    %4681 = vmatprep.subr.bf16.mxu0 0
    %4682 = vmatpush1.bf16.msra.mxu0 %v4638
    %4683 = vmatprep.subr.bf16.mxu0 0
    %4684 = vmatpush2.bf16.msra.mxu0 0
    %4685 = vmatprep.subr.bf16.mxu0 0
    %4686 = vmatpush2.bf16.msra.mxu0 0
    %4687 = vmatprep.subr.bf16.mxu0 0
    %4688 = vmatpush2.bf16.msra.mxu0 0
    %4689 = vmatprep.subr.bf16.mxu0 0
    %4690 = vmatpush2.bf16.msra.mxu0 0
    %4691 = vmatprep.subr.bf16.mxu0 0
    %4692 = vmatpush2.bf16.msra.mxu0 0
    %4693 = vmatprep.subr.bf16.mxu0 0
    %4694 = vmatpush2.bf16.msra.mxu0 0
    %4695 = vmatprep.subr.bf16.mxu0 0
    %4696 = vmatpush2.bf16.msra.mxu0 0
    %4697 = vmatprep.subr.bf16.mxu0 0
    %4698 = vmatpush2.bf16.msra.mxu0 0
    %4699 = vmatprep.mubr.bf16.mxu0 0
    %4700 = vmatmul.mubr.bf16.gmra.mxu0 %v4647
    %v4701 = vpop.f32.mrf.mxu0
    %v4702 = vadd.f32 0.0, %v4701
    %v4703 = vpop.f32.mrf.mxu0
    %v4704 = vpop.f32.mrf.mxu0
    %v4705 = vadd.f32 0.0, %v4704
    %v4706 = vpop.f32.mrf.mxu0
    %4707 = vmatprep.mubr.bf16.mxu0 0
    %4708 = vmatmul.mubr.bf16.gmra.mxu0 %v4650
    %v4709 = vpop.f32.mrf.mxu0
    %v4710 = vadd.f32 0.0, %v4709
    %v4711 = vpop.f32.mrf.mxu0
    %v4712 = vpop.f32.mrf.mxu0
    %v4713 = vadd.f32 0.0, %v4712
    %v4714 = vpop.f32.mrf.mxu0
    %4715 = vmatprep.mubr.bf16.mxu0 0
    %4716 = vmatmul.mubr.bf16.gmra.mxu0 %v4653
    %v4717 = vpop.f32.mrf.mxu0
    %v4718 = vadd.f32 0.0, %v4717
    %v4719 = vpop.f32.mrf.mxu0
    %v4720 = vpop.f32.mrf.mxu0
    %v4721 = vadd.f32 0.0, %v4720
    %v4722 = vpop.f32.mrf.mxu0
    %4723 = vmatprep.mubr.bf16.mxu0 0
    %4724 = vmatmul.mubr.bf16.gmra.mxu0 %v4656
    %v4725 = vpop.f32.mrf.mxu0
    %v4726 = vadd.f32 0.0, %v4725
    %v4727 = vpop.f32.mrf.mxu0
    %v4728 = vpop.f32.mrf.mxu0
    %v4729 = vadd.f32 0.0, %v4728
    %v4730 = vpop.f32.mrf.mxu0
    %4731 = vmatprep.mubr.bf16.mxu0 0
    %4732 = vmatmul.mubr.bf16.gmra.mxu0 %v4659
    %v4733 = vpop.f32.mrf.mxu0
    %v4734 = vadd.f32 0.0, %v4733
    %v4735 = vpop.f32.mrf.mxu0
    %v4736 = vpop.f32.mrf.mxu0
    %v4737 = vadd.f32 0.0, %v4736
    %v4738 = vpop.f32.mrf.mxu0
    %4739 = vmatprep.mubr.bf16.mxu0 0
    %4740 = vmatmul.mubr.bf16.gmra.mxu0 %v4662
    %v4741 = vpop.f32.mrf.mxu0
    %v4742 = vadd.f32 0.0, %v4741
    %v4743 = vpop.f32.mrf.mxu0
    %v4744 = vpop.f32.mrf.mxu0
    %v4745 = vadd.f32 0.0, %v4744
    %v4746 = vpop.f32.mrf.mxu0
    %4747 = vmatprep.mubr.bf16.mxu0 0
    %4748 = vmatmul.mubr.bf16.gmra.mxu0 %v4665
    %v4749 = vpop.f32.mrf.mxu0
    %v4750 = vadd.f32 0.0, %v4749
    %v4751 = vpop.f32.mrf.mxu0
    %v4752 = vpop.f32.mrf.mxu0
    %v4753 = vadd.f32 0.0, %v4752
    %v4754 = vpop.f32.mrf.mxu0
    %4755 = vdwg.mxu0
    %v4756 = vadd.f32 %v4599, %v4702
    %v4757 = vadd.f32 %v4600, %v4705
    %v4758 = vadd.f32 %v4601, %v4710
    %v4759 = vadd.f32 %v4602, %v4713
    %v4760 = vadd.f32 %v4603, %v4718
    %v4761 = vadd.f32 %v4604, %v4721
    %v4762 = vadd.f32 %v4605, %v4726
    %v4763 = vadd.f32 %v4606, %v4729
    %v4764 = vadd.f32 %v4607, %v4734
    %v4765 = vadd.f32 %v4608, %v4737
    %v4766 = vadd.f32 %v4609, %v4742
    %v4767 = vadd.f32 %v4610, %v4745
    %v4768 = vadd.f32 %v4611, %v4750
    %v4769 = vadd.f32 %v4612, %v4753
    %s4770 = scalar_lea.vmem %s2, 480
    %v4771 = vld [vmem:[%s4770] sm:$0xf]
    %v4772 = vld [vmem:[%s4770 + $0x4] sm:$0xf]
    %v4773 = vld [vmem:[%s4770 + $0x8] sm:$0xf]
    %v4774 = vld [vmem:[%s4770 + $0xc] sm:$0xf]
    %v4775 = vld [vmem:[%s4770 + $0x10] sm:$0xf]
    %v4776 = vld [vmem:[%s4770 + $0x14] sm:$0xf]
    %v4777 = vld [vmem:[%s4770 + $0x18] sm:$0xf]
    %v4778 = vld [vmem:[%s4770 + $0x1c] sm:$0xf]
    %v4787 = vunpack.c.l.b16 %v4771
    %v4788 = vunpack.c.l.b16 %v4772
    %v4789 = vunpack.c.l.b16 %v4773
    %v4790 = vunpack.c.l.b16 %v4774
    %v4791 = vunpack.c.l.b16 %v4775
    %v4792 = vunpack.c.l.b16 %v4776
    %v4793 = vunpack.c.l.b16 %v4777
    %v4794 = vunpack.c.l.b16 %v4778
    %v4795 = vpack.c.b16 %v4788, %v4787
    %v4796 = vpack.c.b16 %v4790, %v4789
    %v4797 = vpack.c.b16 %v4792, %v4791
    %v4798 = vpack.c.b16 %v4794, %v4793
    %v4804 = vsel %vm2484, %v2436, 0
    %v4807 = vsel %vm2484, %v2437, 0
    %v4810 = vsel %vm2484, %v2438, 0
    %v4813 = vsel %vm2484, %v2439, 0
    %v4816 = vsel %vm2484, %v2440, 0
    %v4819 = vsel %vm2484, %v2441, 0
    %v4822 = vsel %vm2484, %v2442, 0
    %4824 = vmatprep.subr.bf16.mxu0 0
    %4825 = vmatpush1.bf16.msra.mxu0 0
    %4826 = vmatprep.subr.bf16.mxu0 0
    %4827 = vmatpush1.bf16.msra.mxu0 0
    %4828 = vmatprep.subr.bf16.mxu0 0
    %4829 = vmatpush1.bf16.msra.mxu0 0
    %4830 = vmatprep.subr.bf16.mxu0 0
    %4831 = vmatpush1.bf16.msra.mxu0 0
    %4832 = vmatprep.subr.bf16.mxu0 0
    %4833 = vmatpush1.bf16.msra.mxu0 %v4798
    %4834 = vmatprep.subr.bf16.mxu0 0
    %4835 = vmatpush1.bf16.msra.mxu0 %v4797
    %4836 = vmatprep.subr.bf16.mxu0 0
    %4837 = vmatpush1.bf16.msra.mxu0 %v4796
    %4838 = vmatprep.subr.bf16.mxu0 0
    %4839 = vmatpush1.bf16.msra.mxu0 %v4795
    %4840 = vmatprep.subr.bf16.mxu0 0
    %4841 = vmatpush2.bf16.msra.mxu0 0
    %4842 = vmatprep.subr.bf16.mxu0 0
    %4843 = vmatpush2.bf16.msra.mxu0 0
    %4844 = vmatprep.subr.bf16.mxu0 0
    %4845 = vmatpush2.bf16.msra.mxu0 0
    %4846 = vmatprep.subr.bf16.mxu0 0
    %4847 = vmatpush2.bf16.msra.mxu0 0
    %4848 = vmatprep.subr.bf16.mxu0 0
    %4849 = vmatpush2.bf16.msra.mxu0 0
    %4850 = vmatprep.subr.bf16.mxu0 0
    %4851 = vmatpush2.bf16.msra.mxu0 0
    %4852 = vmatprep.subr.bf16.mxu0 0
    %4853 = vmatpush2.bf16.msra.mxu0 0
    %4854 = vmatprep.subr.bf16.mxu0 0
    %4855 = vmatpush2.bf16.msra.mxu0 0
    %4856 = vmatprep.mubr.bf16.mxu0 0
    %4857 = vmatmul.mubr.bf16.gmra.mxu0 %v4804
    %v4858 = vpop.f32.mrf.mxu0
    %v4859 = vadd.f32 0.0, %v4858
    %v4860 = vpop.f32.mrf.mxu0
    %v4861 = vpop.f32.mrf.mxu0
    %v4862 = vadd.f32 0.0, %v4861
    %v4863 = vpop.f32.mrf.mxu0
    %4864 = vmatprep.mubr.bf16.mxu0 0
    %4865 = vmatmul.mubr.bf16.gmra.mxu0 %v4807
    %v4866 = vpop.f32.mrf.mxu0
    %v4867 = vadd.f32 0.0, %v4866
    %v4868 = vpop.f32.mrf.mxu0
    %v4869 = vpop.f32.mrf.mxu0
    %v4870 = vadd.f32 0.0, %v4869
    %v4871 = vpop.f32.mrf.mxu0
    %4872 = vmatprep.mubr.bf16.mxu0 0
    %4873 = vmatmul.mubr.bf16.gmra.mxu0 %v4810
    %v4874 = vpop.f32.mrf.mxu0
    %v4875 = vadd.f32 0.0, %v4874
    %v4876 = vpop.f32.mrf.mxu0
    %v4877 = vpop.f32.mrf.mxu0
    %v4878 = vadd.f32 0.0, %v4877
    %v4879 = vpop.f32.mrf.mxu0
    %4880 = vmatprep.mubr.bf16.mxu0 0
    %4881 = vmatmul.mubr.bf16.gmra.mxu0 %v4813
    %v4882 = vpop.f32.mrf.mxu0
    %v4883 = vadd.f32 0.0, %v4882
    %v4884 = vpop.f32.mrf.mxu0
    %v4885 = vpop.f32.mrf.mxu0
    %v4886 = vadd.f32 0.0, %v4885
    %v4887 = vpop.f32.mrf.mxu0
    %4888 = vmatprep.mubr.bf16.mxu0 0
    %4889 = vmatmul.mubr.bf16.gmra.mxu0 %v4816
    %v4890 = vpop.f32.mrf.mxu0
    %v4891 = vadd.f32 0.0, %v4890
    %v4892 = vpop.f32.mrf.mxu0
    %v4893 = vpop.f32.mrf.mxu0
    %v4894 = vadd.f32 0.0, %v4893
    %v4895 = vpop.f32.mrf.mxu0
    %4896 = vmatprep.mubr.bf16.mxu0 0
    %4897 = vmatmul.mubr.bf16.gmra.mxu0 %v4819
    %v4898 = vpop.f32.mrf.mxu0
    %v4899 = vadd.f32 0.0, %v4898
    %v4900 = vpop.f32.mrf.mxu0
    %v4901 = vpop.f32.mrf.mxu0
    %v4902 = vadd.f32 0.0, %v4901
    %v4903 = vpop.f32.mrf.mxu0
    %4904 = vmatprep.mubr.bf16.mxu0 0
    %4905 = vmatmul.mubr.bf16.gmra.mxu0 %v4822
    %v4906 = vpop.f32.mrf.mxu0
    %v4907 = vadd.f32 0.0, %v4906
    %v4908 = vpop.f32.mrf.mxu0
    %v4909 = vpop.f32.mrf.mxu0
    %v4910 = vadd.f32 0.0, %v4909
    %v4911 = vpop.f32.mrf.mxu0
    %4912 = vdwg.mxu0
    %v4913 = vadd.f32 %v4756, %v4859
    %v4914 = vadd.f32 %v4757, %v4862
    %v4915 = vadd.f32 %v4758, %v4867
    %v4916 = vadd.f32 %v4759, %v4870
    %v4917 = vadd.f32 %v4760, %v4875
    %v4918 = vadd.f32 %v4761, %v4878
    %v4919 = vadd.f32 %v4762, %v4883
    %v4920 = vadd.f32 %v4763, %v4886
    %v4921 = vadd.f32 %v4764, %v4891
    %v4922 = vadd.f32 %v4765, %v4894
    %v4923 = vadd.f32 %v4766, %v4899
    %v4924 = vadd.f32 %v4767, %v4902
    %v4925 = vadd.f32 %v4768, %v4907
    %v4926 = vadd.f32 %v4769, %v4910
    %v4927 = vld [vmem:[%s3] sm:$0x1]
    %v4929 = vlaneseq
    %v4930 = vshrl.u32 %v4929, 7
    %v4931 = vsub.s32 0, %v4930
    %v4932 = vrot.slane %v4927, %v4931
    %v4934 = vadd.f32 %v4913, %v4932
    %v4935 = vadd.f32 %v4914, %v4932
    %v4936 = vadd.f32 %v4915, %v4932
    %v4937 = vadd.f32 %v4916, %v4932
    %v4938 = vadd.f32 %v4917, %v4932
    %v4939 = vadd.f32 %v4918, %v4932
    %v4940 = vadd.f32 %v4919, %v4932
    %v4941 = vadd.f32 %v4920, %v4932
    %v4942 = vadd.f32 %v4921, %v4932
    %v4943 = vadd.f32 %v4922, %v4932
    %v4944 = vadd.f32 %v4923, %v4932
    %v4945 = vadd.f32 %v4924, %v4932
    %v4946 = vadd.f32 %v4925, %v4932
    %v4947 = vadd.f32 %v4926, %v4932
    %v4948 = vmax.f32 %v4934, 0.0
    %v4949 = vmax.f32 %v4935, 0.0
    %v4950 = vmax.f32 %v4936, 0.0
    %v4951 = vmax.f32 %v4937, 0.0
    %v4952 = vmax.f32 %v4938, 0.0
    %v4953 = vmax.f32 %v4939, 0.0
    %v4954 = vmax.f32 %v4940, 0.0
    %v4955 = vmax.f32 %v4941, 0.0
    %v4956 = vmax.f32 %v4942, 0.0
    %v4957 = vmax.f32 %v4943, 0.0
    %v4958 = vmax.f32 %v4944, 0.0
    %v4959 = vmax.f32 %v4945, 0.0
    %v4960 = vmax.f32 %v4946, 0.0
    %v4961 = vmax.f32 %v4947, 0.0
    %v4962 = vld [vmem:[%s4] sm:$0xff]
    %v4963 = vld [vmem:[%s4 + $0x8] sm:$0xff]
    %v4964 = vld [vmem:[%s4 + $0x10] sm:$0xff]
    %v4965 = vld [vmem:[%s4 + $0x18] sm:$0xff]
    %v4966 = vld [vmem:[%s4 + $0x20] sm:$0xff]
    %v4967 = vld [vmem:[%s4 + $0x28] sm:$0xff]
    %v4968 = vld [vmem:[%s4 + $0x30] sm:$0xff]
    %s4969 = sld [smem:[#allocation2]]
    %v4970 = vmul.f32 %v4948, %v4962
    %v4971 = vmul.f32 %v4949, %v4963
    %v4972 = vmul.f32 %v4950, %v4964
    %v4973 = vmul.f32 %v4951, %v4965
    %v4974 = vmul.f32 %v4952, %v4966
    %v4975 = vmul.f32 %v4953, %v4967
    %v4976 = vmul.f32 %v4954, %v4968
    %v4977 = vadd.f32 %v4970, %v4971
    %v4978 = vadd.f32 %v4977, %v4972
    %v4979 = vadd.f32 %v4978, %v4973
    %v4980 = vadd.f32 %v4979, %v4974
    %v4981 = vadd.f32 %v4980, %v4975
    %v4982 = vadd.f32 %v4981, %v4976
    %4983 = vadd.xlane.f32.xlu0 %v4982
    %v4984 = vpop.xlane.xlu0 %4983
    %v4985 = vrot.slane %v4984, 4
    %v4986 = vadd.f32 %v4984, %v4985
    %v4987 = vrot.slane %v4986, 2
    %v4988 = vadd.f32 %v4986, %v4987
    %v4989 = vrot.slane %v4988, 1
    %v4990 = vadd.f32 %v4988, %v4989
    %s4991 = vtos %v4990
    %s4992 = sadd.f32 %s4991, %s4969
    %s4993 = scalar_lea.smem [#allocation5], 0
    %4994 = sst [smem:[%s4993]] %s4992
    %v4995 = vmul.f32 %v4955, %v4962
    %v4996 = vmul.f32 %v4956, %v4963
    %v4997 = vmul.f32 %v4957, %v4964
    %v4998 = vmul.f32 %v4958, %v4965
    %v4999 = vmul.f32 %v4959, %v4966
    %v5000 = vmul.f32 %v4960, %v4967
    %v5001 = vmul.f32 %v4961, %v4968
    %v5002 = vadd.f32 %v4995, %v4996
    %v5003 = vadd.f32 %v5002, %v4997
    %v5004 = vadd.f32 %v5003, %v4998
    %v5005 = vadd.f32 %v5004, %v4999
    %v5006 = vadd.f32 %v5005, %v5000
    %v5007 = vadd.f32 %v5006, %v5001
    %5008 = vadd.xlane.f32.xlu0 %v5007
    %v5009 = vpop.xlane.xlu0 %5008
    %v5010 = vrot.slane %v5009, 4
    %v5011 = vadd.f32 %v5009, %v5010
    %v5012 = vrot.slane %v5011, 2
    %v5013 = vadd.f32 %v5011, %v5012
    %v5014 = vrot.slane %v5013, 1
    %v5015 = vadd.f32 %v5013, %v5014
    %s5016 = vtos %v5015
    %s5017 = sadd.f32 %s5016, %s4969
    %s5018 = scalar_lea.smem [#allocation5], 128
    %5019 = sst [smem:[%s5018]] %s5017
    %s5020 = scalar_lea.vmem %s4, 56
    %v5021 = vld [vmem:[%s5020] sm:$0xff]
    %v5022 = vld [vmem:[%s5020 + $0x8] sm:$0xff]
    %v5023 = vld [vmem:[%s5020 + $0x10] sm:$0xff]
    %v5024 = vld [vmem:[%s5020 + $0x18] sm:$0xff]
    %v5025 = vld [vmem:[%s5020 + $0x20] sm:$0xff]
    %v5026 = vld [vmem:[%s5020 + $0x28] sm:$0xff]
    %v5027 = vld [vmem:[%s5020 + $0x30] sm:$0xff]
    %s5028 = sld [smem:[#allocation2 + $0x1]]
    %v5029 = vmul.f32 %v4948, %v5021
    %v5030 = vmul.f32 %v4949, %v5022
    %v5031 = vmul.f32 %v4950, %v5023
    %v5032 = vmul.f32 %v4951, %v5024
    %v5033 = vmul.f32 %v4952, %v5025
    %v5034 = vmul.f32 %v4953, %v5026
    %v5035 = vmul.f32 %v4954, %v5027
    %v5036 = vadd.f32 %v5029, %v5030
    %v5037 = vadd.f32 %v5036, %v5031
    %v5038 = vadd.f32 %v5037, %v5032
    %v5039 = vadd.f32 %v5038, %v5033
    %v5040 = vadd.f32 %v5039, %v5034
    %v5041 = vadd.f32 %v5040, %v5035
    %5042 = vadd.xlane.f32.xlu0 %v5041
    %v5043 = vpop.xlane.xlu0 %5042
    %v5044 = vrot.slane %v5043, 4
    %v5045 = vadd.f32 %v5043, %v5044
    %v5046 = vrot.slane %v5045, 2
    %v5047 = vadd.f32 %v5045, %v5046
    %v5048 = vrot.slane %v5047, 1
    %v5049 = vadd.f32 %v5047, %v5048
    %s5050 = vtos %v5049
    %s5051 = sadd.f32 %s5050, %s5028
    %s5052 = scalar_lea.smem [#allocation5], 1
    %5053 = sst [smem:[%s5052]] %s5051
    %v5054 = vmul.f32 %v4955, %v5021
    %v5055 = vmul.f32 %v4956, %v5022
    %v5056 = vmul.f32 %v4957, %v5023
    %v5057 = vmul.f32 %v4958, %v5024
    %v5058 = vmul.f32 %v4959, %v5025
    %v5059 = vmul.f32 %v4960, %v5026
    %v5060 = vmul.f32 %v4961, %v5027
    %v5061 = vadd.f32 %v5054, %v5055
    %v5062 = vadd.f32 %v5061, %v5056
    %v5063 = vadd.f32 %v5062, %v5057
    %v5064 = vadd.f32 %v5063, %v5058
    %v5065 = vadd.f32 %v5064, %v5059
    %v5066 = vadd.f32 %v5065, %v5060
    %5067 = vadd.xlane.f32.xlu0 %v5066
    %v5068 = vpop.xlane.xlu0 %5067
    %v5069 = vrot.slane %v5068, 4
    %v5070 = vadd.f32 %v5068, %v5069
    %v5071 = vrot.slane %v5070, 2
    %v5072 = vadd.f32 %v5070, %v5071
    %v5073 = vrot.slane %v5072, 1
    %v5074 = vadd.f32 %v5072, %v5073
    %s5075 = vtos %v5074
    %s5076 = sadd.f32 %s5075, %s5028
    %s5077 = scalar_lea.smem [#allocation5], 129
    %5078 = sst [smem:[%s5077]] %s5076
    %s5079 = scalar_lea.vmem %s4, 112
    %v5080 = vld [vmem:[%s5079] sm:$0xff]
    %v5081 = vld [vmem:[%s5079 + $0x8] sm:$0xff]
    %v5082 = vld [vmem:[%s5079 + $0x10] sm:$0xff]
    %v5083 = vld [vmem:[%s5079 + $0x18] sm:$0xff]
    %v5084 = vld [vmem:[%s5079 + $0x20] sm:$0xff]
    %v5085 = vld [vmem:[%s5079 + $0x28] sm:$0xff]
    %v5086 = vld [vmem:[%s5079 + $0x30] sm:$0xff]
    %s5087 = sld [smem:[#allocation2 + $0x2]]
    %v5088 = vmul.f32 %v4948, %v5080
    %v5089 = vmul.f32 %v4949, %v5081
    %v5090 = vmul.f32 %v4950, %v5082
    %v5091 = vmul.f32 %v4951, %v5083
    %v5092 = vmul.f32 %v4952, %v5084
    %v5093 = vmul.f32 %v4953, %v5085
    %v5094 = vmul.f32 %v4954, %v5086
    %v5095 = vadd.f32 %v5088, %v5089
    %v5096 = vadd.f32 %v5095, %v5090
    %v5097 = vadd.f32 %v5096, %v5091
    %v5098 = vadd.f32 %v5097, %v5092
    %v5099 = vadd.f32 %v5098, %v5093
    %v5100 = vadd.f32 %v5099, %v5094
    %5101 = vadd.xlane.f32.xlu0 %v5100
    %v5102 = vpop.xlane.xlu0 %5101
    %v5103 = vrot.slane %v5102, 4
    %v5104 = vadd.f32 %v5102, %v5103
    %v5105 = vrot.slane %v5104, 2
    %v5106 = vadd.f32 %v5104, %v5105
    %v5107 = vrot.slane %v5106, 1
    %v5108 = vadd.f32 %v5106, %v5107
    %s5109 = vtos %v5108
    %s5110 = sadd.f32 %s5109, %s5087
    %s5111 = scalar_lea.smem [#allocation6], 0
    %5112 = sst [smem:[%s5111]] %s5110
    %v5113 = vmul.f32 %v4955, %v5080
    %v5114 = vmul.f32 %v4956, %v5081
    %v5115 = vmul.f32 %v4957, %v5082
    %v5116 = vmul.f32 %v4958, %v5083
    %v5117 = vmul.f32 %v4959, %v5084
    %v5118 = vmul.f32 %v4960, %v5085
    %v5119 = vmul.f32 %v4961, %v5086
    %v5120 = vadd.f32 %v5113, %v5114
    %v5121 = vadd.f32 %v5120, %v5115
    %v5122 = vadd.f32 %v5121, %v5116
    %v5123 = vadd.f32 %v5122, %v5117
    %v5124 = vadd.f32 %v5123, %v5118
    %v5125 = vadd.f32 %v5124, %v5119
    %5126 = vadd.xlane.f32.xlu0 %v5125
    %v5127 = vpop.xlane.xlu0 %5126
    %v5128 = vrot.slane %v5127, 4
    %v5129 = vadd.f32 %v5127, %v5128
    %v5130 = vrot.slane %v5129, 2
    %v5131 = vadd.f32 %v5129, %v5130
    %v5132 = vrot.slane %v5131, 1
    %v5133 = vadd.f32 %v5131, %v5132
    %s5134 = vtos %v5133
    %s5135 = sadd.f32 %s5134, %s5087
    %s5136 = scalar_lea.smem [#allocation6], 128
    %5137 = sst [smem:[%s5136]] %s5135
    %s5138 = scalar_lea.vmem %s4, 168
    %v5139 = vld [vmem:[%s5138] sm:$0xff]
    %v5140 = vld [vmem:[%s5138 + $0x8] sm:$0xff]
    %v5141 = vld [vmem:[%s5138 + $0x10] sm:$0xff]
    %v5142 = vld [vmem:[%s5138 + $0x18] sm:$0xff]
    %v5143 = vld [vmem:[%s5138 + $0x20] sm:$0xff]
    %v5144 = vld [vmem:[%s5138 + $0x28] sm:$0xff]
    %v5145 = vld [vmem:[%s5138 + $0x30] sm:$0xff]
    %s5146 = sld [smem:[#allocation2 + $0x3]]
    %v5147 = vmul.f32 %v4948, %v5139
    %v5148 = vmul.f32 %v4949, %v5140
    %v5149 = vmul.f32 %v4950, %v5141
    %v5150 = vmul.f32 %v4951, %v5142
    %v5151 = vmul.f32 %v4952, %v5143
    %v5152 = vmul.f32 %v4953, %v5144
    %v5153 = vmul.f32 %v4954, %v5145
    %v5154 = vadd.f32 %v5147, %v5148
    %v5155 = vadd.f32 %v5154, %v5149
    %v5156 = vadd.f32 %v5155, %v5150
    %v5157 = vadd.f32 %v5156, %v5151
    %v5158 = vadd.f32 %v5157, %v5152
    %v5159 = vadd.f32 %v5158, %v5153
    %5160 = vadd.xlane.f32.xlu0 %v5159
    %v5161 = vpop.xlane.xlu0 %5160
    %v5162 = vrot.slane %v5161, 4
    %v5163 = vadd.f32 %v5161, %v5162
    %v5164 = vrot.slane %v5163, 2
    %v5165 = vadd.f32 %v5163, %v5164
    %v5166 = vrot.slane %v5165, 1
    %v5167 = vadd.f32 %v5165, %v5166
    %s5168 = vtos %v5167
    %s5169 = sadd.f32 %s5168, %s5146
    %s5170 = scalar_lea.smem [#allocation6], 1
    %5171 = sst [smem:[%s5170]] %s5169
    %v5172 = vmul.f32 %v4955, %v5139
    %v5173 = vmul.f32 %v4956, %v5140
    %v5174 = vmul.f32 %v4957, %v5141
    %v5175 = vmul.f32 %v4958, %v5142
    %v5176 = vmul.f32 %v4959, %v5143
    %v5177 = vmul.f32 %v4960, %v5144
    %v5178 = vmul.f32 %v4961, %v5145
    %v5179 = vadd.f32 %v5172, %v5173
    %v5180 = vadd.f32 %v5179, %v5174
    %v5181 = vadd.f32 %v5180, %v5175
    %v5182 = vadd.f32 %v5181, %v5176
    %v5183 = vadd.f32 %v5182, %v5177
    %v5184 = vadd.f32 %v5183, %v5178
    %5185 = vadd.xlane.f32.xlu0 %v5184
    %v5186 = vpop.xlane.xlu0 %5185
    %v5187 = vrot.slane %v5186, 4
    %v5188 = vadd.f32 %v5186, %v5187
    %v5189 = vrot.slane %v5188, 2
    %v5190 = vadd.f32 %v5188, %v5189
    %v5191 = vrot.slane %v5190, 1
    %v5192 = vadd.f32 %v5190, %v5191
    %s5193 = vtos %v5192
    %s5194 = sadd.f32 %s5193, %s5146
    %s5195 = scalar_lea.smem [#allocation6], 129
    %5196 = sst [smem:[%s5195]] %s5194
    // Predicated region
    $region30: #{encoder_forward.1} parent=1 // pred_check
      _
    $region31: #{encoder_forward.1} parent=1 // pred_check_branch
      %5198 = sbr.rel (0) target = $region33
    $region32: #{encoder_forward.1} parent=1 // pred_region
      %s5200 = ssub.s32 32, 32
      %5201 = vsyncadd [#allocation3], %s5200
      %5204 = dma.smem_to_hbm [#allocation5], 32, %s6, [#allocation3]
    $region33: #{encoder_forward.1} parent=1 // pred_fallthru
      _
    // Predicated region
    $region34: #{encoder_forward.1} parent=1 // pred_check
      _
    $region35: #{encoder_forward.1} parent=1 // pred_check_branch
      %5206 = sbr.rel (0) target = $region37
    $region36: #{encoder_forward.1} parent=1 // pred_region
      %s5208 = ssub.s32 32, 32
      %5209 = vsyncadd [#allocation7], %s5208
      %5212 = dma.smem_to_hbm [#allocation6], 32, %s7, [#allocation7]
    $region37: #{encoder_forward.1} parent=1 // pred_fallthru
      _
    // Predicated region
    $region38: #{encoder_forward.1} parent=1 // pred_check
      _
    $region39: #{encoder_forward.1} parent=1 // pred_check_branch
      %5214 = sbr.rel (0) target = $region41
    $region40: #{encoder_forward.1} parent=1 // pred_region
      %5215 = dma.done [#allocation3], 32
    $region41: #{encoder_forward.1} parent=1 // pred_fallthru
      _
    // Predicated region
    $region42: #{encoder_forward.1} parent=1 // pred_check
      _
    $region43: #{encoder_forward.1} parent=1 // pred_check_branch
      %5217 = sbr.rel (0) target = $region45
    $region44: #{encoder_forward.1} parent=1 // pred_region
      %5218 = dma.done [#allocation7], 32
    $region45: #{encoder_forward.1} parent=1 // pred_fallthru
      _
    %5219 = sfence
    %5220 = vsyncpa [#allocation3], 1
    %5221 = vsyncpa [#allocation7], 1
    %5222 = vsyncpa [#allocation4], 1

</llo_original>
